<compile_context>
chip_gen: v5e
topology: v5e:2x2
jax: 0.10.0
libtpu: 0.0.40
codegen_flags: <defaults>
</compile_context>

<pallas_src>
import functools
import math

import jax
import jax.numpy as jnp
from jax.experimental import pallas as pl
from jax.experimental.pallas import tpu as pltpu

_MXU_DTYPE = jnp.bfloat16   # operand dtype for the two projection matmuls


# ----------------------------- fused kernel ----------------------------------

def _local_attn_fused_kernel(x_ref, win_ref, bin_ref, wout_ref, bout_ref,
                             sel_ref, selt_ref, mask_ref, o_ref, *w_refs,
                             num_heads, ksize, padding, W, approx_recip):
    # x_ref:    (c, S_blk)   features, channels x (batch*spatial) lanes
    # win_ref:  (3c, c)      in-projection weight (q rows pre-scaled)
    # bin_ref:  (3c, 1)      in-projection bias   (q rows pre-scaled)
    # wout_ref: (c, c)       out-projection weight
    # bout_ref: (c, 1)       out-projection bias
    # sel_ref:  (nh, c)      0/1 block-diagonal head selector
    # selt_ref: (c, nh)      its transpose
    # mask_ref: (KK, S_blk)  1 where the (dy,dx) neighbour is inside the image
    # o_ref:    (c, S_blk)   projected output
    # w_refs:   optionally one (KK, S_blk) ref -> head-averaged softmax weights
    f32 = jnp.float32
    c = x_ref.shape[0]
    S_blk = x_ref.shape[1]
    need_w = len(w_refs) > 0

    x = x_ref[...].astype(_MXU_DTYPE)
    w_in = win_ref[...].astype(_MXU_DTYPE)
    b_in = bin_ref[...].astype(f32)
    w_out = wout_ref[...].astype(_MXU_DTYPE)
    b_out = bout_ref[...].astype(f32)
    sel = sel_ref[...].astype(f32)                     # (nh, c)
    selt = selt_ref[...].astype(f32)                   # (c, nh)
    masks = mask_ref[...].astype(f32)                  # (KK, S_blk)

    # ---- in-projection (one MXU matmul, bf16 operands, f32 accumulate) ----
    qkv = jnp.dot(w_in, x, preferred_element_type=f32) + b_in     # (3c, S_blk)
    q = qkv[0:c]                    # scaling already folded into w_in / b_in
    k = qkv[c:2 * c]
    v = qkv[2 * c:3 * c]

    offsets = [(dy - padding, dx - padding)
               for dy in range(ksize) for dx in range(ksize)]

    # ---- pass 1: logits slab (KK, nh, S_blk). k is rolled on demand (one
    # shifted copy live at a time, XLU slot); the channel->head reduction is
    # an MXU matmul against the 0/1 selector. Zero-padded keys (F.unfold
    # semantics) give logit exactly 0 via the border mask.
    logit_rows = []
    for i, (ddy, ddx) in enumerate(offsets):
        amt = (-(ddy * W + ddx)) % S_blk
        k_i = k if amt == 0 else pltpu.roll(k, amt, axis=1)
        l_i = jnp.dot(sel, k_i * q, preferred_element_type=f32)   # (nh, S_blk)
        logit_rows.append(l_i * masks[i:i + 1, :])
    logits = jnp.stack(logit_rows, axis=0)               # (KK, nh, S_blk)

    # ---- batched softmax over the KK window axis (single max/exp/sum) ----
    m = jnp.max(logits, axis=0, keepdims=True)            # (1, nh, S_blk)
    e = jnp.exp(logits - m)                                # (KK, nh, S_blk)
    denom = jnp.sum(e, axis=0, keepdims=True)              # (1, nh, S_blk)
    inv = pl.reciprocal(denom, approx=approx_recip)        # EUP slot
    probs = e * inv                                        # (KK, nh, S_blk)

    # ---- pass 2: weighted-value accumulation. v rolled on demand; the
    # head->channel probability broadcast runs on the MXU via sel^T. Padded
    # values are zero, so their contribution is masked out of the sum.
    acc = jnp.zeros((c, S_blk), f32)
    for i, (ddy, ddx) in enumerate(offsets):
        amt = (-(ddy * W + ddx)) % S_blk
        v_i = v if amt == 0 else pltpu.roll(v, amt, axis=1)
        p_i = probs[i] * masks[i:i + 1, :]                 # (nh, S_blk)
        acc = acc + jnp.dot(selt, p_i, preferred_element_type=f32) * v_i

    # ---- out-projection (MXU, bf16 operands) ----
    o = jnp.dot(w_out, acc.astype(_MXU_DTYPE),
                preferred_element_type=f32) + b_out
    o_ref[...] = o.astype(o_ref.dtype)

    if need_w:
        # Head-averaged attention weights (unmasked probabilities, matching
        # the reference module's returned weights).
        w_refs[0][...] = (jnp.sum(probs, axis=1) *
                          (1.0 / num_heads)).astype(w_refs[0].dtype)


# ----------------------------- helpers ----------------------------------------

def _make_border_masks(ksize, pad, H, W):
    """(KK, H*W) float32; 1 where the (dy,dx)-shifted neighbor is in-bounds."""
    rows = jnp.arange(H)[:, None]
    cols = jnp.arange(W)[None, :]
    masks = []
    for dy in range(ksize):
        for dx in range(ksize):
            ddy, ddx = dy - pad, dx - pad
            m = ((rows + ddy >= 0) & (rows + ddy < H) &
                 (cols + ddx >= 0) & (cols + ddx < W))
            masks.append(m.reshape(-1))
    return jnp.stack(masks, axis=0).astype(jnp.float32)


# ----------------------------- LocalAttn forward ------------------------------

def local_attn_forward(feature, params, *, kernel_size, padding, num_heads,
                       need_weights=True, vmem_limit_bytes=None):
    """Eval-mode forward of LocalAttn.  feature: (n, c, h, w) NCHW."""
    n, c, H, W = feature.shape
    head_dim = c // num_heads
    assert head_dim * num_heads == c, "embed_dim must be divisible by num_heads"
    S = H * W
    KK = kernel_size * kernel_size
    scaling = float(head_dim) ** (-0.5)

    # Fold batch into the lane axis: (n, c, H, W) -> (c, n*H*W).
    x = jnp.transpose(feature.reshape(n, c, S), (1, 0, 2)).reshape(c, n * S)

    # Fold the q scaling into the first c rows of the in-projection.
    w_in = params["in_proj_weight"].at[:c].multiply(scaling)
    b_in = params["in_proj_bias"].at[:c].multiply(scaling).reshape(3 * c, 1)
    w_out = params["out_proj_weight"]
    b_out = params["out_proj_bias"].reshape(c, 1)

    # 0/1 block-diagonal head selector and its transpose (MXU channel<->head).
    sel = (jnp.arange(c)[None, :] // head_dim ==
           jnp.arange(num_heads)[:, None]).astype(jnp.float32)
    selt = jnp.transpose(sel)

    # Border masks, tiled per batch (any roll wrap-around across a batch
    # boundary is an out-of-image neighbour, hence always masked).
    masks = jnp.tile(_make_border_masks(kernel_size, padding, H, W), (1, n))

    # Grid: one lane-dense block for small n; two "parallel" blocks (megacore
    # sharding on v7x) once there are enough batches to split.
    num_blocks = 2 if (n >= 4 and n % 2 == 0) else 1
    S_blk = (n // num_blocks) * S

    kernel = functools.partial(
        _local_attn_fused_kernel, num_heads=num_heads, ksize=kernel_size,
        padding=padding, W=W, approx_recip=not need_weights)

    in_specs = [
        pl.BlockSpec((c, S_blk), lambda b: (0, b)),
        pl.BlockSpec((3 * c, c), lambda b: (0, 0)),
        pl.BlockSpec((3 * c, 1), lambda b: (0, 0)),
        pl.BlockSpec((c, c), lambda b: (0, 0)),
        pl.BlockSpec((c, 1), lambda b: (0, 0)),
        pl.BlockSpec((num_heads, c), lambda b: (0, 0)),
        pl.BlockSpec((c, num_heads), lambda b: (0, 0)),
        pl.BlockSpec((KK, S_blk), lambda b: (0, b)),
    ]
    if need_weights:
        out_shape = (jax.ShapeDtypeStruct((c, n * S), feature.dtype),
                     jax.ShapeDtypeStruct((KK, n * S), jnp.float32))
        out_specs = (pl.BlockSpec((c, S_blk), lambda b: (0, b)),
                     pl.BlockSpec((KK, S_blk), lambda b: (0, b)))
    else:
        out_shape = jax.ShapeDtypeStruct((c, n * S), feature.dtype)
        out_specs = pl.BlockSpec((c, S_blk), lambda b: (0, b))

    cp = dict(dimension_semantics=("parallel",))
    if vmem_limit_bytes is not None:
        cp["vmem_limit_bytes"] = vmem_limit_bytes

    result = pl.pallas_call(
        kernel, out_shape=out_shape, grid=(num_blocks,),
        in_specs=in_specs, out_specs=out_specs,
        compiler_params=pltpu.CompilerParams(**cp),
    )(x, w_in, b_in, w_out, b_out, sel, selt, masks)

    def unflatten(a2d, rows):
        return jnp.transpose(a2d.reshape(rows, n, S), (1, 0, 2)
                             ).reshape(n, rows, H, W)

    if need_weights:
        o2d, w2d = result
        return unflatten(o2d, c), unflatten(w2d, KK)
    return unflatten(result, c), None


# ----------------------------- parameters -------------------------------------

def init_params(key, embed_dim):
    k1, k2 = jax.random.split(key)
    bound_in = math.sqrt(6.0 / (3 * embed_dim + embed_dim))   # xavier_uniform_
    in_proj_weight = jax.random.uniform(k1, (3 * embed_dim, embed_dim),
                                        jnp.float32, -bound_in, bound_in)
    in_proj_bias = jnp.zeros((3 * embed_dim,), jnp.float32)
    bound_out = 1.0 / math.sqrt(embed_dim)                    # nn.Linear default
    out_proj_weight = jax.random.uniform(k2, (embed_dim, embed_dim),
                                         jnp.float32, -bound_out, bound_out)
    out_proj_bias = jnp.zeros((embed_dim,), jnp.float32)
    return dict(in_proj_weight=in_proj_weight, in_proj_bias=in_proj_bias,
                out_proj_weight=out_proj_weight, out_proj_bias=out_proj_bias)


# ----------------------------- pure-JAX reference -----------------------------

def reference_forward(feature, params, *, kernel_size, padding, num_heads):
    n, c, H, W = feature.shape
    hd = c // num_heads
    scaling = float(hd) ** (-0.5)
    x = jnp.transpose(feature, (0, 2, 3, 1))
    y = x @ params["in_proj_weight"].T + params["in_proj_bias"]
    y = jnp.transpose(y, (0, 3, 1, 2))
    q, k, v = y[:, :c], y[:, c:2 * c], y[:, 2 * c:]
    q = q * scaling
    pad, K = padding, kernel_size
    kp = jnp.pad(k, ((0, 0), (0, 0), (pad, pad), (pad, pad)))
    vp = jnp.pad(v, ((0, 0), (0, 0), (pad, pad), (pad, pad)))
    B = n * num_heads
    q = q.reshape(B, hd, H, W)
    kp = kp.reshape(B, hd, H + 2 * pad, W + 2 * pad)
    vp = vp.reshape(B, hd, H + 2 * pad, W + 2 * pad)
    logits = jnp.stack([jnp.sum(kp[:, :, dy:dy + H, dx:dx + W] * q, axis=1)
                        for dy in range(K) for dx in range(K)], axis=1)
    probs = jax.nn.softmax(logits, axis=1)
    out = sum(vp[:, :, dy:dy + H, dx:dx + W] * probs[:, dy * K + dx][:, None]
              for dy in range(K) for dx in range(K))
    out = out.reshape(n, c, H, W)
    o = jnp.transpose(out, (0, 2, 3, 1)) @ params["out_proj_weight"].T \
        + params["out_proj_bias"]
    o = jnp.transpose(o, (0, 3, 1, 2))
    wavg = probs.reshape(n, num_heads, K * K, H, W).sum(axis=1) / num_heads
    return o, wavg


# ----------------------------- main --------------------------------------------

if __name__ == "__main__":
    kernel_size, padding = 3, 1
    embed_dim, num_heads = 8, 2
    n, H, W = 2, 16, 16

    key = jax.random.PRNGKey(0)
    pkey, xkey = jax.random.split(key)
    params = init_params(pkey, embed_dim)
    feature = jax.random.normal(xkey, (n, embed_dim, H, W), jnp.float32)

    out, wavg = local_attn_forward(feature, params, kernel_size=kernel_size,
                                   padding=padding, num_heads=num_heads,
                                   need_weights=True)
    out = jax.block_until_ready(out)
    wavg = jax.block_until_ready(wavg)

    out_nw, _ = local_attn_forward(feature, params, kernel_size=kernel_size,
                                   padding=padding, num_heads=num_heads,
                                   need_weights=False)
    out_nw = jax.block_until_ready(out_nw)

    ref_out, ref_w = reference_forward(feature, params,
                                       kernel_size=kernel_size,
                                       padding=padding, num_heads=num_heads)
    assert out.shape == (n, embed_dim, H, W)
    assert wavg.shape == (n, kernel_size * kernel_size, H, W)
    # Tolerance accounts for bf16 MXU operands (in/out projections) and the
    # approx reciprocal on the no-weights path; the reference is pure f32.
    assert jnp.allclose(out, ref_out, atol=3e-2, rtol=3e-2)
    assert jnp.allclose(out_nw, ref_out, atol=3e-2, rtol=3e-2)
    assert jnp.allclose(wavg, ref_w, atol=3e-2, rtol=3e-2)
    print("KERNEL_OK")
</pallas_src>

<mosaic_0001>
module attributes {stable_mosaic.version = 11 : i64} {
  func.func @_local_attn_fused_kernel(%arg0: i32, %arg1: memref<8x512xf32, #tpu.memory_space<vmem>>, %arg2: memref<24x8xf32, #tpu.memory_space<vmem>>, %arg3: memref<24x1xf32, #tpu.memory_space<vmem>>, %arg4: memref<8x8xf32, #tpu.memory_space<vmem>>, %arg5: memref<8x1xf32, #tpu.memory_space<vmem>>, %arg6: memref<2x8xf32, #tpu.memory_space<vmem>>, %arg7: memref<8x2xf32, #tpu.memory_space<vmem>>, %arg8: memref<9x512xf32, #tpu.memory_space<vmem>>, %arg9: memref<8x512xf32, #tpu.memory_space<vmem>>, %arg10: memref<9x512xf32, #tpu.memory_space<vmem>>) attributes {dimension_semantics = [#tpu.dimension_semantics<parallel>], iteration_bounds = array<i64: 1>, scalar_prefetch = 0 : i64, scratch_operands = 0 : i64, tpu.core_type = #tpu.core_type<tc>, window_params = [{transform_indices = @transform_0, window_bounds = array<i64: 8, 512>}, {pipeline_mode = #tpu.pipeline_mode<synchronous>, transform_indices = @transform_1, window_bounds = array<i64: 24, 8>}, {pipeline_mode = #tpu.pipeline_mode<synchronous>, transform_indices = @transform_2, window_bounds = array<i64: 24, 1>}, {pipeline_mode = #tpu.pipeline_mode<synchronous>, transform_indices = @transform_3, window_bounds = array<i64: 8, 8>}, {pipeline_mode = #tpu.pipeline_mode<synchronous>, transform_indices = @transform_4, window_bounds = array<i64: 8, 1>}, {pipeline_mode = #tpu.pipeline_mode<synchronous>, transform_indices = @transform_5, window_bounds = array<i64: 2, 8>}, {pipeline_mode = #tpu.pipeline_mode<synchronous>, transform_indices = @transform_6, window_bounds = array<i64: 8, 2>}, {transform_indices = @transform_7, window_bounds = array<i64: 9, 512>}, {transform_indices = @transform_8, window_bounds = array<i64: 8, 512>}, {transform_indices = @transform_9, window_bounds = array<i64: 9, 512>}]} {
    %c0 = arith.constant 0 : index
    %c0_0 = arith.constant 0 : index
    %0 = vector.load %arg1[%c0, %c0_0] : memref<8x512xf32, #tpu.memory_space<vmem>>, vector<8x512xf32>
    %1 = arith.truncf %0 : vector<8x512xf32> to vector<8x512xbf16>
    %c0_1 = arith.constant 0 : index
    %c0_2 = arith.constant 0 : index
    %2 = vector.load %arg2[%c0_1, %c0_2] : memref<24x8xf32, #tpu.memory_space<vmem>>, vector<24x8xf32>
    %3 = arith.truncf %2 : vector<24x8xf32> to vector<24x8xbf16>
    %c0_3 = arith.constant 0 : index
    %c0_4 = arith.constant 0 : index
    %4 = vector.load %arg3[%c0_3, %c0_4] : memref<24x1xf32, #tpu.memory_space<vmem>>, vector<24x1xf32>
    %c0_5 = arith.constant 0 : index
    %c0_6 = arith.constant 0 : index
    %5 = vector.load %arg4[%c0_5, %c0_6] : memref<8x8xf32, #tpu.memory_space<vmem>>, vector<8x8xf32>
    %6 = arith.truncf %5 : vector<8x8xf32> to vector<8x8xbf16>
    %c0_7 = arith.constant 0 : index
    %c0_8 = arith.constant 0 : index
    %7 = vector.load %arg5[%c0_7, %c0_8] : memref<8x1xf32, #tpu.memory_space<vmem>>, vector<8x1xf32>
    %c0_9 = arith.constant 0 : index
    %c0_10 = arith.constant 0 : index
    %8 = vector.load %arg6[%c0_9, %c0_10] : memref<2x8xf32, #tpu.memory_space<vmem>>, vector<2x8xf32>
    %c0_11 = arith.constant 0 : index
    %c0_12 = arith.constant 0 : index
    %9 = vector.load %arg7[%c0_11, %c0_12] : memref<8x2xf32, #tpu.memory_space<vmem>>, vector<8x2xf32>
    %c0_13 = arith.constant 0 : index
    %c0_14 = arith.constant 0 : index
    %10 = vector.load %arg8[%c0_13, %c0_14] : memref<9x512xf32, #tpu.memory_space<vmem>>, vector<9x512xf32>
    %cst = arith.constant dense<0.000000e+00> : vector<24x512xf32>
    %11 = tpu.matmul %3, %1, %cst {dimension_numbers = #tpu.dot_dimension_numbers<[1], [0], [0], [1], [0, 0, 1, 1], [], []>} : vector<24x8xbf16>, vector<8x512xbf16>, vector<24x512xf32> -> vector<24x512xf32>
    %12 = vector.broadcast %4 : vector<24x1xf32> to vector<24x512xf32>
    %13 = arith.addf %11, %12 : vector<24x512xf32>
    %14 = vector.extract_strided_slice %13 {offsets = [0, 0], sizes = [8, 512], strides = [1, 1]} : vector<24x512xf32> to vector<8x512xf32>
    %15 = vector.extract_strided_slice %13 {offsets = [8, 0], sizes = [8, 512], strides = [1, 1]} : vector<24x512xf32> to vector<8x512xf32>
    %16 = vector.extract_strided_slice %13 {offsets = [16, 0], sizes = [8, 512], strides = [1, 1]} : vector<24x512xf32> to vector<8x512xf32>
    %c17_i32 = arith.constant 17 : i32
    %17 = tpu.dynamic_rotate %15 by %c17_i32 dim 1 : vector<8x512xf32>, i32 -> vector<8x512xf32>
    %18 = arith.mulf %17, %14 : vector<8x512xf32>
    %cst_15 = arith.constant dense<0.000000e+00> : vector<2x512xf32>
    %19 = tpu.matmul %8, %18, %cst_15 {dimension_numbers = #tpu.dot_dimension_numbers<[1], [0], [0], [1], [0, 0, 1, 1], [], []>} : vector<2x8xf32>, vector<8x512xf32>, vector<2x512xf32> -> vector<2x512xf32>
    %20 = vector.extract_strided_slice %10 {offsets = [0, 0], sizes = [1, 512], strides = [1, 1]} : vector<9x512xf32> to vector<1x512xf32>
    %21 = vector.broadcast %20 : vector<1x512xf32> to vector<2x512xf32>
    %22 = arith.mulf %19, %21 : vector<2x512xf32>
    %c16_i32 = arith.constant 16 : i32
    %23 = tpu.dynamic_rotate %15 by %c16_i32 dim 1 : vector<8x512xf32>, i32 -> vector<8x512xf32>
    %24 = arith.mulf %23, %14 : vector<8x512xf32>
    %cst_16 = arith.constant dense<0.000000e+00> : vector<2x512xf32>
    %25 = tpu.matmul %8, %24, %cst_16 {dimension_numbers = #tpu.dot_dimension_numbers<[1], [0], [0], [1], [0, 0, 1, 1], [], []>} : vector<2x8xf32>, vector<8x512xf32>, vector<2x512xf32> -> vector<2x512xf32>
    %26 = vector.extract_strided_slice %10 {offsets = [1, 0], sizes = [1, 512], strides = [1, 1]} : vector<9x512xf32> to vector<1x512xf32>
    %27 = vector.broadcast %26 : vector<1x512xf32> to vector<2x512xf32>
    %28 = arith.mulf %25, %27 : vector<2x512xf32>
    %c15_i32 = arith.constant 15 : i32
    %29 = tpu.dynamic_rotate %15 by %c15_i32 dim 1 : vector<8x512xf32>, i32 -> vector<8x512xf32>
    %30 = arith.mulf %29, %14 : vector<8x512xf32>
    %cst_17 = arith.constant dense<0.000000e+00> : vector<2x512xf32>
    %31 = tpu.matmul %8, %30, %cst_17 {dimension_numbers = #tpu.dot_dimension_numbers<[1], [0], [0], [1], [0, 0, 1, 1], [], []>} : vector<2x8xf32>, vector<8x512xf32>, vector<2x512xf32> -> vector<2x512xf32>
    %32 = vector.extract_strided_slice %10 {offsets = [2, 0], sizes = [1, 512], strides = [1, 1]} : vector<9x512xf32> to vector<1x512xf32>
    %33 = vector.broadcast %32 : vector<1x512xf32> to vector<2x512xf32>
    %34 = arith.mulf %31, %33 : vector<2x512xf32>
    %c1_i32 = arith.constant 1 : i32
    %35 = tpu.dynamic_rotate %15 by %c1_i32 dim 1 : vector<8x512xf32>, i32 -> vector<8x512xf32>
    %36 = arith.mulf %35, %14 : vector<8x512xf32>
    %cst_18 = arith.constant dense<0.000000e+00> : vector<2x512xf32>
    %37 = tpu.matmul %8, %36, %cst_18 {dimension_numbers = #tpu.dot_dimension_numbers<[1], [0], [0], [1], [0, 0, 1, 1], [], []>} : vector<2x8xf32>, vector<8x512xf32>, vector<2x512xf32> -> vector<2x512xf32>
    %38 = vector.extract_strided_slice %10 {offsets = [3, 0], sizes = [1, 512], strides = [1, 1]} : vector<9x512xf32> to vector<1x512xf32>
    %39 = vector.broadcast %38 : vector<1x512xf32> to vector<2x512xf32>
    %40 = arith.mulf %37, %39 : vector<2x512xf32>
    %41 = arith.mulf %15, %14 : vector<8x512xf32>
    %cst_19 = arith.constant dense<0.000000e+00> : vector<2x512xf32>
    %42 = tpu.matmul %8, %41, %cst_19 {dimension_numbers = #tpu.dot_dimension_numbers<[1], [0], [0], [1], [0, 0, 1, 1], [], []>} : vector<2x8xf32>, vector<8x512xf32>, vector<2x512xf32> -> vector<2x512xf32>
    %43 = vector.extract_strided_slice %10 {offsets = [4, 0], sizes = [1, 512], strides = [1, 1]} : vector<9x512xf32> to vector<1x512xf32>
    %44 = vector.broadcast %43 : vector<1x512xf32> to vector<2x512xf32>
    %45 = arith.mulf %42, %44 : vector<2x512xf32>
    %c511_i32 = arith.constant 511 : i32
    %46 = tpu.dynamic_rotate %15 by %c511_i32 dim 1 : vector<8x512xf32>, i32 -> vector<8x512xf32>
    %47 = arith.mulf %46, %14 : vector<8x512xf32>
    %cst_20 = arith.constant dense<0.000000e+00> : vector<2x512xf32>
    %48 = tpu.matmul %8, %47, %cst_20 {dimension_numbers = #tpu.dot_dimension_numbers<[1], [0], [0], [1], [0, 0, 1, 1], [], []>} : vector<2x8xf32>, vector<8x512xf32>, vector<2x512xf32> -> vector<2x512xf32>
    %49 = vector.extract_strided_slice %10 {offsets = [5, 0], sizes = [1, 512], strides = [1, 1]} : vector<9x512xf32> to vector<1x512xf32>
    %50 = vector.broadcast %49 : vector<1x512xf32> to vector<2x512xf32>
    %51 = arith.mulf %48, %50 : vector<2x512xf32>
    %c497_i32 = arith.constant 497 : i32
    %52 = tpu.dynamic_rotate %15 by %c497_i32 dim 1 : vector<8x512xf32>, i32 -> vector<8x512xf32>
    %53 = arith.mulf %52, %14 : vector<8x512xf32>
    %cst_21 = arith.constant dense<0.000000e+00> : vector<2x512xf32>
    %54 = tpu.matmul %8, %53, %cst_21 {dimension_numbers = #tpu.dot_dimension_numbers<[1], [0], [0], [1], [0, 0, 1, 1], [], []>} : vector<2x8xf32>, vector<8x512xf32>, vector<2x512xf32> -> vector<2x512xf32>
    %55 = vector.extract_strided_slice %10 {offsets = [6, 0], sizes = [1, 512], strides = [1, 1]} : vector<9x512xf32> to vector<1x512xf32>
    %56 = vector.broadcast %55 : vector<1x512xf32> to vector<2x512xf32>
    %57 = arith.mulf %54, %56 : vector<2x512xf32>
    %c496_i32 = arith.constant 496 : i32
    %58 = tpu.dynamic_rotate %15 by %c496_i32 dim 1 : vector<8x512xf32>, i32 -> vector<8x512xf32>
    %59 = arith.mulf %58, %14 : vector<8x512xf32>
    %cst_22 = arith.constant dense<0.000000e+00> : vector<2x512xf32>
    %60 = tpu.matmul %8, %59, %cst_22 {dimension_numbers = #tpu.dot_dimension_numbers<[1], [0], [0], [1], [0, 0, 1, 1], [], []>} : vector<2x8xf32>, vector<8x512xf32>, vector<2x512xf32> -> vector<2x512xf32>
    %61 = vector.extract_strided_slice %10 {offsets = [7, 0], sizes = [1, 512], strides = [1, 1]} : vector<9x512xf32> to vector<1x512xf32>
    %62 = vector.broadcast %61 : vector<1x512xf32> to vector<2x512xf32>
    %63 = arith.mulf %60, %62 : vector<2x512xf32>
    %c495_i32 = arith.constant 495 : i32
    %64 = tpu.dynamic_rotate %15 by %c495_i32 dim 1 : vector<8x512xf32>, i32 -> vector<8x512xf32>
    %65 = arith.mulf %64, %14 : vector<8x512xf32>
    %cst_23 = arith.constant dense<0.000000e+00> : vector<2x512xf32>
    %66 = tpu.matmul %8, %65, %cst_23 {dimension_numbers = #tpu.dot_dimension_numbers<[1], [0], [0], [1], [0, 0, 1, 1], [], []>} : vector<2x8xf32>, vector<8x512xf32>, vector<2x512xf32> -> vector<2x512xf32>
    %67 = vector.extract_strided_slice %10 {offsets = [8, 0], sizes = [1, 512], strides = [1, 1]} : vector<9x512xf32> to vector<1x512xf32>
    %68 = vector.broadcast %67 : vector<1x512xf32> to vector<2x512xf32>
    %69 = arith.mulf %66, %68 : vector<2x512xf32>
    %70 = vector.shape_cast %22 : vector<2x512xf32> to vector<1x2x512xf32>
    %71 = vector.shape_cast %28 : vector<2x512xf32> to vector<1x2x512xf32>
    %72 = vector.shape_cast %34 : vector<2x512xf32> to vector<1x2x512xf32>
    %73 = vector.shape_cast %40 : vector<2x512xf32> to vector<1x2x512xf32>
    %74 = vector.shape_cast %45 : vector<2x512xf32> to vector<1x2x512xf32>
    %75 = vector.shape_cast %51 : vector<2x512xf32> to vector<1x2x512xf32>
    %76 = vector.shape_cast %57 : vector<2x512xf32> to vector<1x2x512xf32>
    %77 = vector.shape_cast %63 : vector<2x512xf32> to vector<1x2x512xf32>
    %78 = vector.shape_cast %69 : vector<2x512xf32> to vector<1x2x512xf32>
    %79 = tpu.concatenate %70, %71, %72, %73, %74, %75, %76, %77, %78 in 0 : vector<1x2x512xf32>, vector<1x2x512xf32>, vector<1x2x512xf32>, vector<1x2x512xf32>, vector<1x2x512xf32>, vector<1x2x512xf32>, vector<1x2x512xf32>, vector<1x2x512xf32>, vector<1x2x512xf32> -> vector<9x2x512xf32>
    %cst_24 = arith.constant dense<0xFF800000> : vector<2x512xf32>
    %80 = vector.multi_reduction <maximumf>, %79, %cst_24 [0] : vector<9x2x512xf32> to vector<2x512xf32>
    %81 = vector.shape_cast %80 : vector<2x512xf32> to vector<1x2x512xf32>
    %82 = vector.broadcast %81 : vector<1x2x512xf32> to vector<9x2x512xf32>
    %83 = arith.subf %79, %82 : vector<9x2x512xf32>
    %84 = math.exp %83 : vector<9x2x512xf32>
    %cst_25 = arith.constant dense<0.000000e+00> : vector<2x512xf32>
    %85 = vector.multi_reduction <add>, %84, %cst_25 [0] : vector<9x2x512xf32> to vector<2x512xf32>
    %86 = vector.shape_cast %85 : vector<2x512xf32> to vector<1x2x512xf32>
    %87 = tpu.reciprocal %86 : vector<1x2x512xf32> -> vector<1x2x512xf32>
    %88 = vector.broadcast %87 : vector<1x2x512xf32> to vector<9x2x512xf32>
    %89 = arith.mulf %84, %88 : vector<9x2x512xf32>
    %cst_26 = arith.constant 0.000000e+00 : f32
    %90 = vector.broadcast %cst_26 : f32 to vector<8x512xf32>
    %c17_i32_27 = arith.constant 17 : i32
    %91 = tpu.dynamic_rotate %16 by %c17_i32_27 dim 1 : vector<8x512xf32>, i32 -> vector<8x512xf32>
    %92 = vector.extract_strided_slice %89 {offsets = [0, 0, 0], sizes = [1, 2, 512], strides = [1, 1, 1]} : vector<9x2x512xf32> to vector<1x2x512xf32>
    %93 = vector.shape_cast %92 : vector<1x2x512xf32> to vector<2x512xf32>
    %94 = vector.extract_strided_slice %10 {offsets = [0, 0], sizes = [1, 512], strides = [1, 1]} : vector<9x512xf32> to vector<1x512xf32>
    %95 = vector.broadcast %94 : vector<1x512xf32> to vector<2x512xf32>
    %96 = arith.mulf %93, %95 : vector<2x512xf32>
    %cst_28 = arith.constant dense<0.000000e+00> : vector<8x512xf32>
    %97 = tpu.matmul %9, %96, %cst_28 {dimension_numbers = #tpu.dot_dimension_numbers<[1], [0], [0], [1], [0, 0, 1, 1], [], []>} : vector<8x2xf32>, vector<2x512xf32>, vector<8x512xf32> -> vector<8x512xf32>
    %98 = arith.mulf %97, %91 : vector<8x512xf32>
    %99 = arith.addf %90, %98 : vector<8x512xf32>
    %c16_i32_29 = arith.constant 16 : i32
    %100 = tpu.dynamic_rotate %16 by %c16_i32_29 dim 1 : vector<8x512xf32>, i32 -> vector<8x512xf32>
    %101 = vector.extract_strided_slice %89 {offsets = [1, 0, 0], sizes = [1, 2, 512], strides = [1, 1, 1]} : vector<9x2x512xf32> to vector<1x2x512xf32>
    %102 = vector.shape_cast %101 : vector<1x2x512xf32> to vector<2x512xf32>
    %103 = vector.extract_strided_slice %10 {offsets = [1, 0], sizes = [1, 512], strides = [1, 1]} : vector<9x512xf32> to vector<1x512xf32>
    %104 = vector.broadcast %103 : vector<1x512xf32> to vector<2x512xf32>
    %105 = arith.mulf %102, %104 : vector<2x512xf32>
    %cst_30 = arith.constant dense<0.000000e+00> : vector<8x512xf32>
    %106 = tpu.matmul %9, %105, %cst_30 {dimension_numbers = #tpu.dot_dimension_numbers<[1], [0], [0], [1], [0, 0, 1, 1], [], []>} : vector<8x2xf32>, vector<2x512xf32>, vector<8x512xf32> -> vector<8x512xf32>
    %107 = arith.mulf %106, %100 : vector<8x512xf32>
    %108 = arith.addf %99, %107 : vector<8x512xf32>
    %c15_i32_31 = arith.constant 15 : i32
    %109 = tpu.dynamic_rotate %16 by %c15_i32_31 dim 1 : vector<8x512xf32>, i32 -> vector<8x512xf32>
    %110 = vector.extract_strided_slice %89 {offsets = [2, 0, 0], sizes = [1, 2, 512], strides = [1, 1, 1]} : vector<9x2x512xf32> to vector<1x2x512xf32>
    %111 = vector.shape_cast %110 : vector<1x2x512xf32> to vector<2x512xf32>
    %112 = vector.extract_strided_slice %10 {offsets = [2, 0], sizes = [1, 512], strides = [1, 1]} : vector<9x512xf32> to vector<1x512xf32>
    %113 = vector.broadcast %112 : vector<1x512xf32> to vector<2x512xf32>
    %114 = arith.mulf %111, %113 : vector<2x512xf32>
    %cst_32 = arith.constant dense<0.000000e+00> : vector<8x512xf32>
    %115 = tpu.matmul %9, %114, %cst_32 {dimension_numbers = #tpu.dot_dimension_numbers<[1], [0], [0], [1], [0, 0, 1, 1], [], []>} : vector<8x2xf32>, vector<2x512xf32>, vector<8x512xf32> -> vector<8x512xf32>
    %116 = arith.mulf %115, %109 : vector<8x512xf32>
    %117 = arith.addf %108, %116 : vector<8x512xf32>
    %c1_i32_33 = arith.constant 1 : i32
    %118 = tpu.dynamic_rotate %16 by %c1_i32_33 dim 1 : vector<8x512xf32>, i32 -> vector<8x512xf32>
    %119 = vector.extract_strided_slice %89 {offsets = [3, 0, 0], sizes = [1, 2, 512], strides = [1, 1, 1]} : vector<9x2x512xf32> to vector<1x2x512xf32>
    %120 = vector.shape_cast %119 : vector<1x2x512xf32> to vector<2x512xf32>
    %121 = vector.extract_strided_slice %10 {offsets = [3, 0], sizes = [1, 512], strides = [1, 1]} : vector<9x512xf32> to vector<1x512xf32>
    %122 = vector.broadcast %121 : vector<1x512xf32> to vector<2x512xf32>
    %123 = arith.mulf %120, %122 : vector<2x512xf32>
    %cst_34 = arith.constant dense<0.000000e+00> : vector<8x512xf32>
    %124 = tpu.matmul %9, %123, %cst_34 {dimension_numbers = #tpu.dot_dimension_numbers<[1], [0], [0], [1], [0, 0, 1, 1], [], []>} : vector<8x2xf32>, vector<2x512xf32>, vector<8x512xf32> -> vector<8x512xf32>
    %125 = arith.mulf %124, %118 : vector<8x512xf32>
    %126 = arith.addf %117, %125 : vector<8x512xf32>
    %127 = vector.extract_strided_slice %89 {offsets = [4, 0, 0], sizes = [1, 2, 512], strides = [1, 1, 1]} : vector<9x2x512xf32> to vector<1x2x512xf32>
    %128 = vector.shape_cast %127 : vector<1x2x512xf32> to vector<2x512xf32>
    %129 = vector.extract_strided_slice %10 {offsets = [4, 0], sizes = [1, 512], strides = [1, 1]} : vector<9x512xf32> to vector<1x512xf32>
    %130 = vector.broadcast %129 : vector<1x512xf32> to vector<2x512xf32>
    %131 = arith.mulf %128, %130 : vector<2x512xf32>
    %cst_35 = arith.constant dense<0.000000e+00> : vector<8x512xf32>
    %132 = tpu.matmul %9, %131, %cst_35 {dimension_numbers = #tpu.dot_dimension_numbers<[1], [0], [0], [1], [0, 0, 1, 1], [], []>} : vector<8x2xf32>, vector<2x512xf32>, vector<8x512xf32> -> vector<8x512xf32>
    %133 = arith.mulf %132, %16 : vector<8x512xf32>
    %134 = arith.addf %126, %133 : vector<8x512xf32>
    %c511_i32_36 = arith.constant 511 : i32
    %135 = tpu.dynamic_rotate %16 by %c511_i32_36 dim 1 : vector<8x512xf32>, i32 -> vector<8x512xf32>
    %136 = vector.extract_strided_slice %89 {offsets = [5, 0, 0], sizes = [1, 2, 512], strides = [1, 1, 1]} : vector<9x2x512xf32> to vector<1x2x512xf32>
    %137 = vector.shape_cast %136 : vector<1x2x512xf32> to vector<2x512xf32>
    %138 = vector.extract_strided_slice %10 {offsets = [5, 0], sizes = [1, 512], strides = [1, 1]} : vector<9x512xf32> to vector<1x512xf32>
    %139 = vector.broadcast %138 : vector<1x512xf32> to vector<2x512xf32>
    %140 = arith.mulf %137, %139 : vector<2x512xf32>
    %cst_37 = arith.constant dense<0.000000e+00> : vector<8x512xf32>
    %141 = tpu.matmul %9, %140, %cst_37 {dimension_numbers = #tpu.dot_dimension_numbers<[1], [0], [0], [1], [0, 0, 1, 1], [], []>} : vector<8x2xf32>, vector<2x512xf32>, vector<8x512xf32> -> vector<8x512xf32>
    %142 = arith.mulf %141, %135 : vector<8x512xf32>
    %143 = arith.addf %134, %142 : vector<8x512xf32>
    %c497_i32_38 = arith.constant 497 : i32
    %144 = tpu.dynamic_rotate %16 by %c497_i32_38 dim 1 : vector<8x512xf32>, i32 -> vector<8x512xf32>
    %145 = vector.extract_strided_slice %89 {offsets = [6, 0, 0], sizes = [1, 2, 512], strides = [1, 1, 1]} : vector<9x2x512xf32> to vector<1x2x512xf32>
    %146 = vector.shape_cast %145 : vector<1x2x512xf32> to vector<2x512xf32>
    %147 = vector.extract_strided_slice %10 {offsets = [6, 0], sizes = [1, 512], strides = [1, 1]} : vector<9x512xf32> to vector<1x512xf32>
    %148 = vector.broadcast %147 : vector<1x512xf32> to vector<2x512xf32>
    %149 = arith.mulf %146, %148 : vector<2x512xf32>
    %cst_39 = arith.constant dense<0.000000e+00> : vector<8x512xf32>
    %150 = tpu.matmul %9, %149, %cst_39 {dimension_numbers = #tpu.dot_dimension_numbers<[1], [0], [0], [1], [0, 0, 1, 1], [], []>} : vector<8x2xf32>, vector<2x512xf32>, vector<8x512xf32> -> vector<8x512xf32>
    %151 = arith.mulf %150, %144 : vector<8x512xf32>
    %152 = arith.addf %143, %151 : vector<8x512xf32>
    %c496_i32_40 = arith.constant 496 : i32
    %153 = tpu.dynamic_rotate %16 by %c496_i32_40 dim 1 : vector<8x512xf32>, i32 -> vector<8x512xf32>
    %154 = vector.extract_strided_slice %89 {offsets = [7, 0, 0], sizes = [1, 2, 512], strides = [1, 1, 1]} : vector<9x2x512xf32> to vector<1x2x512xf32>
    %155 = vector.shape_cast %154 : vector<1x2x512xf32> to vector<2x512xf32>
    %156 = vector.extract_strided_slice %10 {offsets = [7, 0], sizes = [1, 512], strides = [1, 1]} : vector<9x512xf32> to vector<1x512xf32>
    %157 = vector.broadcast %156 : vector<1x512xf32> to vector<2x512xf32>
    %158 = arith.mulf %155, %157 : vector<2x512xf32>
    %cst_41 = arith.constant dense<0.000000e+00> : vector<8x512xf32>
    %159 = tpu.matmul %9, %158, %cst_41 {dimension_numbers = #tpu.dot_dimension_numbers<[1], [0], [0], [1], [0, 0, 1, 1], [], []>} : vector<8x2xf32>, vector<2x512xf32>, vector<8x512xf32> -> vector<8x512xf32>
    %160 = arith.mulf %159, %153 : vector<8x512xf32>
    %161 = arith.addf %152, %160 : vector<8x512xf32>
    %c495_i32_42 = arith.constant 495 : i32
    %162 = tpu.dynamic_rotate %16 by %c495_i32_42 dim 1 : vector<8x512xf32>, i32 -> vector<8x512xf32>
    %163 = vector.extract_strided_slice %89 {offsets = [8, 0, 0], sizes = [1, 2, 512], strides = [1, 1, 1]} : vector<9x2x512xf32> to vector<1x2x512xf32>
    %164 = vector.shape_cast %163 : vector<1x2x512xf32> to vector<2x512xf32>
    %165 = vector.extract_strided_slice %10 {offsets = [8, 0], sizes = [1, 512], strides = [1, 1]} : vector<9x512xf32> to vector<1x512xf32>
    %166 = vector.broadcast %165 : vector<1x512xf32> to vector<2x512xf32>
    %167 = arith.mulf %164, %166 : vector<2x512xf32>
    %cst_43 = arith.constant dense<0.000000e+00> : vector<8x512xf32>
    %168 = tpu.matmul %9, %167, %cst_43 {dimension_numbers = #tpu.dot_dimension_numbers<[1], [0], [0], [1], [0, 0, 1, 1], [], []>} : vector<8x2xf32>, vector<2x512xf32>, vector<8x512xf32> -> vector<8x512xf32>
    %169 = arith.mulf %168, %162 : vector<8x512xf32>
    %170 = arith.addf %161, %169 : vector<8x512xf32>
    %171 = arith.truncf %170 : vector<8x512xf32> to vector<8x512xbf16>
    %cst_44 = arith.constant dense<0.000000e+00> : vector<8x512xf32>
    %172 = tpu.matmul %6, %171, %cst_44 {dimension_numbers = #tpu.dot_dimension_numbers<[1], [0], [0], [1], [0, 0, 1, 1], [], []>} : vector<8x8xbf16>, vector<8x512xbf16>, vector<8x512xf32> -> vector<8x512xf32>
    %173 = vector.broadcast %7 : vector<8x1xf32> to vector<8x512xf32>
    %174 = arith.addf %172, %173 : vector<8x512xf32>
    %c0_45 = arith.constant 0 : index
    %c0_46 = arith.constant 0 : index
    %175 = vector.load %arg9[%c0_45, %c0_46] : memref<8x512xf32, #tpu.memory_space<vmem>>, vector<8x512xf32>
    tpu.vector_store %arg9[%c0_45, %c0_46], %174 {strides = array<i32>} : memref<8x512xf32, #tpu.memory_space<vmem>>, vector<8x512xf32>,
    %cst_47 = arith.constant dense<0.000000e+00> : vector<9x512xf32>
    %176 = vector.multi_reduction <add>, %89, %cst_47 [1] : vector<9x2x512xf32> to vector<9x512xf32>
    %cst_48 = arith.constant 5.000000e-01 : f32
    %177 = vector.broadcast %cst_48 : f32 to vector<9x512xf32>
    %178 = arith.mulf %176, %177 : vector<9x512xf32>
    %c0_49 = arith.constant 0 : index
    %c0_50 = arith.constant 0 : index
    %179 = vector.load %arg10[%c0_49, %c0_50] : memref<9x512xf32, #tpu.memory_space<vmem>>, vector<9x512xf32>
    tpu.vector_store %arg10[%c0_49, %c0_50], %178 {strides = array<i32>} : memref<9x512xf32, #tpu.memory_space<vmem>>, vector<9x512xf32>,
    return
  }
  func.func @transform_0(%arg0: i32) -> (i32, i32) {
    %c0_i32 = arith.constant 0 : i32
    %c0_i32_0 = arith.constant 0 : i32
    return %c0_i32, %arg0 : i32, i32
  }
  func.func @transform_1(%arg0: i32) -> (i32, i32) {
    %c0_i32 = arith.constant 0 : i32
    %c0_i32_0 = arith.constant 0 : i32
    %c0_i32_1 = arith.constant 0 : i32
    return %c0_i32, %c0_i32_0 : i32, i32
  }
  func.func @transform_2(%arg0: i32) -> (i32, i32) {
    %c0_i32 = arith.constant 0 : i32
    %c0_i32_0 = arith.constant 0 : i32
    %c0_i32_1 = arith.constant 0 : i32
    return %c0_i32, %c0_i32_0 : i32, i32
  }
  func.func @transform_3(%arg0: i32) -> (i32, i32) {
    %c0_i32 = arith.constant 0 : i32
    %c0_i32_0 = arith.constant 0 : i32
    %c0_i32_1 = arith.constant 0 : i32
    return %c0_i32, %c0_i32_0 : i32, i32
  }
  func.func @transform_4(%arg0: i32) -> (i32, i32) {
    %c0_i32 = arith.constant 0 : i32
    %c0_i32_0 = arith.constant 0 : i32
    %c0_i32_1 = arith.constant 0 : i32
    return %c0_i32, %c0_i32_0 : i32, i32
  }
  func.func @transform_5(%arg0: i32) -> (i32, i32) {
    %c0_i32 = arith.constant 0 : i32
    %c0_i32_0 = arith.constant 0 : i32
    %c0_i32_1 = arith.constant 0 : i32
    return %c0_i32, %c0_i32_0 : i32, i32
  }
  func.func @transform_6(%arg0: i32) -> (i32, i32) {
    %c0_i32 = arith.constant 0 : i32
    %c0_i32_0 = arith.constant 0 : i32
    %c0_i32_1 = arith.constant 0 : i32
    return %c0_i32, %c0_i32_0 : i32, i32
  }
  func.func @transform_7(%arg0: i32) -> (i32, i32) {
    %c0_i32 = arith.constant 0 : i32
    %c0_i32_0 = arith.constant 0 : i32
    return %c0_i32, %arg0 : i32, i32
  }
  func.func @transform_8(%arg0: i32) -> (i32, i32) {
    %c0_i32 = arith.constant 0 : i32
    %c0_i32_0 = arith.constant 0 : i32
    return %c0_i32, %arg0 : i32, i32
  }
  func.func @transform_9(%arg0: i32) -> (i32, i32) {
    %c0_i32 = arith.constant 0 : i32
    %c0_i32_0 = arith.constant 0 : i32
    return %c0_i32, %arg0 : i32, i32
  }
}

</mosaic_0001>

<llo_original>
// kernel: tpu_custom_call.1
$region0: #{tpu_custom_call.1}
  #allocation0 [shape = 'u32[]', space=smem, size = 0x4, offset = 0x4, fixed_abs, tag = 'smem constant byte address 0x4 - core index']
  #allocation1 [shape = 'u32[72,128]{1,0:T(1,128)}', space=vmem, size = 0x9000, scoped, tag = 'internal scratch']
  %s0 = inlined_call_operand.vmem [shape: f32[8,512], index: 0, kind: input, shape index: {}]
  %s1 = inlined_call_operand.vmem [shape: f32[24,8], index: 1, kind: input, shape index: {}]
  %s2 = inlined_call_operand.vmem [shape: f32[24,1], index: 2, kind: input, shape index: {}]
  %s3 = inlined_call_operand.vmem [shape: f32[8,8], index: 3, kind: input, shape index: {}]
  %s4 = inlined_call_operand.vmem [shape: f32[8,1], index: 4, kind: input, shape index: {}]
  %s5 = inlined_call_operand.vmem [shape: f32[2,8], index: 5, kind: input, shape index: {}]
  %s6 = inlined_call_operand.vmem [shape: f32[8,2], index: 6, kind: input, shape index: {}]
  %s7 = inlined_call_operand.hbm [shape: f32[9,512], index: 7, kind: input, shape index: {}]
  %s8 = inlined_call_operand.hbm [shape: f32[8,512], index: 8, kind: output, shape index: {0}]
  %s9 = inlined_call_operand.hbm [shape: f32[9,512], index: 9, kind: output, shape index: {1}]
  %10 = xla_tuple %s8, %s9
  %s11 = sld [smem:[#allocation0]]
  $region54: #{tpu_custom_call.1} parent=0
    _
  %s13 = ssub.s32 1, %s11
  %s14 = scalar_select 0, %s13, %s11
  $region1: #{tpu_custom_call.1} parent=0
    #allocation2 [shape = 'u8[32768]{0}', space=vmem, size = 0x8000, scoped, tag = 'input window, operand 7, single buffered']
    #allocation3 [shape = 's32[1]{0}', space=sflag, size = 0x4, scoped, tag = 'scoped memory for tpu_custom_call.1']
    #allocation4 [shape = 's32[1]{0}', space=sflag, size = 0x4, scoped, tag = 'scoped memory for tpu_custom_call.1']
    #allocation5 [shape = 'u8[16384]{0}', space=vmem, size = 0x4000, scoped, tag = 'output window, operand 0, single buffered']
    #allocation6 [shape = 'u8[32768]{0}', space=vmem, size = 0x8000, scoped, tag = 'output window, operand 1, single buffered']
    #allocation7 [shape = 's32[1]{0}', space=sflag, size = 0x4, scoped, tag = 'scoped memory for tpu_custom_call.1']
    %15 = vsyncpa [#allocation3], 0
    %16 = vsyncpa [#allocation4], 0
    %17 = vsyncpa [#allocation7], 0
    // Predicated region
    $region2: #{tpu_custom_call.1} parent=1 // pred_check
      _
    $region3: #{tpu_custom_call.1} parent=1 // pred_check_branch
      %19 = sbr.rel (0) target = $region5
    $region4: #{tpu_custom_call.1} parent=1 // pred_region
      _
    $region5: #{tpu_custom_call.1} parent=1 // pred_fallthru
      _
    // Predicated region
    $region6: #{tpu_custom_call.1} parent=1 // pred_check
      _
    $region7: #{tpu_custom_call.1} parent=1 // pred_check_branch
      %21 = sbr.rel (0) target = $region9
    $region8: #{tpu_custom_call.1} parent=1 // pred_region
      _
    $region9: #{tpu_custom_call.1} parent=1 // pred_fallthru
      _
    // Predicated region
    $region10: #{tpu_custom_call.1} parent=1 // pred_check
      _
    $region11: #{tpu_custom_call.1} parent=1 // pred_check_branch
      %23 = sbr.rel (0) target = $region13
    $region12: #{tpu_custom_call.1} parent=1 // pred_region
      _
    $region13: #{tpu_custom_call.1} parent=1 // pred_fallthru
      _
    // Predicated region
    $region14: #{tpu_custom_call.1} parent=1 // pred_check
      _
    $region15: #{tpu_custom_call.1} parent=1 // pred_check_branch
      %25 = sbr.rel (0) target = $region17
    $region16: #{tpu_custom_call.1} parent=1 // pred_region
      _
    $region17: #{tpu_custom_call.1} parent=1 // pred_fallthru
      _
    // Predicated region
    $region18: #{tpu_custom_call.1} parent=1 // pred_check
      _
    $region19: #{tpu_custom_call.1} parent=1 // pred_check_branch
      %27 = sbr.rel (0) target = $region21
    $region20: #{tpu_custom_call.1} parent=1 // pred_region
      _
    $region21: #{tpu_custom_call.1} parent=1 // pred_fallthru
      _
    // Predicated region
    $region22: #{tpu_custom_call.1} parent=1 // pred_check
      _
    $region23: #{tpu_custom_call.1} parent=1 // pred_check_branch
      %29 = sbr.rel (0) target = $region25
    $region24: #{tpu_custom_call.1} parent=1 // pred_region
      _
    $region25: #{tpu_custom_call.1} parent=1 // pred_fallthru
      _
    // Predicated region
    $region26: #{tpu_custom_call.1} parent=1 // pred_check
      _
    $region27: #{tpu_custom_call.1} parent=1 // pred_check_branch
      %31 = sbr.rel (0) target = $region29
    $region28: #{tpu_custom_call.1} parent=1 // pred_region
      _
    $region29: #{tpu_custom_call.1} parent=1 // pred_fallthru
      _
    // Predicated region
    $region30: #{tpu_custom_call.1} parent=1 // pred_check
      _
    $region31: #{tpu_custom_call.1} parent=1 // pred_check_branch
      %33 = sbr.rel (0) target = $region33
    $region32: #{tpu_custom_call.1} parent=1 // pred_region
      %35 = vsyncadd [#allocation3], 0
      %s36 = sshll.u32 %s7, 4
      %s37 = int_to_ptr.hbm [resolvable:$true] %s36
      %s38 = sshll.u32 [#allocation2], 4
      %s39 = int_to_ptr.vmem [resolvable:$true] %s38
      %44 = dma.hbm_to_vmem [thread:$0]  %s37, 1024, %s39, [#allocation3], 512, 512, 32
    $region33: #{tpu_custom_call.1} parent=1 // pred_fallthru
      _
    // Predicated region
    $region34: #{tpu_custom_call.1} parent=1 // pred_check
      _
    $region35: #{tpu_custom_call.1} parent=1 // pred_check_branch
      %46 = sbr.rel (0) target = $region37
    $region36: #{tpu_custom_call.1} parent=1 // pred_region
      %48 = dma.done [#allocation3], 1024
    $region37: #{tpu_custom_call.1} parent=1 // pred_fallthru
      _
    %v50 = vld [vmem:[%s0] sm:$0xff]
    %v51 = vld [vmem:[%s0 + $0x8] sm:$0xff]
    %v52 = vld [vmem:[%s0 + $0x10] sm:$0xff]
    %v53 = vld [vmem:[%s0 + $0x18] sm:$0xff]
    %v54 = vpack.c.bf16 %v50, %v50
    %v55 = vpack.c.bf16 %v51, %v51
    %v56 = vpack.c.bf16 %v52, %v52
    %v57 = vpack.c.bf16 %v53, %v53
    %v58 = vld [vmem:[%s1] sm:$0xff]
    %v59 = vld [vmem:[%s1 + $0x8] sm:$0xff]
    %v60 = vld [vmem:[%s1 + $0x10] sm:$0xff]
    %v61 = vpack.c.bf16 %v59, %v58
    %v62 = vpack.c.bf16 %v60, %v60
    %v63 = vld [vmem:[%s2] sm:$0xff]
    %v64 = vld [vmem:[%s2 + $0x8] sm:$0xff]
    %v65 = vld [vmem:[%s2 + $0x10] sm:$0xff]
    %v66 = vld [vmem:[%s3] sm:$0xff]
    %v67 = vpack.c.bf16 %v66, %v66
    %v68 = vld [vmem:[%s4] sm:$0xff]
    %v69 = vld [vmem:[%s5] sm:$0x3]
    %v70 = vld [vmem:[%s6] sm:$0xff]
    %v71 = vld [vmem:[#allocation2] sm:$0xff]
    %v72 = vld [vmem:[#allocation2 + $0x8] sm:$0xff]
    %v73 = vld [vmem:[#allocation2 + $0x10] sm:$0xff]
    %v74 = vld [vmem:[#allocation2 + $0x18] sm:$0xff]
    %v75 = vld [vmem:[#allocation2 + $0x20] sm:$0x1]
    %v76 = vld [vmem:[#allocation2 + $0x28] sm:$0x1]
    %v77 = vld [vmem:[#allocation2 + $0x30] sm:$0x1]
    %v78 = vld [vmem:[#allocation2 + $0x38] sm:$0x1]
    %80 = vset.pattern.permute.xlu0 0
    %81 = vperm.xlu0 %80, %v63
    %v82 = vpop.permute.xlu0 %81
    %85 = vset.pattern.permute.xlu0 0
    %86 = vperm.xlu0 %85, %v64
    %v87 = vpop.permute.xlu0 %86
    %90 = vset.pattern.permute.xlu0 0
    %91 = vperm.xlu0 %90, %v65
    %v92 = vpop.permute.xlu0 %91
    %vm94 = vcmask 64512
    %v96 = vsel %vm94, %v61, 0
    %v99 = vsel %vm94, %v62, 0
    %vm101 = vcmask 1043456
    %v103 = vsel %vm101, %v54, 0
    %v106 = vsel %vm101, %v55, 0
    %v109 = vsel %vm101, %v56, 0
    %v112 = vsel %vm101, %v57, 0
    %114 = vmatpush.bf16.msra.mxu0 0
    %115 = vmatpush.bf16.msra.mxu0 0
    %116 = vmatpush.bf16.msra.mxu0 0
    %117 = vmatpush.bf16.msra.mxu0 0
    %118 = vmatpush.bf16.msra.mxu0 0
    %119 = vmatpush.bf16.msra.mxu0 0
    %120 = vmatpush.bf16.msra.mxu0 0
    %121 = vmatpush.bf16.msra.mxu0 %v103
    %122 = vmatmul.bf16.gmra.mxu0 %v96
    %v123 = vpop.f32.mrf.mxu0
    %v124 = vadd.f32 %v82, %v123
    %v125 = vpop.f32.mrf.mxu0
    %v126 = vadd.f32 %v87, %v125
    %127 = vmatmul.bf16.gmra.mxu0 %v99
    %v128 = vpop.f32.mrf.mxu0
    %v129 = vadd.f32 %v92, %v128
    %v130 = vpop.f32.mrf.mxu0
    %131 = vdwg.mxu0
    %132 = vmatpush.bf16.msra.mxu0 0
    %133 = vmatpush.bf16.msra.mxu0 0
    %134 = vmatpush.bf16.msra.mxu0 0
    %135 = vmatpush.bf16.msra.mxu0 0
    %136 = vmatpush.bf16.msra.mxu0 0
    %137 = vmatpush.bf16.msra.mxu0 0
    %138 = vmatpush.bf16.msra.mxu0 0
    %139 = vmatpush.bf16.msra.mxu0 %v106
    %140 = vmatmul.bf16.gmra.mxu0 %v96
    %v141 = vpop.f32.mrf.mxu0
    %v142 = vadd.f32 %v82, %v141
    %v143 = vpop.f32.mrf.mxu0
    %v144 = vadd.f32 %v87, %v143
    %145 = vmatmul.bf16.gmra.mxu0 %v99
    %v146 = vpop.f32.mrf.mxu0
    %v147 = vadd.f32 %v92, %v146
    %v148 = vpop.f32.mrf.mxu0
    %149 = vdwg.mxu0
    %150 = vmatpush.bf16.msra.mxu0 0
    %151 = vmatpush.bf16.msra.mxu0 0
    %152 = vmatpush.bf16.msra.mxu0 0
    %153 = vmatpush.bf16.msra.mxu0 0
    %154 = vmatpush.bf16.msra.mxu0 0
    %155 = vmatpush.bf16.msra.mxu0 0
    %156 = vmatpush.bf16.msra.mxu0 0
    %157 = vmatpush.bf16.msra.mxu0 %v109
    %158 = vmatmul.bf16.gmra.mxu0 %v96
    %v159 = vpop.f32.mrf.mxu0
    %v160 = vadd.f32 %v82, %v159
    %v161 = vpop.f32.mrf.mxu0
    %v162 = vadd.f32 %v87, %v161
    %163 = vmatmul.bf16.gmra.mxu0 %v99
    %v164 = vpop.f32.mrf.mxu0
    %v165 = vadd.f32 %v92, %v164
    %v166 = vpop.f32.mrf.mxu0
    %167 = vdwg.mxu0
    %168 = vmatpush.bf16.msra.mxu0 0
    %169 = vmatpush.bf16.msra.mxu0 0
    %170 = vmatpush.bf16.msra.mxu0 0
    %171 = vmatpush.bf16.msra.mxu0 0
    %172 = vmatpush.bf16.msra.mxu0 0
    %173 = vmatpush.bf16.msra.mxu0 0
    %174 = vmatpush.bf16.msra.mxu0 0
    %175 = vmatpush.bf16.msra.mxu0 %v112
    %176 = vmatmul.bf16.gmra.mxu0 %v96
    %v177 = vpop.f32.mrf.mxu0
    %v178 = vadd.f32 %v82, %v177
    %v179 = vpop.f32.mrf.mxu0
    %v180 = vadd.f32 %v87, %v179
    %181 = vmatmul.bf16.gmra.mxu0 %v99
    %v182 = vpop.f32.mrf.mxu0
    %v183 = vadd.f32 %v92, %v182
    %v184 = vpop.f32.mrf.mxu0
    %185 = vdwg.mxu0
    %186 = vrot.lane.b32.xlu0 %v126, 17
    %v187 = vpop.permute.xlu0 %186
    %188 = vrot.lane.b32.xlu0 %v144, 17
    %v189 = vpop.permute.xlu0 %188
    %190 = vrot.lane.b32.xlu0 %v162, 17
    %v191 = vpop.permute.xlu0 %190
    %192 = vrot.lane.b32.xlu0 %v180, 17
    %v193 = vpop.permute.xlu0 %192
    %v194 = vlaneseq
    %v195 = vand.u32 %v194, 127
    %vm196 = vcmp.lt.s32.totalorder %v195, 17
    %v197 = vsel %vm196, %v191, %v193
    %v198 = vsel %vm196, %v189, %v191
    %v199 = vsel %vm196, %v187, %v189
    %v200 = vsel %vm196, %v193, %v187
    %v201 = vmul.f32 %v200, %v124
    %v202 = vmul.f32 %v199, %v142
    %v203 = vmul.f32 %v198, %v160
    %v204 = vmul.f32 %v197, %v178
    %v206 = vsel %vm94, %v69, 0
    %208 = vmatpush.msra.mxu0 0.0
    %209 = vmatpush.msra.mxu0 0.0
    %210 = vmatpush.msra.mxu0 0.0
    %211 = vmatpush.msra.mxu0 0.0
    %212 = vmatpush.msra.mxu0 0.0
    %213 = vmatpush.msra.mxu0 0.0
    %214 = vmatpush.msra.mxu0 0.0
    %215 = vmatpush.msra.mxu0 0.0
    %216 = vmatpush.msra.mxu0 0.0
    %217 = vmatpush.msra.mxu0 0.0
    %218 = vmatpush.msra.mxu0 0.0
    %219 = vmatpush.msra.mxu0 0.0
    %220 = vmatpush.msra.mxu0 0.0
    %221 = vmatpush.msra.mxu0 0.0
    %222 = vmatpush.msra.mxu0 0.0
    %223 = vmatpush.msra.mxu0 %v201
    %224 = vmatmul.f32.gmra.mxu0 %v206
    %v225 = vpop.f32.mrf.mxu0
    %v226 = vadd.f32 0.0, %v225
    %227 = vdwg.mxu0
    %228 = vmatpush.msra.mxu0 0.0
    %229 = vmatpush.msra.mxu0 0.0
    %230 = vmatpush.msra.mxu0 0.0
    %231 = vmatpush.msra.mxu0 0.0
    %232 = vmatpush.msra.mxu0 0.0
    %233 = vmatpush.msra.mxu0 0.0
    %234 = vmatpush.msra.mxu0 0.0
    %235 = vmatpush.msra.mxu0 0.0
    %236 = vmatpush.msra.mxu0 0.0
    %237 = vmatpush.msra.mxu0 0.0
    %238 = vmatpush.msra.mxu0 0.0
    %239 = vmatpush.msra.mxu0 0.0
    %240 = vmatpush.msra.mxu0 0.0
    %241 = vmatpush.msra.mxu0 0.0
    %242 = vmatpush.msra.mxu0 0.0
    %243 = vmatpush.msra.mxu0 %v202
    %244 = vmatmul.f32.gmra.mxu0 %v206
    %v245 = vpop.f32.mrf.mxu0
    %v246 = vadd.f32 0.0, %v245
    %247 = vdwg.mxu0
    %248 = vmatpush.msra.mxu0 0.0
    %249 = vmatpush.msra.mxu0 0.0
    %250 = vmatpush.msra.mxu0 0.0
    %251 = vmatpush.msra.mxu0 0.0
    %252 = vmatpush.msra.mxu0 0.0
    %253 = vmatpush.msra.mxu0 0.0
    %254 = vmatpush.msra.mxu0 0.0
    %255 = vmatpush.msra.mxu0 0.0
    %256 = vmatpush.msra.mxu0 0.0
    %257 = vmatpush.msra.mxu0 0.0
    %258 = vmatpush.msra.mxu0 0.0
    %259 = vmatpush.msra.mxu0 0.0
    %260 = vmatpush.msra.mxu0 0.0
    %261 = vmatpush.msra.mxu0 0.0
    %262 = vmatpush.msra.mxu0 0.0
    %263 = vmatpush.msra.mxu0 %v203
    %264 = vmatmul.f32.gmra.mxu0 %v206
    %v265 = vpop.f32.mrf.mxu0
    %v266 = vadd.f32 0.0, %v265
    %267 = vdwg.mxu0
    %268 = vmatpush.msra.mxu0 0.0
    %269 = vmatpush.msra.mxu0 0.0
    %270 = vmatpush.msra.mxu0 0.0
    %271 = vmatpush.msra.mxu0 0.0
    %272 = vmatpush.msra.mxu0 0.0
    %273 = vmatpush.msra.mxu0 0.0
    %274 = vmatpush.msra.mxu0 0.0
    %275 = vmatpush.msra.mxu0 0.0
    %276 = vmatpush.msra.mxu0 0.0
    %277 = vmatpush.msra.mxu0 0.0
    %278 = vmatpush.msra.mxu0 0.0
    %279 = vmatpush.msra.mxu0 0.0
    %280 = vmatpush.msra.mxu0 0.0
    %281 = vmatpush.msra.mxu0 0.0
    %282 = vmatpush.msra.mxu0 0.0
    %283 = vmatpush.msra.mxu0 %v204
    %284 = vmatmul.f32.gmra.mxu0 %v206
    %v285 = vpop.f32.mrf.mxu0
    %v286 = vadd.f32 0.0, %v285
    %287 = vdwg.mxu0
    %v288 = vperm.slane %v71, 0
    %v289 = vperm.slane %v72, 0
    %v290 = vperm.slane %v73, 0
    %v291 = vperm.slane %v74, 0
    %v292 = vmul.f32 %v226, %v288
    %v293 = vmul.f32 %v246, %v289
    %v294 = vmul.f32 %v266, %v290
    %v295 = vmul.f32 %v286, %v291
    %296 = vrot.lane.b32.xlu0 %v126, 16
    %v297 = vpop.permute.xlu0 %296
    %298 = vrot.lane.b32.xlu0 %v144, 16
    %v299 = vpop.permute.xlu0 %298
    %300 = vrot.lane.b32.xlu0 %v162, 16
    %v301 = vpop.permute.xlu0 %300
    %302 = vrot.lane.b32.xlu0 %v180, 16
    %v303 = vpop.permute.xlu0 %302
    %vm304 = vcmp.lt.s32.totalorder %v195, 16
    %v305 = vsel %vm304, %v301, %v303
    %v306 = vsel %vm304, %v299, %v301
    %v307 = vsel %vm304, %v297, %v299
    %v308 = vsel %vm304, %v303, %v297
    %v309 = vmul.f32 %v308, %v124
    %v310 = vmul.f32 %v307, %v142
    %v311 = vmul.f32 %v306, %v160
    %v312 = vmul.f32 %v305, %v178
    %313 = vmatpush.msra.mxu0 0.0
    %314 = vmatpush.msra.mxu0 0.0
    %315 = vmatpush.msra.mxu0 0.0
    %316 = vmatpush.msra.mxu0 0.0
    %317 = vmatpush.msra.mxu0 0.0
    %318 = vmatpush.msra.mxu0 0.0
    %319 = vmatpush.msra.mxu0 0.0
    %320 = vmatpush.msra.mxu0 0.0
    %321 = vmatpush.msra.mxu0 0.0
    %322 = vmatpush.msra.mxu0 0.0
    %323 = vmatpush.msra.mxu0 0.0
    %324 = vmatpush.msra.mxu0 0.0
    %325 = vmatpush.msra.mxu0 0.0
    %326 = vmatpush.msra.mxu0 0.0
    %327 = vmatpush.msra.mxu0 0.0
    %328 = vmatpush.msra.mxu0 %v309
    %329 = vmatmul.f32.gmra.mxu0 %v206
    %v330 = vpop.f32.mrf.mxu0
    %v331 = vadd.f32 0.0, %v330
    %332 = vdwg.mxu0
    %333 = vmatpush.msra.mxu0 0.0
    %334 = vmatpush.msra.mxu0 0.0
    %335 = vmatpush.msra.mxu0 0.0
    %336 = vmatpush.msra.mxu0 0.0
    %337 = vmatpush.msra.mxu0 0.0
    %338 = vmatpush.msra.mxu0 0.0
    %339 = vmatpush.msra.mxu0 0.0
    %340 = vmatpush.msra.mxu0 0.0
    %341 = vmatpush.msra.mxu0 0.0
    %342 = vmatpush.msra.mxu0 0.0
    %343 = vmatpush.msra.mxu0 0.0
    %344 = vmatpush.msra.mxu0 0.0
    %345 = vmatpush.msra.mxu0 0.0
    %346 = vmatpush.msra.mxu0 0.0
    %347 = vmatpush.msra.mxu0 0.0
    %348 = vmatpush.msra.mxu0 %v310
    %349 = vmatmul.f32.gmra.mxu0 %v206
    %v350 = vpop.f32.mrf.mxu0
    %v351 = vadd.f32 0.0, %v350
    %352 = vdwg.mxu0
    %353 = vmatpush.msra.mxu0 0.0
    %354 = vmatpush.msra.mxu0 0.0
    %355 = vmatpush.msra.mxu0 0.0
    %356 = vmatpush.msra.mxu0 0.0
    %357 = vmatpush.msra.mxu0 0.0
    %358 = vmatpush.msra.mxu0 0.0
    %359 = vmatpush.msra.mxu0 0.0
    %360 = vmatpush.msra.mxu0 0.0
    %361 = vmatpush.msra.mxu0 0.0
    %362 = vmatpush.msra.mxu0 0.0
    %363 = vmatpush.msra.mxu0 0.0
    %364 = vmatpush.msra.mxu0 0.0
    %365 = vmatpush.msra.mxu0 0.0
    %366 = vmatpush.msra.mxu0 0.0
    %367 = vmatpush.msra.mxu0 0.0
    %368 = vmatpush.msra.mxu0 %v311
    %369 = vmatmul.f32.gmra.mxu0 %v206
    %v370 = vpop.f32.mrf.mxu0
    %v371 = vadd.f32 0.0, %v370
    %372 = vdwg.mxu0
    %373 = vmatpush.msra.mxu0 0.0
    %374 = vmatpush.msra.mxu0 0.0
    %375 = vmatpush.msra.mxu0 0.0
    %376 = vmatpush.msra.mxu0 0.0
    %377 = vmatpush.msra.mxu0 0.0
    %378 = vmatpush.msra.mxu0 0.0
    %379 = vmatpush.msra.mxu0 0.0
    %380 = vmatpush.msra.mxu0 0.0
    %381 = vmatpush.msra.mxu0 0.0
    %382 = vmatpush.msra.mxu0 0.0
    %383 = vmatpush.msra.mxu0 0.0
    %384 = vmatpush.msra.mxu0 0.0
    %385 = vmatpush.msra.mxu0 0.0
    %386 = vmatpush.msra.mxu0 0.0
    %387 = vmatpush.msra.mxu0 0.0
    %388 = vmatpush.msra.mxu0 %v312
    %389 = vmatmul.f32.gmra.mxu0 %v206
    %v390 = vpop.f32.mrf.mxu0
    %v391 = vadd.f32 0.0, %v390
    %392 = vdwg.mxu0
    %v393 = vperm.slane %v71, 1
    %v394 = vperm.slane %v72, 1
    %v395 = vperm.slane %v73, 1
    %v396 = vperm.slane %v74, 1
    %v397 = vmul.f32 %v331, %v393
    %v398 = vmul.f32 %v351, %v394
    %v399 = vmul.f32 %v371, %v395
    %v400 = vmul.f32 %v391, %v396
    %401 = vrot.lane.b32.xlu0 %v126, 15
    %v402 = vpop.permute.xlu0 %401
    %403 = vrot.lane.b32.xlu0 %v144, 15
    %v404 = vpop.permute.xlu0 %403
    %405 = vrot.lane.b32.xlu0 %v162, 15
    %v406 = vpop.permute.xlu0 %405
    %407 = vrot.lane.b32.xlu0 %v180, 15
    %v408 = vpop.permute.xlu0 %407
    %vm409 = vcmp.lt.s32.totalorder %v195, 15
    %v410 = vsel %vm409, %v406, %v408
    %v411 = vsel %vm409, %v404, %v406
    %v412 = vsel %vm409, %v402, %v404
    %v413 = vsel %vm409, %v408, %v402
    %v414 = vmul.f32 %v413, %v124
    %v415 = vmul.f32 %v412, %v142
    %v416 = vmul.f32 %v411, %v160
    %v417 = vmul.f32 %v410, %v178
    %418 = vmatpush.msra.mxu0 0.0
    %419 = vmatpush.msra.mxu0 0.0
    %420 = vmatpush.msra.mxu0 0.0
    %421 = vmatpush.msra.mxu0 0.0
    %422 = vmatpush.msra.mxu0 0.0
    %423 = vmatpush.msra.mxu0 0.0
    %424 = vmatpush.msra.mxu0 0.0
    %425 = vmatpush.msra.mxu0 0.0
    %426 = vmatpush.msra.mxu0 0.0
    %427 = vmatpush.msra.mxu0 0.0
    %428 = vmatpush.msra.mxu0 0.0
    %429 = vmatpush.msra.mxu0 0.0
    %430 = vmatpush.msra.mxu0 0.0
    %431 = vmatpush.msra.mxu0 0.0
    %432 = vmatpush.msra.mxu0 0.0
    %433 = vmatpush.msra.mxu0 %v414
    %434 = vmatmul.f32.gmra.mxu0 %v206
    %v435 = vpop.f32.mrf.mxu0
    %v436 = vadd.f32 0.0, %v435
    %437 = vdwg.mxu0
    %438 = vmatpush.msra.mxu0 0.0
    %439 = vmatpush.msra.mxu0 0.0
    %440 = vmatpush.msra.mxu0 0.0
    %441 = vmatpush.msra.mxu0 0.0
    %442 = vmatpush.msra.mxu0 0.0
    %443 = vmatpush.msra.mxu0 0.0
    %444 = vmatpush.msra.mxu0 0.0
    %445 = vmatpush.msra.mxu0 0.0
    %446 = vmatpush.msra.mxu0 0.0
    %447 = vmatpush.msra.mxu0 0.0
    %448 = vmatpush.msra.mxu0 0.0
    %449 = vmatpush.msra.mxu0 0.0
    %450 = vmatpush.msra.mxu0 0.0
    %451 = vmatpush.msra.mxu0 0.0
    %452 = vmatpush.msra.mxu0 0.0
    %453 = vmatpush.msra.mxu0 %v415
    %454 = vmatmul.f32.gmra.mxu0 %v206
    %v455 = vpop.f32.mrf.mxu0
    %v456 = vadd.f32 0.0, %v455
    %457 = vdwg.mxu0
    %458 = vmatpush.msra.mxu0 0.0
    %459 = vmatpush.msra.mxu0 0.0
    %460 = vmatpush.msra.mxu0 0.0
    %461 = vmatpush.msra.mxu0 0.0
    %462 = vmatpush.msra.mxu0 0.0
    %463 = vmatpush.msra.mxu0 0.0
    %464 = vmatpush.msra.mxu0 0.0
    %465 = vmatpush.msra.mxu0 0.0
    %466 = vmatpush.msra.mxu0 0.0
    %467 = vmatpush.msra.mxu0 0.0
    %468 = vmatpush.msra.mxu0 0.0
    %469 = vmatpush.msra.mxu0 0.0
    %470 = vmatpush.msra.mxu0 0.0
    %471 = vmatpush.msra.mxu0 0.0
    %472 = vmatpush.msra.mxu0 0.0
    %473 = vmatpush.msra.mxu0 %v416
    %474 = vmatmul.f32.gmra.mxu0 %v206
    %v475 = vpop.f32.mrf.mxu0
    %v476 = vadd.f32 0.0, %v475
    %477 = vdwg.mxu0
    %478 = vmatpush.msra.mxu0 0.0
    %479 = vmatpush.msra.mxu0 0.0
    %480 = vmatpush.msra.mxu0 0.0
    %481 = vmatpush.msra.mxu0 0.0
    %482 = vmatpush.msra.mxu0 0.0
    %483 = vmatpush.msra.mxu0 0.0
    %484 = vmatpush.msra.mxu0 0.0
    %485 = vmatpush.msra.mxu0 0.0
    %486 = vmatpush.msra.mxu0 0.0
    %487 = vmatpush.msra.mxu0 0.0
    %488 = vmatpush.msra.mxu0 0.0
    %489 = vmatpush.msra.mxu0 0.0
    %490 = vmatpush.msra.mxu0 0.0
    %491 = vmatpush.msra.mxu0 0.0
    %492 = vmatpush.msra.mxu0 0.0
    %493 = vmatpush.msra.mxu0 %v417
    %494 = vmatmul.f32.gmra.mxu0 %v206
    %v495 = vpop.f32.mrf.mxu0
    %v496 = vadd.f32 0.0, %v495
    %497 = vdwg.mxu0
    %v498 = vperm.slane %v71, 2
    %v499 = vperm.slane %v72, 2
    %v500 = vperm.slane %v73, 2
    %v501 = vperm.slane %v74, 2
    %v502 = vmul.f32 %v436, %v498
    %v503 = vmul.f32 %v456, %v499
    %v504 = vmul.f32 %v476, %v500
    %v505 = vmul.f32 %v496, %v501
    %506 = vrot.lane.b32.xlu0 %v126, 1
    %v507 = vpop.permute.xlu0 %506
    %508 = vrot.lane.b32.xlu0 %v144, 1
    %v509 = vpop.permute.xlu0 %508
    %510 = vrot.lane.b32.xlu0 %v162, 1
    %v511 = vpop.permute.xlu0 %510
    %512 = vrot.lane.b32.xlu0 %v180, 1
    %v513 = vpop.permute.xlu0 %512
    %vm514 = vcmp.lt.s32.totalorder %v195, 1
    %v515 = vsel %vm514, %v511, %v513
    %v516 = vsel %vm514, %v509, %v511
    %v517 = vsel %vm514, %v507, %v509
    %v518 = vsel %vm514, %v513, %v507
    %v519 = vmul.f32 %v518, %v124
    %v520 = vmul.f32 %v517, %v142
    %v521 = vmul.f32 %v516, %v160
    %v522 = vmul.f32 %v515, %v178
    %523 = vmatpush.msra.mxu0 0.0
    %524 = vmatpush.msra.mxu0 0.0
    %525 = vmatpush.msra.mxu0 0.0
    %526 = vmatpush.msra.mxu0 0.0
    %527 = vmatpush.msra.mxu0 0.0
    %528 = vmatpush.msra.mxu0 0.0
    %529 = vmatpush.msra.mxu0 0.0
    %530 = vmatpush.msra.mxu0 0.0
    %531 = vmatpush.msra.mxu0 0.0
    %532 = vmatpush.msra.mxu0 0.0
    %533 = vmatpush.msra.mxu0 0.0
    %534 = vmatpush.msra.mxu0 0.0
    %535 = vmatpush.msra.mxu0 0.0
    %536 = vmatpush.msra.mxu0 0.0
    %537 = vmatpush.msra.mxu0 0.0
    %538 = vmatpush.msra.mxu0 %v519
    %539 = vmatmul.f32.gmra.mxu0 %v206
    %v540 = vpop.f32.mrf.mxu0
    %v541 = vadd.f32 0.0, %v540
    %542 = vdwg.mxu0
    %543 = vmatpush.msra.mxu0 0.0
    %544 = vmatpush.msra.mxu0 0.0
    %545 = vmatpush.msra.mxu0 0.0
    %546 = vmatpush.msra.mxu0 0.0
    %547 = vmatpush.msra.mxu0 0.0
    %548 = vmatpush.msra.mxu0 0.0
    %549 = vmatpush.msra.mxu0 0.0
    %550 = vmatpush.msra.mxu0 0.0
    %551 = vmatpush.msra.mxu0 0.0
    %552 = vmatpush.msra.mxu0 0.0
    %553 = vmatpush.msra.mxu0 0.0
    %554 = vmatpush.msra.mxu0 0.0
    %555 = vmatpush.msra.mxu0 0.0
    %556 = vmatpush.msra.mxu0 0.0
    %557 = vmatpush.msra.mxu0 0.0
    %558 = vmatpush.msra.mxu0 %v520
    %559 = vmatmul.f32.gmra.mxu0 %v206
    %v560 = vpop.f32.mrf.mxu0
    %v561 = vadd.f32 0.0, %v560
    %562 = vdwg.mxu0
    %563 = vmatpush.msra.mxu0 0.0
    %564 = vmatpush.msra.mxu0 0.0
    %565 = vmatpush.msra.mxu0 0.0
    %566 = vmatpush.msra.mxu0 0.0
    %567 = vmatpush.msra.mxu0 0.0
    %568 = vmatpush.msra.mxu0 0.0
    %569 = vmatpush.msra.mxu0 0.0
    %570 = vmatpush.msra.mxu0 0.0
    %571 = vmatpush.msra.mxu0 0.0
    %572 = vmatpush.msra.mxu0 0.0
    %573 = vmatpush.msra.mxu0 0.0
    %574 = vmatpush.msra.mxu0 0.0
    %575 = vmatpush.msra.mxu0 0.0
    %576 = vmatpush.msra.mxu0 0.0
    %577 = vmatpush.msra.mxu0 0.0
    %578 = vmatpush.msra.mxu0 %v521
    %579 = vmatmul.f32.gmra.mxu0 %v206
    %v580 = vpop.f32.mrf.mxu0
    %v581 = vadd.f32 0.0, %v580
    %582 = vdwg.mxu0
    %583 = vmatpush.msra.mxu0 0.0
    %584 = vmatpush.msra.mxu0 0.0
    %585 = vmatpush.msra.mxu0 0.0
    %586 = vmatpush.msra.mxu0 0.0
    %587 = vmatpush.msra.mxu0 0.0
    %588 = vmatpush.msra.mxu0 0.0
    %589 = vmatpush.msra.mxu0 0.0
    %590 = vmatpush.msra.mxu0 0.0
    %591 = vmatpush.msra.mxu0 0.0
    %592 = vmatpush.msra.mxu0 0.0
    %593 = vmatpush.msra.mxu0 0.0
    %594 = vmatpush.msra.mxu0 0.0
    %595 = vmatpush.msra.mxu0 0.0
    %596 = vmatpush.msra.mxu0 0.0
    %597 = vmatpush.msra.mxu0 0.0
    %598 = vmatpush.msra.mxu0 %v522
    %599 = vmatmul.f32.gmra.mxu0 %v206
    %v600 = vpop.f32.mrf.mxu0
    %v601 = vadd.f32 0.0, %v600
    %602 = vdwg.mxu0
    %v603 = vperm.slane %v71, 3
    %v604 = vperm.slane %v72, 3
    %v605 = vperm.slane %v73, 3
    %v606 = vperm.slane %v74, 3
    %v607 = vmul.f32 %v541, %v603
    %v608 = vmul.f32 %v561, %v604
    %v609 = vmul.f32 %v581, %v605
    %v610 = vmul.f32 %v601, %v606
    %v611 = vmul.f32 %v126, %v124
    %v612 = vmul.f32 %v144, %v142
    %v613 = vmul.f32 %v162, %v160
    %v614 = vmul.f32 %v180, %v178
    %615 = vmatpush.msra.mxu0 0.0
    %616 = vmatpush.msra.mxu0 0.0
    %617 = vmatpush.msra.mxu0 0.0
    %618 = vmatpush.msra.mxu0 0.0
    %619 = vmatpush.msra.mxu0 0.0
    %620 = vmatpush.msra.mxu0 0.0
    %621 = vmatpush.msra.mxu0 0.0
    %622 = vmatpush.msra.mxu0 0.0
    %623 = vmatpush.msra.mxu0 0.0
    %624 = vmatpush.msra.mxu0 0.0
    %625 = vmatpush.msra.mxu0 0.0
    %626 = vmatpush.msra.mxu0 0.0
    %627 = vmatpush.msra.mxu0 0.0
    %628 = vmatpush.msra.mxu0 0.0
    %629 = vmatpush.msra.mxu0 0.0
    %630 = vmatpush.msra.mxu0 %v611
    %631 = vmatmul.f32.gmra.mxu0 %v206
    %v632 = vpop.f32.mrf.mxu0
    %v633 = vadd.f32 0.0, %v632
    %634 = vdwg.mxu0
    %635 = vmatpush.msra.mxu0 0.0
    %636 = vmatpush.msra.mxu0 0.0
    %637 = vmatpush.msra.mxu0 0.0
    %638 = vmatpush.msra.mxu0 0.0
    %639 = vmatpush.msra.mxu0 0.0
    %640 = vmatpush.msra.mxu0 0.0
    %641 = vmatpush.msra.mxu0 0.0
    %642 = vmatpush.msra.mxu0 0.0
    %643 = vmatpush.msra.mxu0 0.0
    %644 = vmatpush.msra.mxu0 0.0
    %645 = vmatpush.msra.mxu0 0.0
    %646 = vmatpush.msra.mxu0 0.0
    %647 = vmatpush.msra.mxu0 0.0
    %648 = vmatpush.msra.mxu0 0.0
    %649 = vmatpush.msra.mxu0 0.0
    %650 = vmatpush.msra.mxu0 %v612
    %651 = vmatmul.f32.gmra.mxu0 %v206
    %v652 = vpop.f32.mrf.mxu0
    %v653 = vadd.f32 0.0, %v652
    %654 = vdwg.mxu0
    %655 = vmatpush.msra.mxu0 0.0
    %656 = vmatpush.msra.mxu0 0.0
    %657 = vmatpush.msra.mxu0 0.0
    %658 = vmatpush.msra.mxu0 0.0
    %659 = vmatpush.msra.mxu0 0.0
    %660 = vmatpush.msra.mxu0 0.0
    %661 = vmatpush.msra.mxu0 0.0
    %662 = vmatpush.msra.mxu0 0.0
    %663 = vmatpush.msra.mxu0 0.0
    %664 = vmatpush.msra.mxu0 0.0
    %665 = vmatpush.msra.mxu0 0.0
    %666 = vmatpush.msra.mxu0 0.0
    %667 = vmatpush.msra.mxu0 0.0
    %668 = vmatpush.msra.mxu0 0.0
    %669 = vmatpush.msra.mxu0 0.0
    %670 = vmatpush.msra.mxu0 %v613
    %671 = vmatmul.f32.gmra.mxu0 %v206
    %v672 = vpop.f32.mrf.mxu0
    %v673 = vadd.f32 0.0, %v672
    %674 = vdwg.mxu0
    %675 = vmatpush.msra.mxu0 0.0
    %676 = vmatpush.msra.mxu0 0.0
    %677 = vmatpush.msra.mxu0 0.0
    %678 = vmatpush.msra.mxu0 0.0
    %679 = vmatpush.msra.mxu0 0.0
    %680 = vmatpush.msra.mxu0 0.0
    %681 = vmatpush.msra.mxu0 0.0
    %682 = vmatpush.msra.mxu0 0.0
    %683 = vmatpush.msra.mxu0 0.0
    %684 = vmatpush.msra.mxu0 0.0
    %685 = vmatpush.msra.mxu0 0.0
    %686 = vmatpush.msra.mxu0 0.0
    %687 = vmatpush.msra.mxu0 0.0
    %688 = vmatpush.msra.mxu0 0.0
    %689 = vmatpush.msra.mxu0 0.0
    %690 = vmatpush.msra.mxu0 %v614
    %691 = vmatmul.f32.gmra.mxu0 %v206
    %v692 = vpop.f32.mrf.mxu0
    %v693 = vadd.f32 0.0, %v692
    %694 = vdwg.mxu0
    %v695 = vperm.slane %v71, 4
    %v696 = vperm.slane %v72, 4
    %v697 = vperm.slane %v73, 4
    %v698 = vperm.slane %v74, 4
    %v699 = vmul.f32 %v633, %v695
    %v700 = vmul.f32 %v653, %v696
    %v701 = vmul.f32 %v673, %v697
    %v702 = vmul.f32 %v693, %v698
    %703 = vrot.lane.b32.xlu0 %v126, 127
    %v704 = vpop.permute.xlu0 %703
    %705 = vrot.lane.b32.xlu0 %v144, 127
    %v706 = vpop.permute.xlu0 %705
    %707 = vrot.lane.b32.xlu0 %v162, 127
    %v708 = vpop.permute.xlu0 %707
    %709 = vrot.lane.b32.xlu0 %v180, 127
    %v710 = vpop.permute.xlu0 %709
    %vm711 = vcmp.lt.s32.totalorder %v195, 127
    %v712 = vsel %vm711, %v708, %v710
    %v713 = vsel %vm711, %v706, %v708
    %v714 = vsel %vm711, %v704, %v706
    %v715 = vsel %vm711, %v710, %v704
    %v716 = vmul.f32 %v714, %v124
    %v717 = vmul.f32 %v713, %v142
    %v718 = vmul.f32 %v712, %v160
    %v719 = vmul.f32 %v715, %v178
    %720 = vmatpush.msra.mxu0 0.0
    %721 = vmatpush.msra.mxu0 0.0
    %722 = vmatpush.msra.mxu0 0.0
    %723 = vmatpush.msra.mxu0 0.0
    %724 = vmatpush.msra.mxu0 0.0
    %725 = vmatpush.msra.mxu0 0.0
    %726 = vmatpush.msra.mxu0 0.0
    %727 = vmatpush.msra.mxu0 0.0
    %728 = vmatpush.msra.mxu0 0.0
    %729 = vmatpush.msra.mxu0 0.0
    %730 = vmatpush.msra.mxu0 0.0
    %731 = vmatpush.msra.mxu0 0.0
    %732 = vmatpush.msra.mxu0 0.0
    %733 = vmatpush.msra.mxu0 0.0
    %734 = vmatpush.msra.mxu0 0.0
    %735 = vmatpush.msra.mxu0 %v716
    %736 = vmatmul.f32.gmra.mxu0 %v206
    %v737 = vpop.f32.mrf.mxu0
    %v738 = vadd.f32 0.0, %v737
    %739 = vdwg.mxu0
    %740 = vmatpush.msra.mxu0 0.0
    %741 = vmatpush.msra.mxu0 0.0
    %742 = vmatpush.msra.mxu0 0.0
    %743 = vmatpush.msra.mxu0 0.0
    %744 = vmatpush.msra.mxu0 0.0
    %745 = vmatpush.msra.mxu0 0.0
    %746 = vmatpush.msra.mxu0 0.0
    %747 = vmatpush.msra.mxu0 0.0
    %748 = vmatpush.msra.mxu0 0.0
    %749 = vmatpush.msra.mxu0 0.0
    %750 = vmatpush.msra.mxu0 0.0
    %751 = vmatpush.msra.mxu0 0.0
    %752 = vmatpush.msra.mxu0 0.0
    %753 = vmatpush.msra.mxu0 0.0
    %754 = vmatpush.msra.mxu0 0.0
    %755 = vmatpush.msra.mxu0 %v717
    %756 = vmatmul.f32.gmra.mxu0 %v206
    %v757 = vpop.f32.mrf.mxu0
    %v758 = vadd.f32 0.0, %v757
    %759 = vdwg.mxu0
    %760 = vmatpush.msra.mxu0 0.0
    %761 = vmatpush.msra.mxu0 0.0
    %762 = vmatpush.msra.mxu0 0.0
    %763 = vmatpush.msra.mxu0 0.0
    %764 = vmatpush.msra.mxu0 0.0
    %765 = vmatpush.msra.mxu0 0.0
    %766 = vmatpush.msra.mxu0 0.0
    %767 = vmatpush.msra.mxu0 0.0
    %768 = vmatpush.msra.mxu0 0.0
    %769 = vmatpush.msra.mxu0 0.0
    %770 = vmatpush.msra.mxu0 0.0
    %771 = vmatpush.msra.mxu0 0.0
    %772 = vmatpush.msra.mxu0 0.0
    %773 = vmatpush.msra.mxu0 0.0
    %774 = vmatpush.msra.mxu0 0.0
    %775 = vmatpush.msra.mxu0 %v718
    %776 = vmatmul.f32.gmra.mxu0 %v206
    %v777 = vpop.f32.mrf.mxu0
    %v778 = vadd.f32 0.0, %v777
    %779 = vdwg.mxu0
    %780 = vmatpush.msra.mxu0 0.0
    %781 = vmatpush.msra.mxu0 0.0
    %782 = vmatpush.msra.mxu0 0.0
    %783 = vmatpush.msra.mxu0 0.0
    %784 = vmatpush.msra.mxu0 0.0
    %785 = vmatpush.msra.mxu0 0.0
    %786 = vmatpush.msra.mxu0 0.0
    %787 = vmatpush.msra.mxu0 0.0
    %788 = vmatpush.msra.mxu0 0.0
    %789 = vmatpush.msra.mxu0 0.0
    %790 = vmatpush.msra.mxu0 0.0
    %791 = vmatpush.msra.mxu0 0.0
    %792 = vmatpush.msra.mxu0 0.0
    %793 = vmatpush.msra.mxu0 0.0
    %794 = vmatpush.msra.mxu0 0.0
    %795 = vmatpush.msra.mxu0 %v719
    %796 = vmatmul.f32.gmra.mxu0 %v206
    %v797 = vpop.f32.mrf.mxu0
    %v798 = vadd.f32 0.0, %v797
    %799 = vdwg.mxu0
    %v800 = vperm.slane %v71, 5
    %v801 = vperm.slane %v72, 5
    %v802 = vperm.slane %v73, 5
    %v803 = vperm.slane %v74, 5
    %v804 = vmul.f32 %v738, %v800
    %v805 = vmul.f32 %v758, %v801
    %v806 = vmul.f32 %v778, %v802
    %v807 = vmul.f32 %v798, %v803
    %808 = vrot.lane.b32.xlu0 %v126, 113
    %v809 = vpop.permute.xlu0 %808
    %810 = vrot.lane.b32.xlu0 %v144, 113
    %v811 = vpop.permute.xlu0 %810
    %812 = vrot.lane.b32.xlu0 %v162, 113
    %v813 = vpop.permute.xlu0 %812
    %814 = vrot.lane.b32.xlu0 %v180, 113
    %v815 = vpop.permute.xlu0 %814
    %vm816 = vcmp.lt.s32.totalorder %v195, 113
    %v817 = vsel %vm816, %v813, %v815
    %v818 = vsel %vm816, %v811, %v813
    %v819 = vsel %vm816, %v809, %v811
    %v820 = vsel %vm816, %v815, %v809
    %v821 = vmul.f32 %v819, %v124
    %v822 = vmul.f32 %v818, %v142
    %v823 = vmul.f32 %v817, %v160
    %v824 = vmul.f32 %v820, %v178
    %825 = vmatpush.msra.mxu0 0.0
    %826 = vmatpush.msra.mxu0 0.0
    %827 = vmatpush.msra.mxu0 0.0
    %828 = vmatpush.msra.mxu0 0.0
    %829 = vmatpush.msra.mxu0 0.0
    %830 = vmatpush.msra.mxu0 0.0
    %831 = vmatpush.msra.mxu0 0.0
    %832 = vmatpush.msra.mxu0 0.0
    %833 = vmatpush.msra.mxu0 0.0
    %834 = vmatpush.msra.mxu0 0.0
    %835 = vmatpush.msra.mxu0 0.0
    %836 = vmatpush.msra.mxu0 0.0
    %837 = vmatpush.msra.mxu0 0.0
    %838 = vmatpush.msra.mxu0 0.0
    %839 = vmatpush.msra.mxu0 0.0
    %840 = vmatpush.msra.mxu0 %v821
    %841 = vmatmul.f32.gmra.mxu0 %v206
    %v842 = vpop.f32.mrf.mxu0
    %v843 = vadd.f32 0.0, %v842
    %844 = vdwg.mxu0
    %845 = vmatpush.msra.mxu0 0.0
    %846 = vmatpush.msra.mxu0 0.0
    %847 = vmatpush.msra.mxu0 0.0
    %848 = vmatpush.msra.mxu0 0.0
    %849 = vmatpush.msra.mxu0 0.0
    %850 = vmatpush.msra.mxu0 0.0
    %851 = vmatpush.msra.mxu0 0.0
    %852 = vmatpush.msra.mxu0 0.0
    %853 = vmatpush.msra.mxu0 0.0
    %854 = vmatpush.msra.mxu0 0.0
    %855 = vmatpush.msra.mxu0 0.0
    %856 = vmatpush.msra.mxu0 0.0
    %857 = vmatpush.msra.mxu0 0.0
    %858 = vmatpush.msra.mxu0 0.0
    %859 = vmatpush.msra.mxu0 0.0
    %860 = vmatpush.msra.mxu0 %v822
    %861 = vmatmul.f32.gmra.mxu0 %v206
    %v862 = vpop.f32.mrf.mxu0
    %v863 = vadd.f32 0.0, %v862
    %864 = vdwg.mxu0
    %865 = vmatpush.msra.mxu0 0.0
    %866 = vmatpush.msra.mxu0 0.0
    %867 = vmatpush.msra.mxu0 0.0
    %868 = vmatpush.msra.mxu0 0.0
    %869 = vmatpush.msra.mxu0 0.0
    %870 = vmatpush.msra.mxu0 0.0
    %871 = vmatpush.msra.mxu0 0.0
    %872 = vmatpush.msra.mxu0 0.0
    %873 = vmatpush.msra.mxu0 0.0
    %874 = vmatpush.msra.mxu0 0.0
    %875 = vmatpush.msra.mxu0 0.0
    %876 = vmatpush.msra.mxu0 0.0
    %877 = vmatpush.msra.mxu0 0.0
    %878 = vmatpush.msra.mxu0 0.0
    %879 = vmatpush.msra.mxu0 0.0
    %880 = vmatpush.msra.mxu0 %v823
    %881 = vmatmul.f32.gmra.mxu0 %v206
    %v882 = vpop.f32.mrf.mxu0
    %v883 = vadd.f32 0.0, %v882
    %884 = vdwg.mxu0
    %885 = vmatpush.msra.mxu0 0.0
    %886 = vmatpush.msra.mxu0 0.0
    %887 = vmatpush.msra.mxu0 0.0
    %888 = vmatpush.msra.mxu0 0.0
    %889 = vmatpush.msra.mxu0 0.0
    %890 = vmatpush.msra.mxu0 0.0
    %891 = vmatpush.msra.mxu0 0.0
    %892 = vmatpush.msra.mxu0 0.0
    %893 = vmatpush.msra.mxu0 0.0
    %894 = vmatpush.msra.mxu0 0.0
    %895 = vmatpush.msra.mxu0 0.0
    %896 = vmatpush.msra.mxu0 0.0
    %897 = vmatpush.msra.mxu0 0.0
    %898 = vmatpush.msra.mxu0 0.0
    %899 = vmatpush.msra.mxu0 0.0
    %900 = vmatpush.msra.mxu0 %v824
    %901 = vmatmul.f32.gmra.mxu0 %v206
    %v902 = vpop.f32.mrf.mxu0
    %v903 = vadd.f32 0.0, %v902
    %904 = vdwg.mxu0
    %v905 = vperm.slane %v71, 6
    %v906 = vperm.slane %v72, 6
    %v907 = vperm.slane %v73, 6
    %v908 = vperm.slane %v74, 6
    %v909 = vmul.f32 %v843, %v905
    %v910 = vmul.f32 %v863, %v906
    %v911 = vmul.f32 %v883, %v907
    %v912 = vmul.f32 %v903, %v908
    %913 = vrot.lane.b32.xlu0 %v126, 112
    %v914 = vpop.permute.xlu0 %913
    %915 = vrot.lane.b32.xlu0 %v144, 112
    %v916 = vpop.permute.xlu0 %915
    %917 = vrot.lane.b32.xlu0 %v162, 112
    %v918 = vpop.permute.xlu0 %917
    %919 = vrot.lane.b32.xlu0 %v180, 112
    %v920 = vpop.permute.xlu0 %919
    %vm921 = vcmp.lt.s32.totalorder %v195, 112
    %v922 = vsel %vm921, %v918, %v920
    %v923 = vsel %vm921, %v916, %v918
    %v924 = vsel %vm921, %v914, %v916
    %v925 = vsel %vm921, %v920, %v914
    %v926 = vmul.f32 %v924, %v124
    %v927 = vmul.f32 %v923, %v142
    %v928 = vmul.f32 %v922, %v160
    %v929 = vmul.f32 %v925, %v178
    %930 = vmatpush.msra.mxu0 0.0
    %931 = vmatpush.msra.mxu0 0.0
    %932 = vmatpush.msra.mxu0 0.0
    %933 = vmatpush.msra.mxu0 0.0
    %934 = vmatpush.msra.mxu0 0.0
    %935 = vmatpush.msra.mxu0 0.0
    %936 = vmatpush.msra.mxu0 0.0
    %937 = vmatpush.msra.mxu0 0.0
    %938 = vmatpush.msra.mxu0 0.0
    %939 = vmatpush.msra.mxu0 0.0
    %940 = vmatpush.msra.mxu0 0.0
    %941 = vmatpush.msra.mxu0 0.0
    %942 = vmatpush.msra.mxu0 0.0
    %943 = vmatpush.msra.mxu0 0.0
    %944 = vmatpush.msra.mxu0 0.0
    %945 = vmatpush.msra.mxu0 %v926
    %946 = vmatmul.f32.gmra.mxu0 %v206
    %v947 = vpop.f32.mrf.mxu0
    %v948 = vadd.f32 0.0, %v947
    %949 = vdwg.mxu0
    %950 = vmatpush.msra.mxu0 0.0
    %951 = vmatpush.msra.mxu0 0.0
    %952 = vmatpush.msra.mxu0 0.0
    %953 = vmatpush.msra.mxu0 0.0
    %954 = vmatpush.msra.mxu0 0.0
    %955 = vmatpush.msra.mxu0 0.0
    %956 = vmatpush.msra.mxu0 0.0
    %957 = vmatpush.msra.mxu0 0.0
    %958 = vmatpush.msra.mxu0 0.0
    %959 = vmatpush.msra.mxu0 0.0
    %960 = vmatpush.msra.mxu0 0.0
    %961 = vmatpush.msra.mxu0 0.0
    %962 = vmatpush.msra.mxu0 0.0
    %963 = vmatpush.msra.mxu0 0.0
    %964 = vmatpush.msra.mxu0 0.0
    %965 = vmatpush.msra.mxu0 %v927
    %966 = vmatmul.f32.gmra.mxu0 %v206
    %v967 = vpop.f32.mrf.mxu0
    %v968 = vadd.f32 0.0, %v967
    %969 = vdwg.mxu0
    %970 = vmatpush.msra.mxu0 0.0
    %971 = vmatpush.msra.mxu0 0.0
    %972 = vmatpush.msra.mxu0 0.0
    %973 = vmatpush.msra.mxu0 0.0
    %974 = vmatpush.msra.mxu0 0.0
    %975 = vmatpush.msra.mxu0 0.0
    %976 = vmatpush.msra.mxu0 0.0
    %977 = vmatpush.msra.mxu0 0.0
    %978 = vmatpush.msra.mxu0 0.0
    %979 = vmatpush.msra.mxu0 0.0
    %980 = vmatpush.msra.mxu0 0.0
    %981 = vmatpush.msra.mxu0 0.0
    %982 = vmatpush.msra.mxu0 0.0
    %983 = vmatpush.msra.mxu0 0.0
    %984 = vmatpush.msra.mxu0 0.0
    %985 = vmatpush.msra.mxu0 %v928
    %986 = vmatmul.f32.gmra.mxu0 %v206
    %v987 = vpop.f32.mrf.mxu0
    %v988 = vadd.f32 0.0, %v987
    %989 = vdwg.mxu0
    %990 = vmatpush.msra.mxu0 0.0
    %991 = vmatpush.msra.mxu0 0.0
    %992 = vmatpush.msra.mxu0 0.0
    %993 = vmatpush.msra.mxu0 0.0
    %994 = vmatpush.msra.mxu0 0.0
    %995 = vmatpush.msra.mxu0 0.0
    %996 = vmatpush.msra.mxu0 0.0
    %997 = vmatpush.msra.mxu0 0.0
    %998 = vmatpush.msra.mxu0 0.0
    %999 = vmatpush.msra.mxu0 0.0
    %1000 = vmatpush.msra.mxu0 0.0
    %1001 = vmatpush.msra.mxu0 0.0
    %1002 = vmatpush.msra.mxu0 0.0
    %1003 = vmatpush.msra.mxu0 0.0
    %1004 = vmatpush.msra.mxu0 0.0
    %1005 = vmatpush.msra.mxu0 %v929
    %1006 = vmatmul.f32.gmra.mxu0 %v206
    %v1007 = vpop.f32.mrf.mxu0
    %v1008 = vadd.f32 0.0, %v1007
    %1009 = vdwg.mxu0
    %v1010 = vperm.slane %v71, 7
    %v1011 = vperm.slane %v72, 7
    %v1012 = vperm.slane %v73, 7
    %v1013 = vperm.slane %v74, 7
    %v1014 = vmul.f32 %v948, %v1010
    %v1015 = vmul.f32 %v968, %v1011
    %v1016 = vmul.f32 %v988, %v1012
    %v1017 = vmul.f32 %v1008, %v1013
    %1018 = vrot.lane.b32.xlu0 %v126, 111
    %v1019 = vpop.permute.xlu0 %1018
    %1020 = vrot.lane.b32.xlu0 %v144, 111
    %v1021 = vpop.permute.xlu0 %1020
    %1022 = vrot.lane.b32.xlu0 %v162, 111
    %v1023 = vpop.permute.xlu0 %1022
    %1024 = vrot.lane.b32.xlu0 %v180, 111
    %v1025 = vpop.permute.xlu0 %1024
    %vm1026 = vcmp.lt.s32.totalorder %v195, 111
    %v1027 = vsel %vm1026, %v1023, %v1025
    %v1028 = vsel %vm1026, %v1021, %v1023
    %v1029 = vsel %vm1026, %v1019, %v1021
    %v1030 = vsel %vm1026, %v1025, %v1019
    %v1031 = vmul.f32 %v1029, %v124
    %v1032 = vmul.f32 %v1028, %v142
    %v1033 = vmul.f32 %v1027, %v160
    %v1034 = vmul.f32 %v1030, %v178
    %1035 = vmatpush.msra.mxu0 0.0
    %1036 = vmatpush.msra.mxu0 0.0
    %1037 = vmatpush.msra.mxu0 0.0
    %1038 = vmatpush.msra.mxu0 0.0
    %1039 = vmatpush.msra.mxu0 0.0
    %1040 = vmatpush.msra.mxu0 0.0
    %1041 = vmatpush.msra.mxu0 0.0
    %1042 = vmatpush.msra.mxu0 0.0
    %1043 = vmatpush.msra.mxu0 0.0
    %1044 = vmatpush.msra.mxu0 0.0
    %1045 = vmatpush.msra.mxu0 0.0
    %1046 = vmatpush.msra.mxu0 0.0
    %1047 = vmatpush.msra.mxu0 0.0
    %1048 = vmatpush.msra.mxu0 0.0
    %1049 = vmatpush.msra.mxu0 0.0
    %1050 = vmatpush.msra.mxu0 %v1031
    %1051 = vmatmul.f32.gmra.mxu0 %v206
    %v1052 = vpop.f32.mrf.mxu0
    %v1053 = vadd.f32 0.0, %v1052
    %1054 = vdwg.mxu0
    %1055 = vmatpush.msra.mxu0 0.0
    %1056 = vmatpush.msra.mxu0 0.0
    %1057 = vmatpush.msra.mxu0 0.0
    %1058 = vmatpush.msra.mxu0 0.0
    %1059 = vmatpush.msra.mxu0 0.0
    %1060 = vmatpush.msra.mxu0 0.0
    %1061 = vmatpush.msra.mxu0 0.0
    %1062 = vmatpush.msra.mxu0 0.0
    %1063 = vmatpush.msra.mxu0 0.0
    %1064 = vmatpush.msra.mxu0 0.0
    %1065 = vmatpush.msra.mxu0 0.0
    %1066 = vmatpush.msra.mxu0 0.0
    %1067 = vmatpush.msra.mxu0 0.0
    %1068 = vmatpush.msra.mxu0 0.0
    %1069 = vmatpush.msra.mxu0 0.0
    %1070 = vmatpush.msra.mxu0 %v1032
    %1071 = vmatmul.f32.gmra.mxu0 %v206
    %v1072 = vpop.f32.mrf.mxu0
    %v1073 = vadd.f32 0.0, %v1072
    %1074 = vdwg.mxu0
    %1075 = vmatpush.msra.mxu0 0.0
    %1076 = vmatpush.msra.mxu0 0.0
    %1077 = vmatpush.msra.mxu0 0.0
    %1078 = vmatpush.msra.mxu0 0.0
    %1079 = vmatpush.msra.mxu0 0.0
    %1080 = vmatpush.msra.mxu0 0.0
    %1081 = vmatpush.msra.mxu0 0.0
    %1082 = vmatpush.msra.mxu0 0.0
    %1083 = vmatpush.msra.mxu0 0.0
    %1084 = vmatpush.msra.mxu0 0.0
    %1085 = vmatpush.msra.mxu0 0.0
    %1086 = vmatpush.msra.mxu0 0.0
    %1087 = vmatpush.msra.mxu0 0.0
    %1088 = vmatpush.msra.mxu0 0.0
    %1089 = vmatpush.msra.mxu0 0.0
    %1090 = vmatpush.msra.mxu0 %v1033
    %1091 = vmatmul.f32.gmra.mxu0 %v206
    %v1092 = vpop.f32.mrf.mxu0
    %v1093 = vadd.f32 0.0, %v1092
    %1094 = vdwg.mxu0
    %1095 = vmatpush.msra.mxu0 0.0
    %1096 = vmatpush.msra.mxu0 0.0
    %1097 = vmatpush.msra.mxu0 0.0
    %1098 = vmatpush.msra.mxu0 0.0
    %1099 = vmatpush.msra.mxu0 0.0
    %1100 = vmatpush.msra.mxu0 0.0
    %1101 = vmatpush.msra.mxu0 0.0
    %1102 = vmatpush.msra.mxu0 0.0
    %1103 = vmatpush.msra.mxu0 0.0
    %1104 = vmatpush.msra.mxu0 0.0
    %1105 = vmatpush.msra.mxu0 0.0
    %1106 = vmatpush.msra.mxu0 0.0
    %1107 = vmatpush.msra.mxu0 0.0
    %1108 = vmatpush.msra.mxu0 0.0
    %1109 = vmatpush.msra.mxu0 0.0
    %1110 = vmatpush.msra.mxu0 %v1034
    %1111 = vmatmul.f32.gmra.mxu0 %v206
    %v1112 = vpop.f32.mrf.mxu0
    %v1113 = vadd.f32 0.0, %v1112
    %1114 = vdwg.mxu0
    %v1115 = vperm.slane %v75, 0
    %v1116 = vperm.slane %v76, 0
    %v1117 = vperm.slane %v77, 0
    %v1118 = vperm.slane %v78, 0
    %v1119 = vmul.f32 %v1053, %v1115
    %v1120 = vmul.f32 %v1073, %v1116
    %v1121 = vmul.f32 %v1093, %v1117
    %v1122 = vmul.f32 %v1113, %v1118
    %vm1123 = vcmask 1041408
    %v1124 = vsel %vm1123, %v292, -inf
    %v1125 = vsel %vm1123, %v397, -inf
    %v1126 = vmax.f32 %v1124, %v1125
    %v1127 = vsel %vm1123, %v502, -inf
    %v1128 = vmax.f32 %v1126, %v1127
    %v1129 = vsel %vm1123, %v607, -inf
    %v1130 = vmax.f32 %v1128, %v1129
    %v1131 = vsel %vm1123, %v699, -inf
    %v1132 = vmax.f32 %v1130, %v1131
    %v1133 = vsel %vm1123, %v804, -inf
    %v1134 = vmax.f32 %v1132, %v1133
    %v1135 = vsel %vm1123, %v909, -inf
    %v1136 = vmax.f32 %v1134, %v1135
    %v1137 = vsel %vm1123, %v1014, -inf
    %v1138 = vmax.f32 %v1136, %v1137
    %v1139 = vsel %vm1123, %v1119, -inf
    %v1140 = vmax.f32 %v1138, %v1139
    %v1141 = vsel %vm1123, %v293, -inf
    %v1142 = vsel %vm1123, %v398, -inf
    %v1143 = vmax.f32 %v1141, %v1142
    %v1144 = vsel %vm1123, %v503, -inf
    %v1145 = vmax.f32 %v1143, %v1144
    %v1146 = vsel %vm1123, %v608, -inf
    %v1147 = vmax.f32 %v1145, %v1146
    %v1148 = vsel %vm1123, %v700, -inf
    %v1149 = vmax.f32 %v1147, %v1148
    %v1150 = vsel %vm1123, %v805, -inf
    %v1151 = vmax.f32 %v1149, %v1150
    %v1152 = vsel %vm1123, %v910, -inf
    %v1153 = vmax.f32 %v1151, %v1152
    %v1154 = vsel %vm1123, %v1015, -inf
    %v1155 = vmax.f32 %v1153, %v1154
    %v1156 = vsel %vm1123, %v1120, -inf
    %v1157 = vmax.f32 %v1155, %v1156
    %v1158 = vsel %vm1123, %v294, -inf
    %v1159 = vsel %vm1123, %v399, -inf
    %v1160 = vmax.f32 %v1158, %v1159
    %v1161 = vsel %vm1123, %v504, -inf
    %v1162 = vmax.f32 %v1160, %v1161
    %v1163 = vsel %vm1123, %v609, -inf
    %v1164 = vmax.f32 %v1162, %v1163
    %v1165 = vsel %vm1123, %v701, -inf
    %v1166 = vmax.f32 %v1164, %v1165
    %v1167 = vsel %vm1123, %v806, -inf
    %v1168 = vmax.f32 %v1166, %v1167
    %v1169 = vsel %vm1123, %v911, -inf
    %v1170 = vmax.f32 %v1168, %v1169
    %v1171 = vsel %vm1123, %v1016, -inf
    %v1172 = vmax.f32 %v1170, %v1171
    %v1173 = vsel %vm1123, %v1121, -inf
    %v1174 = vmax.f32 %v1172, %v1173
    %v1175 = vsel %vm1123, %v295, -inf
    %v1176 = vsel %vm1123, %v400, -inf
    %v1177 = vmax.f32 %v1175, %v1176
    %v1178 = vsel %vm1123, %v505, -inf
    %v1179 = vmax.f32 %v1177, %v1178
    %v1180 = vsel %vm1123, %v610, -inf
    %v1181 = vmax.f32 %v1179, %v1180
    %v1182 = vsel %vm1123, %v702, -inf
    %v1183 = vmax.f32 %v1181, %v1182
    %v1184 = vsel %vm1123, %v807, -inf
    %v1185 = vmax.f32 %v1183, %v1184
    %v1186 = vsel %vm1123, %v912, -inf
    %v1187 = vmax.f32 %v1185, %v1186
    %v1188 = vsel %vm1123, %v1017, -inf
    %v1189 = vmax.f32 %v1187, %v1188
    %v1190 = vsel %vm1123, %v1122, -inf
    %v1191 = vmax.f32 %v1189, %v1190
    %v1192 = vsub.f32 %v292, %v1140
    %v1193 = vsub.f32 %v293, %v1157
    %v1194 = vsub.f32 %v294, %v1174
    %v1195 = vsub.f32 %v295, %v1191
    %v1196 = vsub.f32 %v397, %v1140
    %v1197 = vsub.f32 %v398, %v1157
    %v1198 = vsub.f32 %v399, %v1174
    %v1199 = vsub.f32 %v400, %v1191
    %v1200 = vsub.f32 %v502, %v1140
    %v1201 = vsub.f32 %v503, %v1157
    %v1202 = vsub.f32 %v504, %v1174
    %v1203 = vsub.f32 %v505, %v1191
    %v1204 = vsub.f32 %v607, %v1140
    %v1205 = vsub.f32 %v608, %v1157
    %v1206 = vsub.f32 %v609, %v1174
    %v1207 = vsub.f32 %v610, %v1191
    %v1208 = vsub.f32 %v699, %v1140
    %v1209 = vsub.f32 %v700, %v1157
    %v1210 = vsub.f32 %v701, %v1174
    %v1211 = vsub.f32 %v702, %v1191
    %v1212 = vsub.f32 %v804, %v1140
    %v1213 = vsub.f32 %v805, %v1157
    %v1214 = vsub.f32 %v806, %v1174
    %v1215 = vsub.f32 %v807, %v1191
    %v1216 = vsub.f32 %v909, %v1140
    %v1217 = vsub.f32 %v910, %v1157
    %v1218 = vsub.f32 %v911, %v1174
    %v1219 = vsub.f32 %v912, %v1191
    %v1220 = vsub.f32 %v1014, %v1140
    %v1221 = vsub.f32 %v1015, %v1157
    %v1222 = vsub.f32 %v1016, %v1174
    %v1223 = vsub.f32 %v1017, %v1191
    %v1224 = vsub.f32 %v1119, %v1140
    %v1225 = vsub.f32 %v1120, %v1157
    %v1226 = vsub.f32 %v1121, %v1174
    %v1227 = vsub.f32 %v1122, %v1191
    %v1228 = vmul.f32 %v1192, 1.442695
    %v1229 = vpow.pop %v1228
    %v1230 = vmul.f32 %v1193, 1.442695
    %v1231 = vpow.pop %v1230
    %v1232 = vmul.f32 %v1194, 1.442695
    %v1233 = vpow.pop %v1232
    %v1234 = vmul.f32 %v1195, 1.442695
    %v1235 = vpow.pop %v1234
    %v1236 = vmul.f32 %v1196, 1.442695
    %v1237 = vpow.pop %v1236
    %v1238 = vmul.f32 %v1197, 1.442695
    %v1239 = vpow.pop %v1238
    %v1240 = vmul.f32 %v1198, 1.442695
    %v1241 = vpow.pop %v1240
    %v1242 = vmul.f32 %v1199, 1.442695
    %v1243 = vpow.pop %v1242
    %v1244 = vmul.f32 %v1200, 1.442695
    %v1245 = vpow.pop %v1244
    %v1246 = vmul.f32 %v1201, 1.442695
    %v1247 = vpow.pop %v1246
    %v1248 = vmul.f32 %v1202, 1.442695
    %v1249 = vpow.pop %v1248
    %v1250 = vmul.f32 %v1203, 1.442695
    %v1251 = vpow.pop %v1250
    %v1252 = vmul.f32 %v1204, 1.442695
    %v1253 = vpow.pop %v1252
    %v1254 = vmul.f32 %v1205, 1.442695
    %v1255 = vpow.pop %v1254
    %v1256 = vmul.f32 %v1206, 1.442695
    %v1257 = vpow.pop %v1256
    %v1258 = vmul.f32 %v1207, 1.442695
    %v1259 = vpow.pop %v1258
    %v1260 = vmul.f32 %v1208, 1.442695
    %v1261 = vpow.pop %v1260
    %v1262 = vmul.f32 %v1209, 1.442695
    %v1263 = vpow.pop %v1262
    %v1264 = vmul.f32 %v1210, 1.442695
    %v1265 = vpow.pop %v1264
    %v1266 = vmul.f32 %v1211, 1.442695
    %v1267 = vpow.pop %v1266
    %v1268 = vmul.f32 %v1212, 1.442695
    %v1269 = vpow.pop %v1268
    %v1270 = vmul.f32 %v1213, 1.442695
    %v1271 = vpow.pop %v1270
    %v1272 = vmul.f32 %v1214, 1.442695
    %v1273 = vpow.pop %v1272
    %v1274 = vmul.f32 %v1215, 1.442695
    %v1275 = vpow.pop %v1274
    %v1276 = vmul.f32 %v1216, 1.442695
    %v1277 = vpow.pop %v1276
    %v1278 = vmul.f32 %v1217, 1.442695
    %v1279 = vpow.pop %v1278
    %v1280 = vmul.f32 %v1218, 1.442695
    %v1281 = vpow.pop %v1280
    %v1282 = vmul.f32 %v1219, 1.442695
    %v1283 = vpow.pop %v1282
    %v1284 = vmul.f32 %v1220, 1.442695
    %v1285 = vpow.pop %v1284
    %v1286 = vmul.f32 %v1221, 1.442695
    %v1287 = vpow.pop %v1286
    %v1288 = vmul.f32 %v1222, 1.442695
    %v1289 = vpow.pop %v1288
    %v1290 = vmul.f32 %v1223, 1.442695
    %v1291 = vpow.pop %v1290
    %v1292 = vmul.f32 %v1224, 1.442695
    %v1293 = vpow.pop %v1292
    %v1294 = vmul.f32 %v1225, 1.442695
    %v1295 = vpow.pop %v1294
    %v1296 = vmul.f32 %v1226, 1.442695
    %v1297 = vpow.pop %v1296
    %v1298 = vmul.f32 %v1227, 1.442695
    %v1299 = vpow.pop %v1298
    %v1300 = vsel %vm1123, %v1229, 0.0
    %v1301 = vsel %vm1123, %v1237, 0.0
    %v1302 = vadd.f32 %v1300, %v1301
    %v1303 = vsel %vm1123, %v1245, 0.0
    %v1304 = vadd.f32 %v1302, %v1303
    %v1305 = vsel %vm1123, %v1253, 0.0
    %v1306 = vadd.f32 %v1304, %v1305
    %v1307 = vsel %vm1123, %v1261, 0.0
    %v1308 = vadd.f32 %v1306, %v1307
    %v1309 = vsel %vm1123, %v1269, 0.0
    %v1310 = vadd.f32 %v1308, %v1309
    %v1311 = vsel %vm1123, %v1277, 0.0
    %v1312 = vadd.f32 %v1310, %v1311
    %v1313 = vsel %vm1123, %v1285, 0.0
    %v1314 = vadd.f32 %v1312, %v1313
    %v1315 = vsel %vm1123, %v1293, 0.0
    %v1316 = vadd.f32 %v1314, %v1315
    %v1317 = vsel %vm1123, %v1231, 0.0
    %v1318 = vsel %vm1123, %v1239, 0.0
    %v1319 = vadd.f32 %v1317, %v1318
    %v1320 = vsel %vm1123, %v1247, 0.0
    %v1321 = vadd.f32 %v1319, %v1320
    %v1322 = vsel %vm1123, %v1255, 0.0
    %v1323 = vadd.f32 %v1321, %v1322
    %v1324 = vsel %vm1123, %v1263, 0.0
    %v1325 = vadd.f32 %v1323, %v1324
    %v1326 = vsel %vm1123, %v1271, 0.0
    %v1327 = vadd.f32 %v1325, %v1326
    %v1328 = vsel %vm1123, %v1279, 0.0
    %v1329 = vadd.f32 %v1327, %v1328
    %v1330 = vsel %vm1123, %v1287, 0.0
    %v1331 = vadd.f32 %v1329, %v1330
    %v1332 = vsel %vm1123, %v1295, 0.0
    %v1333 = vadd.f32 %v1331, %v1332
    %v1334 = vsel %vm1123, %v1233, 0.0
    %v1335 = vsel %vm1123, %v1241, 0.0
    %v1336 = vadd.f32 %v1334, %v1335
    %v1337 = vsel %vm1123, %v1249, 0.0
    %v1338 = vadd.f32 %v1336, %v1337
    %v1339 = vsel %vm1123, %v1257, 0.0
    %v1340 = vadd.f32 %v1338, %v1339
    %v1341 = vsel %vm1123, %v1265, 0.0
    %v1342 = vadd.f32 %v1340, %v1341
    %v1343 = vsel %vm1123, %v1273, 0.0
    %v1344 = vadd.f32 %v1342, %v1343
    %v1345 = vsel %vm1123, %v1281, 0.0
    %v1346 = vadd.f32 %v1344, %v1345
    %v1347 = vsel %vm1123, %v1289, 0.0
    %v1348 = vadd.f32 %v1346, %v1347
    %v1349 = vsel %vm1123, %v1297, 0.0
    %v1350 = vadd.f32 %v1348, %v1349
    %v1351 = vsel %vm1123, %v1235, 0.0
    %v1352 = vsel %vm1123, %v1243, 0.0
    %v1353 = vadd.f32 %v1351, %v1352
    %v1354 = vsel %vm1123, %v1251, 0.0
    %v1355 = vadd.f32 %v1353, %v1354
    %v1356 = vsel %vm1123, %v1259, 0.0
    %v1357 = vadd.f32 %v1355, %v1356
    %v1358 = vsel %vm1123, %v1267, 0.0
    %v1359 = vadd.f32 %v1357, %v1358
    %v1360 = vsel %vm1123, %v1275, 0.0
    %v1361 = vadd.f32 %v1359, %v1360
    %v1362 = vsel %vm1123, %v1283, 0.0
    %v1363 = vadd.f32 %v1361, %v1362
    %v1364 = vsel %vm1123, %v1291, 0.0
    %v1365 = vadd.f32 %v1363, %v1364
    %v1366 = vsel %vm1123, %v1299, 0.0
    %v1367 = vadd.f32 %v1365, %v1366
    %v1368 = vrcp.pop %v1316
    %v1369 = vmul.f32 %v1316, %v1368
    %v1370 = vsub.f32 1.0, %v1369
    %v1371 = vmul.f32 %v1368, %v1370
    %v1372 = vadd.f32 %v1368, %v1371
    %vm1373 = vweird.f32 %v1316
    %vm1374 = vweird.f32 %v1368
    %vm1375 = vmor %vm1373, %vm1374
    %v1376 = vsel %vm1375, %v1368, %v1372
    %v1377 = vand.u32 2147483647, %v1316
    %vm1378 = vcmp.eq.f32.partialorder %v1377, 8.507059e+37
    %v1379 = vand.u32 %v1316, 2147483648
    %v1380 = vor.u32 1.1754944e-38, %v1379
    %v1381 = vsel %vm1378, %v1380, %v1376
    %v1382 = vrcp.pop %v1333
    %v1383 = vmul.f32 %v1333, %v1382
    %v1384 = vsub.f32 1.0, %v1383
    %v1385 = vmul.f32 %v1382, %v1384
    %v1386 = vadd.f32 %v1382, %v1385
    %vm1387 = vweird.f32 %v1333
    %vm1388 = vweird.f32 %v1382
    %vm1389 = vmor %vm1387, %vm1388
    %v1390 = vsel %vm1389, %v1382, %v1386
    %v1391 = vand.u32 2147483647, %v1333
    %vm1392 = vcmp.eq.f32.partialorder %v1391, 8.507059e+37
    %v1393 = vand.u32 %v1333, 2147483648
    %v1394 = vor.u32 1.1754944e-38, %v1393
    %v1395 = vsel %vm1392, %v1394, %v1390
    %v1396 = vrcp.pop %v1350
    %v1397 = vmul.f32 %v1350, %v1396
    %v1398 = vsub.f32 1.0, %v1397
    %v1399 = vmul.f32 %v1396, %v1398
    %v1400 = vadd.f32 %v1396, %v1399
    %vm1401 = vweird.f32 %v1350
    %vm1402 = vweird.f32 %v1396
    %vm1403 = vmor %vm1401, %vm1402
    %v1404 = vsel %vm1403, %v1396, %v1400
    %v1405 = vand.u32 2147483647, %v1350
    %vm1406 = vcmp.eq.f32.partialorder %v1405, 8.507059e+37
    %v1407 = vand.u32 %v1350, 2147483648
    %v1408 = vor.u32 1.1754944e-38, %v1407
    %v1409 = vsel %vm1406, %v1408, %v1404
    %v1410 = vrcp.pop %v1367
    %v1411 = vmul.f32 %v1367, %v1410
    %v1412 = vsub.f32 1.0, %v1411
    %v1413 = vmul.f32 %v1410, %v1412
    %v1414 = vadd.f32 %v1410, %v1413
    %vm1415 = vweird.f32 %v1367
    %vm1416 = vweird.f32 %v1410
    %vm1417 = vmor %vm1415, %vm1416
    %v1418 = vsel %vm1417, %v1410, %v1414
    %v1419 = vand.u32 2147483647, %v1367
    %vm1420 = vcmp.eq.f32.partialorder %v1419, 8.507059e+37
    %v1421 = vand.u32 %v1367, 2147483648
    %v1422 = vor.u32 1.1754944e-38, %v1421
    %v1423 = vsel %vm1420, %v1422, %v1418
    %v1424 = vmul.f32 %v1229, %v1381
    %v1425 = vmul.f32 %v1231, %v1395
    %v1426 = vmul.f32 %v1233, %v1409
    %v1427 = vmul.f32 %v1235, %v1423
    %v1428 = vmul.f32 %v1237, %v1381
    %v1429 = vmul.f32 %v1239, %v1395
    %v1430 = vmul.f32 %v1241, %v1409
    %v1431 = vmul.f32 %v1243, %v1423
    %v1432 = vmul.f32 %v1245, %v1381
    %v1433 = vmul.f32 %v1247, %v1395
    %v1434 = vmul.f32 %v1249, %v1409
    %v1435 = vmul.f32 %v1251, %v1423
    %v1436 = vmul.f32 %v1253, %v1381
    %v1437 = vmul.f32 %v1255, %v1395
    %v1438 = vmul.f32 %v1257, %v1409
    %v1439 = vmul.f32 %v1259, %v1423
    %v1440 = vmul.f32 %v1261, %v1381
    %v1441 = vmul.f32 %v1263, %v1395
    %v1442 = vmul.f32 %v1265, %v1409
    %v1443 = vmul.f32 %v1267, %v1423
    %v1444 = vmul.f32 %v1269, %v1381
    %v1445 = vmul.f32 %v1271, %v1395
    %v1446 = vmul.f32 %v1273, %v1409
    %v1447 = vmul.f32 %v1275, %v1423
    %v1448 = vmul.f32 %v1277, %v1381
    %v1449 = vmul.f32 %v1279, %v1395
    %v1450 = vmul.f32 %v1281, %v1409
    %v1451 = vmul.f32 %v1283, %v1423
    %v1452 = vmul.f32 %v1285, %v1381
    %v1453 = vmul.f32 %v1287, %v1395
    %v1454 = vmul.f32 %v1289, %v1409
    %v1455 = vmul.f32 %v1291, %v1423
    %v1456 = vmul.f32 %v1293, %v1381
    %v1457 = vmul.f32 %v1295, %v1395
    %v1458 = vmul.f32 %v1297, %v1409
    %v1459 = vmul.f32 %v1299, %v1423
    %1460 = vrot.lane.b32.xlu0 %v129, 17
    %v1461 = vpop.permute.xlu0 %1460
    %1462 = vrot.lane.b32.xlu0 %v147, 17
    %v1463 = vpop.permute.xlu0 %1462
    %1464 = vrot.lane.b32.xlu0 %v165, 17
    %v1465 = vpop.permute.xlu0 %1464
    %1466 = vrot.lane.b32.xlu0 %v183, 17
    %v1467 = vpop.permute.xlu0 %1466
    %v1468 = vsel %vm196, %v1465, %v1467
    %v1469 = vsel %vm196, %v1463, %v1465
    %v1470 = vsel %vm196, %v1461, %v1463
    %v1471 = vsel %vm196, %v1467, %v1461
    %v1472 = vmul.f32 %v1424, %v288
    %v1473 = vmul.f32 %v1425, %v289
    %v1474 = vmul.f32 %v1426, %v290
    %v1475 = vmul.f32 %v1427, %v291
    %vm1476 = vcmask 15360
    %v1478 = vsel %vm1476, %v70, 0
    %v1481 = vsel %vm1123, %v1472, 0
    %v1484 = vsel %vm1123, %v1473, 0
    %v1487 = vsel %vm1123, %v1474, 0
    %v1490 = vsel %vm1123, %v1475, 0
    %1492 = vmatpush.msra.mxu0 0.0
    %1493 = vmatpush.msra.mxu0 0.0
    %1494 = vmatpush.msra.mxu0 0.0
    %1495 = vmatpush.msra.mxu0 0.0
    %1496 = vmatpush.msra.mxu0 0.0
    %1497 = vmatpush.msra.mxu0 0.0
    %1498 = vmatpush.msra.mxu0 0.0
    %1499 = vmatpush.msra.mxu0 0.0
    %1500 = vmatpush.msra.mxu0 0.0
    %1501 = vmatpush.msra.mxu0 0.0
    %1502 = vmatpush.msra.mxu0 0.0
    %1503 = vmatpush.msra.mxu0 0.0
    %1504 = vmatpush.msra.mxu0 0.0
    %1505 = vmatpush.msra.mxu0 0.0
    %1506 = vmatpush.msra.mxu0 0.0
    %1507 = vmatpush.msra.mxu0 %v1481
    %1508 = vmatmul.f32.gmra.mxu0 %v1478
    %v1509 = vpop.f32.mrf.mxu0
    %v1510 = vadd.f32 0.0, %v1509
    %1511 = vdwg.mxu0
    %1512 = vmatpush.msra.mxu0 0.0
    %1513 = vmatpush.msra.mxu0 0.0
    %1514 = vmatpush.msra.mxu0 0.0
    %1515 = vmatpush.msra.mxu0 0.0
    %1516 = vmatpush.msra.mxu0 0.0
    %1517 = vmatpush.msra.mxu0 0.0
    %1518 = vmatpush.msra.mxu0 0.0
    %1519 = vmatpush.msra.mxu0 0.0
    %1520 = vmatpush.msra.mxu0 0.0
    %1521 = vmatpush.msra.mxu0 0.0
    %1522 = vmatpush.msra.mxu0 0.0
    %1523 = vmatpush.msra.mxu0 0.0
    %1524 = vmatpush.msra.mxu0 0.0
    %1525 = vmatpush.msra.mxu0 0.0
    %1526 = vmatpush.msra.mxu0 0.0
    %1527 = vmatpush.msra.mxu0 %v1484
    %1528 = vmatmul.f32.gmra.mxu0 %v1478
    %v1529 = vpop.f32.mrf.mxu0
    %v1530 = vadd.f32 0.0, %v1529
    %1531 = vdwg.mxu0
    %1532 = vmatpush.msra.mxu0 0.0
    %1533 = vmatpush.msra.mxu0 0.0
    %1534 = vmatpush.msra.mxu0 0.0
    %1535 = vmatpush.msra.mxu0 0.0
    %1536 = vmatpush.msra.mxu0 0.0
    %1537 = vmatpush.msra.mxu0 0.0
    %1538 = vmatpush.msra.mxu0 0.0
    %1539 = vmatpush.msra.mxu0 0.0
    %1540 = vmatpush.msra.mxu0 0.0
    %1541 = vmatpush.msra.mxu0 0.0
    %1542 = vmatpush.msra.mxu0 0.0
    %1543 = vmatpush.msra.mxu0 0.0
    %1544 = vmatpush.msra.mxu0 0.0
    %1545 = vmatpush.msra.mxu0 0.0
    %1546 = vmatpush.msra.mxu0 0.0
    %1547 = vmatpush.msra.mxu0 %v1487
    %1548 = vmatmul.f32.gmra.mxu0 %v1478
    %v1549 = vpop.f32.mrf.mxu0
    %v1550 = vadd.f32 0.0, %v1549
    %1551 = vdwg.mxu0
    %1552 = vmatpush.msra.mxu0 0.0
    %1553 = vmatpush.msra.mxu0 0.0
    %1554 = vmatpush.msra.mxu0 0.0
    %1555 = vmatpush.msra.mxu0 0.0
    %1556 = vmatpush.msra.mxu0 0.0
    %1557 = vmatpush.msra.mxu0 0.0
    %1558 = vmatpush.msra.mxu0 0.0
    %1559 = vmatpush.msra.mxu0 0.0
    %1560 = vmatpush.msra.mxu0 0.0
    %1561 = vmatpush.msra.mxu0 0.0
    %1562 = vmatpush.msra.mxu0 0.0
    %1563 = vmatpush.msra.mxu0 0.0
    %1564 = vmatpush.msra.mxu0 0.0
    %1565 = vmatpush.msra.mxu0 0.0
    %1566 = vmatpush.msra.mxu0 0.0
    %1567 = vmatpush.msra.mxu0 %v1490
    %1568 = vmatmul.f32.gmra.mxu0 %v1478
    %v1569 = vpop.f32.mrf.mxu0
    %v1570 = vadd.f32 0.0, %v1569
    %1571 = vdwg.mxu0
    %v1572 = vmul.f32 %v1510, %v1471
    %v1573 = vmul.f32 %v1530, %v1470
    %v1574 = vmul.f32 %v1550, %v1469
    %v1575 = vmul.f32 %v1570, %v1468
    %v1576 = vadd.f32 %v1572, 0.0
    %v1577 = vadd.f32 %v1573, 0.0
    %v1578 = vadd.f32 %v1574, 0.0
    %v1579 = vadd.f32 %v1575, 0.0
    %1580 = vrot.lane.b32.xlu0 %v129, 16
    %v1581 = vpop.permute.xlu0 %1580
    %1582 = vrot.lane.b32.xlu0 %v147, 16
    %v1583 = vpop.permute.xlu0 %1582
    %1584 = vrot.lane.b32.xlu0 %v165, 16
    %v1585 = vpop.permute.xlu0 %1584
    %1586 = vrot.lane.b32.xlu0 %v183, 16
    %v1587 = vpop.permute.xlu0 %1586
    %v1588 = vsel %vm304, %v1585, %v1587
    %v1589 = vsel %vm304, %v1583, %v1585
    %v1590 = vsel %vm304, %v1581, %v1583
    %v1591 = vsel %vm304, %v1587, %v1581
    %v1592 = vmul.f32 %v1428, %v393
    %v1593 = vmul.f32 %v1429, %v394
    %v1594 = vmul.f32 %v1430, %v395
    %v1595 = vmul.f32 %v1431, %v396
    %v1597 = vsel %vm1123, %v1592, 0
    %v1600 = vsel %vm1123, %v1593, 0
    %v1603 = vsel %vm1123, %v1594, 0
    %v1606 = vsel %vm1123, %v1595, 0
    %1608 = vmatpush.msra.mxu0 0.0
    %1609 = vmatpush.msra.mxu0 0.0
    %1610 = vmatpush.msra.mxu0 0.0
    %1611 = vmatpush.msra.mxu0 0.0
    %1612 = vmatpush.msra.mxu0 0.0
    %1613 = vmatpush.msra.mxu0 0.0
    %1614 = vmatpush.msra.mxu0 0.0
    %1615 = vmatpush.msra.mxu0 0.0
    %1616 = vmatpush.msra.mxu0 0.0
    %1617 = vmatpush.msra.mxu0 0.0
    %1618 = vmatpush.msra.mxu0 0.0
    %1619 = vmatpush.msra.mxu0 0.0
    %1620 = vmatpush.msra.mxu0 0.0
    %1621 = vmatpush.msra.mxu0 0.0
    %1622 = vmatpush.msra.mxu0 0.0
    %1623 = vmatpush.msra.mxu0 %v1597
    %1624 = vmatmul.f32.gmra.mxu0 %v1478
    %v1625 = vpop.f32.mrf.mxu0
    %v1626 = vadd.f32 0.0, %v1625
    %1627 = vdwg.mxu0
    %1628 = vmatpush.msra.mxu0 0.0
    %1629 = vmatpush.msra.mxu0 0.0
    %1630 = vmatpush.msra.mxu0 0.0
    %1631 = vmatpush.msra.mxu0 0.0
    %1632 = vmatpush.msra.mxu0 0.0
    %1633 = vmatpush.msra.mxu0 0.0
    %1634 = vmatpush.msra.mxu0 0.0
    %1635 = vmatpush.msra.mxu0 0.0
    %1636 = vmatpush.msra.mxu0 0.0
    %1637 = vmatpush.msra.mxu0 0.0
    %1638 = vmatpush.msra.mxu0 0.0
    %1639 = vmatpush.msra.mxu0 0.0
    %1640 = vmatpush.msra.mxu0 0.0
    %1641 = vmatpush.msra.mxu0 0.0
    %1642 = vmatpush.msra.mxu0 0.0
    %1643 = vmatpush.msra.mxu0 %v1600
    %1644 = vmatmul.f32.gmra.mxu0 %v1478
    %v1645 = vpop.f32.mrf.mxu0
    %v1646 = vadd.f32 0.0, %v1645
    %1647 = vdwg.mxu0
    %1648 = vmatpush.msra.mxu0 0.0
    %1649 = vmatpush.msra.mxu0 0.0
    %1650 = vmatpush.msra.mxu0 0.0
    %1651 = vmatpush.msra.mxu0 0.0
    %1652 = vmatpush.msra.mxu0 0.0
    %1653 = vmatpush.msra.mxu0 0.0
    %1654 = vmatpush.msra.mxu0 0.0
    %1655 = vmatpush.msra.mxu0 0.0
    %1656 = vmatpush.msra.mxu0 0.0
    %1657 = vmatpush.msra.mxu0 0.0
    %1658 = vmatpush.msra.mxu0 0.0
    %1659 = vmatpush.msra.mxu0 0.0
    %1660 = vmatpush.msra.mxu0 0.0
    %1661 = vmatpush.msra.mxu0 0.0
    %1662 = vmatpush.msra.mxu0 0.0
    %1663 = vmatpush.msra.mxu0 %v1603
    %1664 = vmatmul.f32.gmra.mxu0 %v1478
    %v1665 = vpop.f32.mrf.mxu0
    %v1666 = vadd.f32 0.0, %v1665
    %1667 = vdwg.mxu0
    %1668 = vmatpush.msra.mxu0 0.0
    %1669 = vmatpush.msra.mxu0 0.0
    %1670 = vmatpush.msra.mxu0 0.0
    %1671 = vmatpush.msra.mxu0 0.0
    %1672 = vmatpush.msra.mxu0 0.0
    %1673 = vmatpush.msra.mxu0 0.0
    %1674 = vmatpush.msra.mxu0 0.0
    %1675 = vmatpush.msra.mxu0 0.0
    %1676 = vmatpush.msra.mxu0 0.0
    %1677 = vmatpush.msra.mxu0 0.0
    %1678 = vmatpush.msra.mxu0 0.0
    %1679 = vmatpush.msra.mxu0 0.0
    %1680 = vmatpush.msra.mxu0 0.0
    %1681 = vmatpush.msra.mxu0 0.0
    %1682 = vmatpush.msra.mxu0 0.0
    %1683 = vmatpush.msra.mxu0 %v1606
    %1684 = vmatmul.f32.gmra.mxu0 %v1478
    %v1685 = vpop.f32.mrf.mxu0
    %v1686 = vadd.f32 0.0, %v1685
    %1687 = vdwg.mxu0
    %v1688 = vmul.f32 %v1626, %v1591
    %v1689 = vmul.f32 %v1646, %v1590
    %v1690 = vmul.f32 %v1666, %v1589
    %v1691 = vmul.f32 %v1686, %v1588
    %v1692 = vadd.f32 %v1576, %v1688
    %v1693 = vadd.f32 %v1577, %v1689
    %v1694 = vadd.f32 %v1578, %v1690
    %v1695 = vadd.f32 %v1579, %v1691
    %1696 = vrot.lane.b32.xlu0 %v129, 15
    %v1697 = vpop.permute.xlu0 %1696
    %1698 = vrot.lane.b32.xlu0 %v147, 15
    %v1699 = vpop.permute.xlu0 %1698
    %1700 = vrot.lane.b32.xlu0 %v165, 15
    %v1701 = vpop.permute.xlu0 %1700
    %1702 = vrot.lane.b32.xlu0 %v183, 15
    %v1703 = vpop.permute.xlu0 %1702
    %v1704 = vsel %vm409, %v1701, %v1703
    %v1705 = vsel %vm409, %v1699, %v1701
    %v1706 = vsel %vm409, %v1697, %v1699
    %v1707 = vsel %vm409, %v1703, %v1697
    %v1708 = vmul.f32 %v1432, %v498
    %v1709 = vmul.f32 %v1433, %v499
    %v1710 = vmul.f32 %v1434, %v500
    %v1711 = vmul.f32 %v1435, %v501
    %v1713 = vsel %vm1123, %v1708, 0
    %v1716 = vsel %vm1123, %v1709, 0
    %v1719 = vsel %vm1123, %v1710, 0
    %v1722 = vsel %vm1123, %v1711, 0
    %1724 = vmatpush.msra.mxu0 0.0
    %1725 = vmatpush.msra.mxu0 0.0
    %1726 = vmatpush.msra.mxu0 0.0
    %1727 = vmatpush.msra.mxu0 0.0
    %1728 = vmatpush.msra.mxu0 0.0
    %1729 = vmatpush.msra.mxu0 0.0
    %1730 = vmatpush.msra.mxu0 0.0
    %1731 = vmatpush.msra.mxu0 0.0
    %1732 = vmatpush.msra.mxu0 0.0
    %1733 = vmatpush.msra.mxu0 0.0
    %1734 = vmatpush.msra.mxu0 0.0
    %1735 = vmatpush.msra.mxu0 0.0
    %1736 = vmatpush.msra.mxu0 0.0
    %1737 = vmatpush.msra.mxu0 0.0
    %1738 = vmatpush.msra.mxu0 0.0
    %1739 = vmatpush.msra.mxu0 %v1713
    %1740 = vmatmul.f32.gmra.mxu0 %v1478
    %v1741 = vpop.f32.mrf.mxu0
    %v1742 = vadd.f32 0.0, %v1741
    %1743 = vdwg.mxu0
    %1744 = vmatpush.msra.mxu0 0.0
    %1745 = vmatpush.msra.mxu0 0.0
    %1746 = vmatpush.msra.mxu0 0.0
    %1747 = vmatpush.msra.mxu0 0.0
    %1748 = vmatpush.msra.mxu0 0.0
    %1749 = vmatpush.msra.mxu0 0.0
    %1750 = vmatpush.msra.mxu0 0.0
    %1751 = vmatpush.msra.mxu0 0.0
    %1752 = vmatpush.msra.mxu0 0.0
    %1753 = vmatpush.msra.mxu0 0.0
    %1754 = vmatpush.msra.mxu0 0.0
    %1755 = vmatpush.msra.mxu0 0.0
    %1756 = vmatpush.msra.mxu0 0.0
    %1757 = vmatpush.msra.mxu0 0.0
    %1758 = vmatpush.msra.mxu0 0.0
    %1759 = vmatpush.msra.mxu0 %v1716
    %1760 = vmatmul.f32.gmra.mxu0 %v1478
    %v1761 = vpop.f32.mrf.mxu0
    %v1762 = vadd.f32 0.0, %v1761
    %1763 = vdwg.mxu0
    %1764 = vmatpush.msra.mxu0 0.0
    %1765 = vmatpush.msra.mxu0 0.0
    %1766 = vmatpush.msra.mxu0 0.0
    %1767 = vmatpush.msra.mxu0 0.0
    %1768 = vmatpush.msra.mxu0 0.0
    %1769 = vmatpush.msra.mxu0 0.0
    %1770 = vmatpush.msra.mxu0 0.0
    %1771 = vmatpush.msra.mxu0 0.0
    %1772 = vmatpush.msra.mxu0 0.0
    %1773 = vmatpush.msra.mxu0 0.0
    %1774 = vmatpush.msra.mxu0 0.0
    %1775 = vmatpush.msra.mxu0 0.0
    %1776 = vmatpush.msra.mxu0 0.0
    %1777 = vmatpush.msra.mxu0 0.0
    %1778 = vmatpush.msra.mxu0 0.0
    %1779 = vmatpush.msra.mxu0 %v1719
    %1780 = vmatmul.f32.gmra.mxu0 %v1478
    %v1781 = vpop.f32.mrf.mxu0
    %v1782 = vadd.f32 0.0, %v1781
    %1783 = vdwg.mxu0
    %1784 = vmatpush.msra.mxu0 0.0
    %1785 = vmatpush.msra.mxu0 0.0
    %1786 = vmatpush.msra.mxu0 0.0
    %1787 = vmatpush.msra.mxu0 0.0
    %1788 = vmatpush.msra.mxu0 0.0
    %1789 = vmatpush.msra.mxu0 0.0
    %1790 = vmatpush.msra.mxu0 0.0
    %1791 = vmatpush.msra.mxu0 0.0
    %1792 = vmatpush.msra.mxu0 0.0
    %1793 = vmatpush.msra.mxu0 0.0
    %1794 = vmatpush.msra.mxu0 0.0
    %1795 = vmatpush.msra.mxu0 0.0
    %1796 = vmatpush.msra.mxu0 0.0
    %1797 = vmatpush.msra.mxu0 0.0
    %1798 = vmatpush.msra.mxu0 0.0
    %1799 = vmatpush.msra.mxu0 %v1722
    %1800 = vmatmul.f32.gmra.mxu0 %v1478
    %v1801 = vpop.f32.mrf.mxu0
    %v1802 = vadd.f32 0.0, %v1801
    %1803 = vdwg.mxu0
    %v1804 = vmul.f32 %v1742, %v1707
    %v1805 = vmul.f32 %v1762, %v1706
    %v1806 = vmul.f32 %v1782, %v1705
    %v1807 = vmul.f32 %v1802, %v1704
    %v1808 = vadd.f32 %v1692, %v1804
    %v1809 = vadd.f32 %v1693, %v1805
    %v1810 = vadd.f32 %v1694, %v1806
    %v1811 = vadd.f32 %v1695, %v1807
    %1812 = vrot.lane.b32.xlu0 %v129, 1
    %v1813 = vpop.permute.xlu0 %1812
    %1814 = vrot.lane.b32.xlu0 %v147, 1
    %v1815 = vpop.permute.xlu0 %1814
    %1816 = vrot.lane.b32.xlu0 %v165, 1
    %v1817 = vpop.permute.xlu0 %1816
    %1818 = vrot.lane.b32.xlu0 %v183, 1
    %v1819 = vpop.permute.xlu0 %1818
    %v1820 = vsel %vm514, %v1817, %v1819
    %v1821 = vsel %vm514, %v1815, %v1817
    %v1822 = vsel %vm514, %v1813, %v1815
    %v1823 = vsel %vm514, %v1819, %v1813
    %v1824 = vmul.f32 %v1436, %v603
    %v1825 = vmul.f32 %v1437, %v604
    %v1826 = vmul.f32 %v1438, %v605
    %v1827 = vmul.f32 %v1439, %v606
    %v1829 = vsel %vm1123, %v1824, 0
    %v1832 = vsel %vm1123, %v1825, 0
    %v1835 = vsel %vm1123, %v1826, 0
    %v1838 = vsel %vm1123, %v1827, 0
    %1840 = vmatpush.msra.mxu0 0.0
    %1841 = vmatpush.msra.mxu0 0.0
    %1842 = vmatpush.msra.mxu0 0.0
    %1843 = vmatpush.msra.mxu0 0.0
    %1844 = vmatpush.msra.mxu0 0.0
    %1845 = vmatpush.msra.mxu0 0.0
    %1846 = vmatpush.msra.mxu0 0.0
    %1847 = vmatpush.msra.mxu0 0.0
    %1848 = vmatpush.msra.mxu0 0.0
    %1849 = vmatpush.msra.mxu0 0.0
    %1850 = vmatpush.msra.mxu0 0.0
    %1851 = vmatpush.msra.mxu0 0.0
    %1852 = vmatpush.msra.mxu0 0.0
    %1853 = vmatpush.msra.mxu0 0.0
    %1854 = vmatpush.msra.mxu0 0.0
    %1855 = vmatpush.msra.mxu0 %v1829
    %1856 = vmatmul.f32.gmra.mxu0 %v1478
    %v1857 = vpop.f32.mrf.mxu0
    %v1858 = vadd.f32 0.0, %v1857
    %1859 = vdwg.mxu0
    %1860 = vmatpush.msra.mxu0 0.0
    %1861 = vmatpush.msra.mxu0 0.0
    %1862 = vmatpush.msra.mxu0 0.0
    %1863 = vmatpush.msra.mxu0 0.0
    %1864 = vmatpush.msra.mxu0 0.0
    %1865 = vmatpush.msra.mxu0 0.0
    %1866 = vmatpush.msra.mxu0 0.0
    %1867 = vmatpush.msra.mxu0 0.0
    %1868 = vmatpush.msra.mxu0 0.0
    %1869 = vmatpush.msra.mxu0 0.0
    %1870 = vmatpush.msra.mxu0 0.0
    %1871 = vmatpush.msra.mxu0 0.0
    %1872 = vmatpush.msra.mxu0 0.0
    %1873 = vmatpush.msra.mxu0 0.0
    %1874 = vmatpush.msra.mxu0 0.0
    %1875 = vmatpush.msra.mxu0 %v1832
    %1876 = vmatmul.f32.gmra.mxu0 %v1478
    %v1877 = vpop.f32.mrf.mxu0
    %v1878 = vadd.f32 0.0, %v1877
    %1879 = vdwg.mxu0
    %1880 = vmatpush.msra.mxu0 0.0
    %1881 = vmatpush.msra.mxu0 0.0
    %1882 = vmatpush.msra.mxu0 0.0
    %1883 = vmatpush.msra.mxu0 0.0
    %1884 = vmatpush.msra.mxu0 0.0
    %1885 = vmatpush.msra.mxu0 0.0
    %1886 = vmatpush.msra.mxu0 0.0
    %1887 = vmatpush.msra.mxu0 0.0
    %1888 = vmatpush.msra.mxu0 0.0
    %1889 = vmatpush.msra.mxu0 0.0
    %1890 = vmatpush.msra.mxu0 0.0
    %1891 = vmatpush.msra.mxu0 0.0
    %1892 = vmatpush.msra.mxu0 0.0
    %1893 = vmatpush.msra.mxu0 0.0
    %1894 = vmatpush.msra.mxu0 0.0
    %1895 = vmatpush.msra.mxu0 %v1835
    %1896 = vmatmul.f32.gmra.mxu0 %v1478
    %v1897 = vpop.f32.mrf.mxu0
    %v1898 = vadd.f32 0.0, %v1897
    %1899 = vdwg.mxu0
    %1900 = vmatpush.msra.mxu0 0.0
    %1901 = vmatpush.msra.mxu0 0.0
    %1902 = vmatpush.msra.mxu0 0.0
    %1903 = vmatpush.msra.mxu0 0.0
    %1904 = vmatpush.msra.mxu0 0.0
    %1905 = vmatpush.msra.mxu0 0.0
    %1906 = vmatpush.msra.mxu0 0.0
    %1907 = vmatpush.msra.mxu0 0.0
    %1908 = vmatpush.msra.mxu0 0.0
    %1909 = vmatpush.msra.mxu0 0.0
    %1910 = vmatpush.msra.mxu0 0.0
    %1911 = vmatpush.msra.mxu0 0.0
    %1912 = vmatpush.msra.mxu0 0.0
    %1913 = vmatpush.msra.mxu0 0.0
    %1914 = vmatpush.msra.mxu0 0.0
    %1915 = vmatpush.msra.mxu0 %v1838
    %1916 = vmatmul.f32.gmra.mxu0 %v1478
    %v1917 = vpop.f32.mrf.mxu0
    %v1918 = vadd.f32 0.0, %v1917
    %1919 = vdwg.mxu0
    %v1920 = vmul.f32 %v1858, %v1823
    %v1921 = vmul.f32 %v1878, %v1822
    %v1922 = vmul.f32 %v1898, %v1821
    %v1923 = vmul.f32 %v1918, %v1820
    %v1924 = vadd.f32 %v1808, %v1920
    %v1925 = vadd.f32 %v1809, %v1921
    %v1926 = vadd.f32 %v1810, %v1922
    %v1927 = vadd.f32 %v1811, %v1923
    %v1928 = vmul.f32 %v1440, %v695
    %v1929 = vmul.f32 %v1441, %v696
    %v1930 = vmul.f32 %v1442, %v697
    %v1931 = vmul.f32 %v1443, %v698
    %v1933 = vsel %vm1123, %v1928, 0
    %v1936 = vsel %vm1123, %v1929, 0
    %v1939 = vsel %vm1123, %v1930, 0
    %v1942 = vsel %vm1123, %v1931, 0
    %1944 = vmatpush.msra.mxu0 0.0
    %1945 = vmatpush.msra.mxu0 0.0
    %1946 = vmatpush.msra.mxu0 0.0
    %1947 = vmatpush.msra.mxu0 0.0
    %1948 = vmatpush.msra.mxu0 0.0
    %1949 = vmatpush.msra.mxu0 0.0
    %1950 = vmatpush.msra.mxu0 0.0
    %1951 = vmatpush.msra.mxu0 0.0
    %1952 = vmatpush.msra.mxu0 0.0
    %1953 = vmatpush.msra.mxu0 0.0
    %1954 = vmatpush.msra.mxu0 0.0
    %1955 = vmatpush.msra.mxu0 0.0
    %1956 = vmatpush.msra.mxu0 0.0
    %1957 = vmatpush.msra.mxu0 0.0
    %1958 = vmatpush.msra.mxu0 0.0
    %1959 = vmatpush.msra.mxu0 %v1933
    %1960 = vmatmul.f32.gmra.mxu0 %v1478
    %v1961 = vpop.f32.mrf.mxu0
    %v1962 = vadd.f32 0.0, %v1961
    %1963 = vdwg.mxu0
    %1964 = vmatpush.msra.mxu0 0.0
    %1965 = vmatpush.msra.mxu0 0.0
    %1966 = vmatpush.msra.mxu0 0.0
    %1967 = vmatpush.msra.mxu0 0.0
    %1968 = vmatpush.msra.mxu0 0.0
    %1969 = vmatpush.msra.mxu0 0.0
    %1970 = vmatpush.msra.mxu0 0.0
    %1971 = vmatpush.msra.mxu0 0.0
    %1972 = vmatpush.msra.mxu0 0.0
    %1973 = vmatpush.msra.mxu0 0.0
    %1974 = vmatpush.msra.mxu0 0.0
    %1975 = vmatpush.msra.mxu0 0.0
    %1976 = vmatpush.msra.mxu0 0.0
    %1977 = vmatpush.msra.mxu0 0.0
    %1978 = vmatpush.msra.mxu0 0.0
    %1979 = vmatpush.msra.mxu0 %v1936
    %1980 = vmatmul.f32.gmra.mxu0 %v1478
    %v1981 = vpop.f32.mrf.mxu0
    %v1982 = vadd.f32 0.0, %v1981
    %1983 = vdwg.mxu0
    %1984 = vmatpush.msra.mxu0 0.0
    %1985 = vmatpush.msra.mxu0 0.0
    %1986 = vmatpush.msra.mxu0 0.0
    %1987 = vmatpush.msra.mxu0 0.0
    %1988 = vmatpush.msra.mxu0 0.0
    %1989 = vmatpush.msra.mxu0 0.0
    %1990 = vmatpush.msra.mxu0 0.0
    %1991 = vmatpush.msra.mxu0 0.0
    %1992 = vmatpush.msra.mxu0 0.0
    %1993 = vmatpush.msra.mxu0 0.0
    %1994 = vmatpush.msra.mxu0 0.0
    %1995 = vmatpush.msra.mxu0 0.0
    %1996 = vmatpush.msra.mxu0 0.0
    %1997 = vmatpush.msra.mxu0 0.0
    %1998 = vmatpush.msra.mxu0 0.0
    %1999 = vmatpush.msra.mxu0 %v1939
    %2000 = vmatmul.f32.gmra.mxu0 %v1478
    %v2001 = vpop.f32.mrf.mxu0
    %v2002 = vadd.f32 0.0, %v2001
    %2003 = vdwg.mxu0
    %2004 = vmatpush.msra.mxu0 0.0
    %2005 = vmatpush.msra.mxu0 0.0
    %2006 = vmatpush.msra.mxu0 0.0
    %2007 = vmatpush.msra.mxu0 0.0
    %2008 = vmatpush.msra.mxu0 0.0
    %2009 = vmatpush.msra.mxu0 0.0
    %2010 = vmatpush.msra.mxu0 0.0
    %2011 = vmatpush.msra.mxu0 0.0
    %2012 = vmatpush.msra.mxu0 0.0
    %2013 = vmatpush.msra.mxu0 0.0
    %2014 = vmatpush.msra.mxu0 0.0
    %2015 = vmatpush.msra.mxu0 0.0
    %2016 = vmatpush.msra.mxu0 0.0
    %2017 = vmatpush.msra.mxu0 0.0
    %2018 = vmatpush.msra.mxu0 0.0
    %2019 = vmatpush.msra.mxu0 %v1942
    %2020 = vmatmul.f32.gmra.mxu0 %v1478
    %v2021 = vpop.f32.mrf.mxu0
    %v2022 = vadd.f32 0.0, %v2021
    %2023 = vdwg.mxu0
    %v2024 = vmul.f32 %v1962, %v129
    %v2025 = vmul.f32 %v1982, %v147
    %v2026 = vmul.f32 %v2002, %v165
    %v2027 = vmul.f32 %v2022, %v183
    %v2028 = vadd.f32 %v1924, %v2024
    %v2029 = vadd.f32 %v1925, %v2025
    %v2030 = vadd.f32 %v1926, %v2026
    %v2031 = vadd.f32 %v1927, %v2027
    %2032 = vrot.lane.b32.xlu0 %v129, 127
    %v2033 = vpop.permute.xlu0 %2032
    %2034 = vrot.lane.b32.xlu0 %v147, 127
    %v2035 = vpop.permute.xlu0 %2034
    %2036 = vrot.lane.b32.xlu0 %v165, 127
    %v2037 = vpop.permute.xlu0 %2036
    %2038 = vrot.lane.b32.xlu0 %v183, 127
    %v2039 = vpop.permute.xlu0 %2038
    %v2040 = vsel %vm711, %v2037, %v2039
    %v2041 = vsel %vm711, %v2035, %v2037
    %v2042 = vsel %vm711, %v2033, %v2035
    %v2043 = vsel %vm711, %v2039, %v2033
    %v2044 = vmul.f32 %v1444, %v800
    %v2045 = vmul.f32 %v1445, %v801
    %v2046 = vmul.f32 %v1446, %v802
    %v2047 = vmul.f32 %v1447, %v803
    %v2049 = vsel %vm1123, %v2044, 0
    %v2052 = vsel %vm1123, %v2045, 0
    %v2055 = vsel %vm1123, %v2046, 0
    %v2058 = vsel %vm1123, %v2047, 0
    %2060 = vmatpush.msra.mxu0 0.0
    %2061 = vmatpush.msra.mxu0 0.0
    %2062 = vmatpush.msra.mxu0 0.0
    %2063 = vmatpush.msra.mxu0 0.0
    %2064 = vmatpush.msra.mxu0 0.0
    %2065 = vmatpush.msra.mxu0 0.0
    %2066 = vmatpush.msra.mxu0 0.0
    %2067 = vmatpush.msra.mxu0 0.0
    %2068 = vmatpush.msra.mxu0 0.0
    %2069 = vmatpush.msra.mxu0 0.0
    %2070 = vmatpush.msra.mxu0 0.0
    %2071 = vmatpush.msra.mxu0 0.0
    %2072 = vmatpush.msra.mxu0 0.0
    %2073 = vmatpush.msra.mxu0 0.0
    %2074 = vmatpush.msra.mxu0 0.0
    %2075 = vmatpush.msra.mxu0 %v2049
    %2076 = vmatmul.f32.gmra.mxu0 %v1478
    %v2077 = vpop.f32.mrf.mxu0
    %v2078 = vadd.f32 0.0, %v2077
    %2079 = vdwg.mxu0
    %2080 = vmatpush.msra.mxu0 0.0
    %2081 = vmatpush.msra.mxu0 0.0
    %2082 = vmatpush.msra.mxu0 0.0
    %2083 = vmatpush.msra.mxu0 0.0
    %2084 = vmatpush.msra.mxu0 0.0
    %2085 = vmatpush.msra.mxu0 0.0
    %2086 = vmatpush.msra.mxu0 0.0
    %2087 = vmatpush.msra.mxu0 0.0
    %2088 = vmatpush.msra.mxu0 0.0
    %2089 = vmatpush.msra.mxu0 0.0
    %2090 = vmatpush.msra.mxu0 0.0
    %2091 = vmatpush.msra.mxu0 0.0
    %2092 = vmatpush.msra.mxu0 0.0
    %2093 = vmatpush.msra.mxu0 0.0
    %2094 = vmatpush.msra.mxu0 0.0
    %2095 = vmatpush.msra.mxu0 %v2052
    %2096 = vmatmul.f32.gmra.mxu0 %v1478
    %v2097 = vpop.f32.mrf.mxu0
    %v2098 = vadd.f32 0.0, %v2097
    %2099 = vdwg.mxu0
    %2100 = vmatpush.msra.mxu0 0.0
    %2101 = vmatpush.msra.mxu0 0.0
    %2102 = vmatpush.msra.mxu0 0.0
    %2103 = vmatpush.msra.mxu0 0.0
    %2104 = vmatpush.msra.mxu0 0.0
    %2105 = vmatpush.msra.mxu0 0.0
    %2106 = vmatpush.msra.mxu0 0.0
    %2107 = vmatpush.msra.mxu0 0.0
    %2108 = vmatpush.msra.mxu0 0.0
    %2109 = vmatpush.msra.mxu0 0.0
    %2110 = vmatpush.msra.mxu0 0.0
    %2111 = vmatpush.msra.mxu0 0.0
    %2112 = vmatpush.msra.mxu0 0.0
    %2113 = vmatpush.msra.mxu0 0.0
    %2114 = vmatpush.msra.mxu0 0.0
    %2115 = vmatpush.msra.mxu0 %v2055
    %2116 = vmatmul.f32.gmra.mxu0 %v1478
    %v2117 = vpop.f32.mrf.mxu0
    %v2118 = vadd.f32 0.0, %v2117
    %2119 = vdwg.mxu0
    %2120 = vmatpush.msra.mxu0 0.0
    %2121 = vmatpush.msra.mxu0 0.0
    %2122 = vmatpush.msra.mxu0 0.0
    %2123 = vmatpush.msra.mxu0 0.0
    %2124 = vmatpush.msra.mxu0 0.0
    %2125 = vmatpush.msra.mxu0 0.0
    %2126 = vmatpush.msra.mxu0 0.0
    %2127 = vmatpush.msra.mxu0 0.0
    %2128 = vmatpush.msra.mxu0 0.0
    %2129 = vmatpush.msra.mxu0 0.0
    %2130 = vmatpush.msra.mxu0 0.0
    %2131 = vmatpush.msra.mxu0 0.0
    %2132 = vmatpush.msra.mxu0 0.0
    %2133 = vmatpush.msra.mxu0 0.0
    %2134 = vmatpush.msra.mxu0 0.0
    %2135 = vmatpush.msra.mxu0 %v2058
    %2136 = vmatmul.f32.gmra.mxu0 %v1478
    %v2137 = vpop.f32.mrf.mxu0
    %v2138 = vadd.f32 0.0, %v2137
    %2139 = vdwg.mxu0
    %v2140 = vmul.f32 %v2078, %v2042
    %v2141 = vmul.f32 %v2098, %v2041
    %v2142 = vmul.f32 %v2118, %v2040
    %v2143 = vmul.f32 %v2138, %v2043
    %v2144 = vadd.f32 %v2028, %v2140
    %v2145 = vadd.f32 %v2029, %v2141
    %v2146 = vadd.f32 %v2030, %v2142
    %v2147 = vadd.f32 %v2031, %v2143
    %2148 = vrot.lane.b32.xlu0 %v129, 113
    %v2149 = vpop.permute.xlu0 %2148
    %2150 = vrot.lane.b32.xlu0 %v147, 113
    %v2151 = vpop.permute.xlu0 %2150
    %2152 = vrot.lane.b32.xlu0 %v165, 113
    %v2153 = vpop.permute.xlu0 %2152
    %2154 = vrot.lane.b32.xlu0 %v183, 113
    %v2155 = vpop.permute.xlu0 %2154
    %v2156 = vsel %vm816, %v2153, %v2155
    %v2157 = vsel %vm816, %v2151, %v2153
    %v2158 = vsel %vm816, %v2149, %v2151
    %v2159 = vsel %vm816, %v2155, %v2149
    %v2160 = vmul.f32 %v1448, %v905
    %v2161 = vmul.f32 %v1449, %v906
    %v2162 = vmul.f32 %v1450, %v907
    %v2163 = vmul.f32 %v1451, %v908
    %v2165 = vsel %vm1123, %v2160, 0
    %v2168 = vsel %vm1123, %v2161, 0
    %v2171 = vsel %vm1123, %v2162, 0
    %v2174 = vsel %vm1123, %v2163, 0
    %2176 = vmatpush.msra.mxu0 0.0
    %2177 = vmatpush.msra.mxu0 0.0
    %2178 = vmatpush.msra.mxu0 0.0
    %2179 = vmatpush.msra.mxu0 0.0
    %2180 = vmatpush.msra.mxu0 0.0
    %2181 = vmatpush.msra.mxu0 0.0
    %2182 = vmatpush.msra.mxu0 0.0
    %2183 = vmatpush.msra.mxu0 0.0
    %2184 = vmatpush.msra.mxu0 0.0
    %2185 = vmatpush.msra.mxu0 0.0
    %2186 = vmatpush.msra.mxu0 0.0
    %2187 = vmatpush.msra.mxu0 0.0
    %2188 = vmatpush.msra.mxu0 0.0
    %2189 = vmatpush.msra.mxu0 0.0
    %2190 = vmatpush.msra.mxu0 0.0
    %2191 = vmatpush.msra.mxu0 %v2165
    %2192 = vmatmul.f32.gmra.mxu0 %v1478
    %v2193 = vpop.f32.mrf.mxu0
    %v2194 = vadd.f32 0.0, %v2193
    %2195 = vdwg.mxu0
    %2196 = vmatpush.msra.mxu0 0.0
    %2197 = vmatpush.msra.mxu0 0.0
    %2198 = vmatpush.msra.mxu0 0.0
    %2199 = vmatpush.msra.mxu0 0.0
    %2200 = vmatpush.msra.mxu0 0.0
    %2201 = vmatpush.msra.mxu0 0.0
    %2202 = vmatpush.msra.mxu0 0.0
    %2203 = vmatpush.msra.mxu0 0.0
    %2204 = vmatpush.msra.mxu0 0.0
    %2205 = vmatpush.msra.mxu0 0.0
    %2206 = vmatpush.msra.mxu0 0.0
    %2207 = vmatpush.msra.mxu0 0.0
    %2208 = vmatpush.msra.mxu0 0.0
    %2209 = vmatpush.msra.mxu0 0.0
    %2210 = vmatpush.msra.mxu0 0.0
    %2211 = vmatpush.msra.mxu0 %v2168
    %2212 = vmatmul.f32.gmra.mxu0 %v1478
    %v2213 = vpop.f32.mrf.mxu0
    %v2214 = vadd.f32 0.0, %v2213
    %2215 = vdwg.mxu0
    %2216 = vmatpush.msra.mxu0 0.0
    %2217 = vmatpush.msra.mxu0 0.0
    %2218 = vmatpush.msra.mxu0 0.0
    %2219 = vmatpush.msra.mxu0 0.0
    %2220 = vmatpush.msra.mxu0 0.0
    %2221 = vmatpush.msra.mxu0 0.0
    %2222 = vmatpush.msra.mxu0 0.0
    %2223 = vmatpush.msra.mxu0 0.0
    %2224 = vmatpush.msra.mxu0 0.0
    %2225 = vmatpush.msra.mxu0 0.0
    %2226 = vmatpush.msra.mxu0 0.0
    %2227 = vmatpush.msra.mxu0 0.0
    %2228 = vmatpush.msra.mxu0 0.0
    %2229 = vmatpush.msra.mxu0 0.0
    %2230 = vmatpush.msra.mxu0 0.0
    %2231 = vmatpush.msra.mxu0 %v2171
    %2232 = vmatmul.f32.gmra.mxu0 %v1478
    %v2233 = vpop.f32.mrf.mxu0
    %v2234 = vadd.f32 0.0, %v2233
    %2235 = vdwg.mxu0
    %2236 = vmatpush.msra.mxu0 0.0
    %2237 = vmatpush.msra.mxu0 0.0
    %2238 = vmatpush.msra.mxu0 0.0
    %2239 = vmatpush.msra.mxu0 0.0
    %2240 = vmatpush.msra.mxu0 0.0
    %2241 = vmatpush.msra.mxu0 0.0
    %2242 = vmatpush.msra.mxu0 0.0
    %2243 = vmatpush.msra.mxu0 0.0
    %2244 = vmatpush.msra.mxu0 0.0
    %2245 = vmatpush.msra.mxu0 0.0
    %2246 = vmatpush.msra.mxu0 0.0
    %2247 = vmatpush.msra.mxu0 0.0
    %2248 = vmatpush.msra.mxu0 0.0
    %2249 = vmatpush.msra.mxu0 0.0
    %2250 = vmatpush.msra.mxu0 0.0
    %2251 = vmatpush.msra.mxu0 %v2174
    %2252 = vmatmul.f32.gmra.mxu0 %v1478
    %v2253 = vpop.f32.mrf.mxu0
    %v2254 = vadd.f32 0.0, %v2253
    %2255 = vdwg.mxu0
    %v2256 = vmul.f32 %v2194, %v2158
    %v2257 = vmul.f32 %v2214, %v2157
    %v2258 = vmul.f32 %v2234, %v2156
    %v2259 = vmul.f32 %v2254, %v2159
    %v2260 = vadd.f32 %v2144, %v2256
    %v2261 = vadd.f32 %v2145, %v2257
    %v2262 = vadd.f32 %v2146, %v2258
    %v2263 = vadd.f32 %v2147, %v2259
    %2264 = vrot.lane.b32.xlu0 %v129, 112
    %v2265 = vpop.permute.xlu0 %2264
    %2266 = vrot.lane.b32.xlu0 %v147, 112
    %v2267 = vpop.permute.xlu0 %2266
    %2268 = vrot.lane.b32.xlu0 %v165, 112
    %v2269 = vpop.permute.xlu0 %2268
    %2270 = vrot.lane.b32.xlu0 %v183, 112
    %v2271 = vpop.permute.xlu0 %2270
    %v2272 = vsel %vm921, %v2269, %v2271
    %v2273 = vsel %vm921, %v2267, %v2269
    %v2274 = vsel %vm921, %v2265, %v2267
    %v2275 = vsel %vm921, %v2271, %v2265
    %v2276 = vmul.f32 %v1452, %v1010
    %v2277 = vmul.f32 %v1453, %v1011
    %v2278 = vmul.f32 %v1454, %v1012
    %v2279 = vmul.f32 %v1455, %v1013
    %v2281 = vsel %vm1123, %v2276, 0
    %v2284 = vsel %vm1123, %v2277, 0
    %v2287 = vsel %vm1123, %v2278, 0
    %v2290 = vsel %vm1123, %v2279, 0
    %2292 = vmatpush.msra.mxu0 0.0
    %2293 = vmatpush.msra.mxu0 0.0
    %2294 = vmatpush.msra.mxu0 0.0
    %2295 = vmatpush.msra.mxu0 0.0
    %2296 = vmatpush.msra.mxu0 0.0
    %2297 = vmatpush.msra.mxu0 0.0
    %2298 = vmatpush.msra.mxu0 0.0
    %2299 = vmatpush.msra.mxu0 0.0
    %2300 = vmatpush.msra.mxu0 0.0
    %2301 = vmatpush.msra.mxu0 0.0
    %2302 = vmatpush.msra.mxu0 0.0
    %2303 = vmatpush.msra.mxu0 0.0
    %2304 = vmatpush.msra.mxu0 0.0
    %2305 = vmatpush.msra.mxu0 0.0
    %2306 = vmatpush.msra.mxu0 0.0
    %2307 = vmatpush.msra.mxu0 %v2281
    %2308 = vmatmul.f32.gmra.mxu0 %v1478
    %v2309 = vpop.f32.mrf.mxu0
    %v2310 = vadd.f32 0.0, %v2309
    %2311 = vdwg.mxu0
    %2312 = vmatpush.msra.mxu0 0.0
    %2313 = vmatpush.msra.mxu0 0.0
    %2314 = vmatpush.msra.mxu0 0.0
    %2315 = vmatpush.msra.mxu0 0.0
    %2316 = vmatpush.msra.mxu0 0.0
    %2317 = vmatpush.msra.mxu0 0.0
    %2318 = vmatpush.msra.mxu0 0.0
    %2319 = vmatpush.msra.mxu0 0.0
    %2320 = vmatpush.msra.mxu0 0.0
    %2321 = vmatpush.msra.mxu0 0.0
    %2322 = vmatpush.msra.mxu0 0.0
    %2323 = vmatpush.msra.mxu0 0.0
    %2324 = vmatpush.msra.mxu0 0.0
    %2325 = vmatpush.msra.mxu0 0.0
    %2326 = vmatpush.msra.mxu0 0.0
    %2327 = vmatpush.msra.mxu0 %v2284
    %2328 = vmatmul.f32.gmra.mxu0 %v1478
    %v2329 = vpop.f32.mrf.mxu0
    %v2330 = vadd.f32 0.0, %v2329
    %2331 = vdwg.mxu0
    %2332 = vmatpush.msra.mxu0 0.0
    %2333 = vmatpush.msra.mxu0 0.0
    %2334 = vmatpush.msra.mxu0 0.0
    %2335 = vmatpush.msra.mxu0 0.0
    %2336 = vmatpush.msra.mxu0 0.0
    %2337 = vmatpush.msra.mxu0 0.0
    %2338 = vmatpush.msra.mxu0 0.0
    %2339 = vmatpush.msra.mxu0 0.0
    %2340 = vmatpush.msra.mxu0 0.0
    %2341 = vmatpush.msra.mxu0 0.0
    %2342 = vmatpush.msra.mxu0 0.0
    %2343 = vmatpush.msra.mxu0 0.0
    %2344 = vmatpush.msra.mxu0 0.0
    %2345 = vmatpush.msra.mxu0 0.0
    %2346 = vmatpush.msra.mxu0 0.0
    %2347 = vmatpush.msra.mxu0 %v2287
    %2348 = vmatmul.f32.gmra.mxu0 %v1478
    %v2349 = vpop.f32.mrf.mxu0
    %v2350 = vadd.f32 0.0, %v2349
    %2351 = vdwg.mxu0
    %2352 = vmatpush.msra.mxu0 0.0
    %2353 = vmatpush.msra.mxu0 0.0
    %2354 = vmatpush.msra.mxu0 0.0
    %2355 = vmatpush.msra.mxu0 0.0
    %2356 = vmatpush.msra.mxu0 0.0
    %2357 = vmatpush.msra.mxu0 0.0
    %2358 = vmatpush.msra.mxu0 0.0
    %2359 = vmatpush.msra.mxu0 0.0
    %2360 = vmatpush.msra.mxu0 0.0
    %2361 = vmatpush.msra.mxu0 0.0
    %2362 = vmatpush.msra.mxu0 0.0
    %2363 = vmatpush.msra.mxu0 0.0
    %2364 = vmatpush.msra.mxu0 0.0
    %2365 = vmatpush.msra.mxu0 0.0
    %2366 = vmatpush.msra.mxu0 0.0
    %2367 = vmatpush.msra.mxu0 %v2290
    %2368 = vmatmul.f32.gmra.mxu0 %v1478
    %v2369 = vpop.f32.mrf.mxu0
    %v2370 = vadd.f32 0.0, %v2369
    %2371 = vdwg.mxu0
    %v2372 = vmul.f32 %v2310, %v2274
    %v2373 = vmul.f32 %v2330, %v2273
    %v2374 = vmul.f32 %v2350, %v2272
    %v2375 = vmul.f32 %v2370, %v2275
    %v2376 = vadd.f32 %v2260, %v2372
    %v2377 = vadd.f32 %v2261, %v2373
    %v2378 = vadd.f32 %v2262, %v2374
    %v2379 = vadd.f32 %v2263, %v2375
    %2380 = vrot.lane.b32.xlu0 %v129, 111
    %v2381 = vpop.permute.xlu0 %2380
    %2382 = vrot.lane.b32.xlu0 %v147, 111
    %v2383 = vpop.permute.xlu0 %2382
    %2384 = vrot.lane.b32.xlu0 %v165, 111
    %v2385 = vpop.permute.xlu0 %2384
    %2386 = vrot.lane.b32.xlu0 %v183, 111
    %v2387 = vpop.permute.xlu0 %2386
    %v2388 = vsel %vm1026, %v2385, %v2387
    %v2389 = vsel %vm1026, %v2383, %v2385
    %v2390 = vsel %vm1026, %v2381, %v2383
    %v2391 = vsel %vm1026, %v2387, %v2381
    %v2392 = vmul.f32 %v1456, %v1115
    %v2393 = vmul.f32 %v1457, %v1116
    %v2394 = vmul.f32 %v1458, %v1117
    %v2395 = vmul.f32 %v1459, %v1118
    %v2397 = vsel %vm1123, %v2392, 0
    %v2400 = vsel %vm1123, %v2393, 0
    %v2403 = vsel %vm1123, %v2394, 0
    %v2406 = vsel %vm1123, %v2395, 0
    %2408 = vmatpush.msra.mxu0 0.0
    %2409 = vmatpush.msra.mxu0 0.0
    %2410 = vmatpush.msra.mxu0 0.0
    %2411 = vmatpush.msra.mxu0 0.0
    %2412 = vmatpush.msra.mxu0 0.0
    %2413 = vmatpush.msra.mxu0 0.0
    %2414 = vmatpush.msra.mxu0 0.0
    %2415 = vmatpush.msra.mxu0 0.0
    %2416 = vmatpush.msra.mxu0 0.0
    %2417 = vmatpush.msra.mxu0 0.0
    %2418 = vmatpush.msra.mxu0 0.0
    %2419 = vmatpush.msra.mxu0 0.0
    %2420 = vmatpush.msra.mxu0 0.0
    %2421 = vmatpush.msra.mxu0 0.0
    %2422 = vmatpush.msra.mxu0 0.0
    %2423 = vmatpush.msra.mxu0 %v2397
    %2424 = vmatmul.f32.gmra.mxu0 %v1478
    %v2425 = vpop.f32.mrf.mxu0
    %v2426 = vadd.f32 0.0, %v2425
    %2427 = vdwg.mxu0
    %2428 = vmatpush.msra.mxu0 0.0
    %2429 = vmatpush.msra.mxu0 0.0
    %2430 = vmatpush.msra.mxu0 0.0
    %2431 = vmatpush.msra.mxu0 0.0
    %2432 = vmatpush.msra.mxu0 0.0
    %2433 = vmatpush.msra.mxu0 0.0
    %2434 = vmatpush.msra.mxu0 0.0
    %2435 = vmatpush.msra.mxu0 0.0
    %2436 = vmatpush.msra.mxu0 0.0
    %2437 = vmatpush.msra.mxu0 0.0
    %2438 = vmatpush.msra.mxu0 0.0
    %2439 = vmatpush.msra.mxu0 0.0
    %2440 = vmatpush.msra.mxu0 0.0
    %2441 = vmatpush.msra.mxu0 0.0
    %2442 = vmatpush.msra.mxu0 0.0
    %2443 = vmatpush.msra.mxu0 %v2400
    %2444 = vmatmul.f32.gmra.mxu0 %v1478
    %v2445 = vpop.f32.mrf.mxu0
    %v2446 = vadd.f32 0.0, %v2445
    %2447 = vdwg.mxu0
    %2448 = vmatpush.msra.mxu0 0.0
    %2449 = vmatpush.msra.mxu0 0.0
    %2450 = vmatpush.msra.mxu0 0.0
    %2451 = vmatpush.msra.mxu0 0.0
    %2452 = vmatpush.msra.mxu0 0.0
    %2453 = vmatpush.msra.mxu0 0.0
    %2454 = vmatpush.msra.mxu0 0.0
    %2455 = vmatpush.msra.mxu0 0.0
    %2456 = vmatpush.msra.mxu0 0.0
    %2457 = vmatpush.msra.mxu0 0.0
    %2458 = vmatpush.msra.mxu0 0.0
    %2459 = vmatpush.msra.mxu0 0.0
    %2460 = vmatpush.msra.mxu0 0.0
    %2461 = vmatpush.msra.mxu0 0.0
    %2462 = vmatpush.msra.mxu0 0.0
    %2463 = vmatpush.msra.mxu0 %v2403
    %2464 = vmatmul.f32.gmra.mxu0 %v1478
    %v2465 = vpop.f32.mrf.mxu0
    %v2466 = vadd.f32 0.0, %v2465
    %2467 = vdwg.mxu0
    %2468 = vmatpush.msra.mxu0 0.0
    %2469 = vmatpush.msra.mxu0 0.0
    %2470 = vmatpush.msra.mxu0 0.0
    %2471 = vmatpush.msra.mxu0 0.0
    %2472 = vmatpush.msra.mxu0 0.0
    %2473 = vmatpush.msra.mxu0 0.0
    %2474 = vmatpush.msra.mxu0 0.0
    %2475 = vmatpush.msra.mxu0 0.0
    %2476 = vmatpush.msra.mxu0 0.0
    %2477 = vmatpush.msra.mxu0 0.0
    %2478 = vmatpush.msra.mxu0 0.0
    %2479 = vmatpush.msra.mxu0 0.0
    %2480 = vmatpush.msra.mxu0 0.0
    %2481 = vmatpush.msra.mxu0 0.0
    %2482 = vmatpush.msra.mxu0 0.0
    %2483 = vmatpush.msra.mxu0 %v2406
    %2484 = vmatmul.f32.gmra.mxu0 %v1478
    %v2485 = vpop.f32.mrf.mxu0
    %v2486 = vadd.f32 0.0, %v2485
    %2487 = vdwg.mxu0
    %v2488 = vmul.f32 %v2426, %v2390
    %v2489 = vmul.f32 %v2446, %v2389
    %v2490 = vmul.f32 %v2466, %v2388
    %v2491 = vmul.f32 %v2486, %v2391
    %v2492 = vadd.f32 %v2376, %v2488
    %v2493 = vadd.f32 %v2377, %v2489
    %v2494 = vadd.f32 %v2378, %v2490
    %v2495 = vadd.f32 %v2379, %v2491
    %v2496 = vpack.c.bf16 %v2492, %v2492
    %v2497 = vpack.c.bf16 %v2493, %v2493
    %v2498 = vpack.c.bf16 %v2494, %v2494
    %v2499 = vpack.c.bf16 %v2495, %v2495
    %2501 = vset.pattern.permute.xlu0 0
    %2502 = vperm.xlu0 %2501, %v68
    %v2503 = vpop.permute.xlu0 %2502
    %v2506 = vsel %vm94, %v67, 0
    %v2509 = vsel %vm101, %v2496, 0
    %v2512 = vsel %vm101, %v2497, 0
    %v2515 = vsel %vm101, %v2498, 0
    %v2518 = vsel %vm101, %v2499, 0
    %2520 = vmatpush.bf16.msra.mxu0 0
    %2521 = vmatpush.bf16.msra.mxu0 0
    %2522 = vmatpush.bf16.msra.mxu0 0
    %2523 = vmatpush.bf16.msra.mxu0 0
    %2524 = vmatpush.bf16.msra.mxu0 0
    %2525 = vmatpush.bf16.msra.mxu0 0
    %2526 = vmatpush.bf16.msra.mxu0 0
    %2527 = vmatpush.bf16.msra.mxu0 %v2509
    %2528 = vmatmul.bf16.gmra.mxu0 %v2506
    %v2529 = vpop.f32.mrf.mxu0
    %v2530 = vadd.f32 %v2503, %v2529
    %v2531 = vpop.f32.mrf.mxu0
    %2532 = vdwg.mxu0
    %2533 = vmatpush.bf16.msra.mxu0 0
    %2534 = vmatpush.bf16.msra.mxu0 0
    %2535 = vmatpush.bf16.msra.mxu0 0
    %2536 = vmatpush.bf16.msra.mxu0 0
    %2537 = vmatpush.bf16.msra.mxu0 0
    %2538 = vmatpush.bf16.msra.mxu0 0
    %2539 = vmatpush.bf16.msra.mxu0 0
    %2540 = vmatpush.bf16.msra.mxu0 %v2512
    %2541 = vmatmul.bf16.gmra.mxu0 %v2506
    %v2542 = vpop.f32.mrf.mxu0
    %v2543 = vadd.f32 %v2503, %v2542
    %v2544 = vpop.f32.mrf.mxu0
    %2545 = vdwg.mxu0
    %2546 = vmatpush.bf16.msra.mxu0 0
    %2547 = vmatpush.bf16.msra.mxu0 0
    %2548 = vmatpush.bf16.msra.mxu0 0
    %2549 = vmatpush.bf16.msra.mxu0 0
    %2550 = vmatpush.bf16.msra.mxu0 0
    %2551 = vmatpush.bf16.msra.mxu0 0
    %2552 = vmatpush.bf16.msra.mxu0 0
    %2553 = vmatpush.bf16.msra.mxu0 %v2515
    %2554 = vmatmul.bf16.gmra.mxu0 %v2506
    %v2555 = vpop.f32.mrf.mxu0
    %v2556 = vadd.f32 %v2503, %v2555
    %v2557 = vpop.f32.mrf.mxu0
    %2558 = vdwg.mxu0
    %2559 = vmatpush.bf16.msra.mxu0 0
    %2560 = vmatpush.bf16.msra.mxu0 0
    %2561 = vmatpush.bf16.msra.mxu0 0
    %2562 = vmatpush.bf16.msra.mxu0 0
    %2563 = vmatpush.bf16.msra.mxu0 0
    %2564 = vmatpush.bf16.msra.mxu0 0
    %2565 = vmatpush.bf16.msra.mxu0 0
    %2566 = vmatpush.bf16.msra.mxu0 %v2518
    %2567 = vmatmul.bf16.gmra.mxu0 %v2506
    %v2568 = vpop.f32.mrf.mxu0
    %v2569 = vadd.f32 %v2503, %v2568
    %v2570 = vpop.f32.mrf.mxu0
    %2571 = vdwg.mxu0
    %2572 = vst [vmem:[#allocation5] sm:$0xff] %v2530
    %2573 = vst [vmem:[#allocation5 + $0x8] sm:$0xff] %v2543
    %2574 = vst [vmem:[#allocation5 + $0x10] sm:$0xff] %v2556
    %2575 = vst [vmem:[#allocation5 + $0x18] sm:$0xff] %v2569
    %v2576 = vsel %vm1123, %v1424, 0.0
    %v2577 = vrot.slane %v2576, 4
    %v2578 = vadd.f32 %v2576, %v2577
    %v2579 = vrot.slane %v2578, 2
    %v2580 = vadd.f32 %v2578, %v2579
    %v2581 = vrot.slane %v2580, 1
    %v2582 = vadd.f32 %v2580, %v2581
    %v2583 = vsel %vm1123, %v1425, 0.0
    %v2584 = vrot.slane %v2583, 4
    %v2585 = vadd.f32 %v2583, %v2584
    %v2586 = vrot.slane %v2585, 2
    %v2587 = vadd.f32 %v2585, %v2586
    %v2588 = vrot.slane %v2587, 1
    %v2589 = vadd.f32 %v2587, %v2588
    %v2590 = vsel %vm1123, %v1426, 0.0
    %v2591 = vrot.slane %v2590, 4
    %v2592 = vadd.f32 %v2590, %v2591
    %v2593 = vrot.slane %v2592, 2
    %v2594 = vadd.f32 %v2592, %v2593
    %v2595 = vrot.slane %v2594, 1
    %v2596 = vadd.f32 %v2594, %v2595
    %v2597 = vsel %vm1123, %v1427, 0.0
    %v2598 = vrot.slane %v2597, 4
    %v2599 = vadd.f32 %v2597, %v2598
    %v2600 = vrot.slane %v2599, 2
    %v2601 = vadd.f32 %v2599, %v2600
    %v2602 = vrot.slane %v2601, 1
    %v2603 = vadd.f32 %v2601, %v2602
    %v2604 = vsel %vm1123, %v1428, 0.0
    %v2605 = vrot.slane %v2604, 4
    %v2606 = vadd.f32 %v2604, %v2605
    %v2607 = vrot.slane %v2606, 2
    %v2608 = vadd.f32 %v2606, %v2607
    %v2609 = vrot.slane %v2608, 1
    %v2610 = vadd.f32 %v2608, %v2609
    %v2611 = vsel %vm1123, %v1429, 0.0
    %v2612 = vrot.slane %v2611, 4
    %v2613 = vadd.f32 %v2611, %v2612
    %v2614 = vrot.slane %v2613, 2
    %v2615 = vadd.f32 %v2613, %v2614
    %v2616 = vrot.slane %v2615, 1
    %v2617 = vadd.f32 %v2615, %v2616
    %v2618 = vsel %vm1123, %v1430, 0.0
    %v2619 = vrot.slane %v2618, 4
    %v2620 = vadd.f32 %v2618, %v2619
    %v2621 = vrot.slane %v2620, 2
    %v2622 = vadd.f32 %v2620, %v2621
    %v2623 = vrot.slane %v2622, 1
    %v2624 = vadd.f32 %v2622, %v2623
    %v2625 = vsel %vm1123, %v1431, 0.0
    %v2626 = vrot.slane %v2625, 4
    %v2627 = vadd.f32 %v2625, %v2626
    %v2628 = vrot.slane %v2627, 2
    %v2629 = vadd.f32 %v2627, %v2628
    %v2630 = vrot.slane %v2629, 1
    %v2631 = vadd.f32 %v2629, %v2630
    %v2632 = vsel %vm1123, %v1432, 0.0
    %v2633 = vrot.slane %v2632, 4
    %v2634 = vadd.f32 %v2632, %v2633
    %v2635 = vrot.slane %v2634, 2
    %v2636 = vadd.f32 %v2634, %v2635
    %v2637 = vrot.slane %v2636, 1
    %v2638 = vadd.f32 %v2636, %v2637
    %v2639 = vsel %vm1123, %v1433, 0.0
    %v2640 = vrot.slane %v2639, 4
    %v2641 = vadd.f32 %v2639, %v2640
    %v2642 = vrot.slane %v2641, 2
    %v2643 = vadd.f32 %v2641, %v2642
    %v2644 = vrot.slane %v2643, 1
    %v2645 = vadd.f32 %v2643, %v2644
    %v2646 = vsel %vm1123, %v1434, 0.0
    %v2647 = vrot.slane %v2646, 4
    %v2648 = vadd.f32 %v2646, %v2647
    %v2649 = vrot.slane %v2648, 2
    %v2650 = vadd.f32 %v2648, %v2649
    %v2651 = vrot.slane %v2650, 1
    %v2652 = vadd.f32 %v2650, %v2651
    %v2653 = vsel %vm1123, %v1435, 0.0
    %v2654 = vrot.slane %v2653, 4
    %v2655 = vadd.f32 %v2653, %v2654
    %v2656 = vrot.slane %v2655, 2
    %v2657 = vadd.f32 %v2655, %v2656
    %v2658 = vrot.slane %v2657, 1
    %v2659 = vadd.f32 %v2657, %v2658
    %v2660 = vsel %vm1123, %v1436, 0.0
    %v2661 = vrot.slane %v2660, 4
    %v2662 = vadd.f32 %v2660, %v2661
    %v2663 = vrot.slane %v2662, 2
    %v2664 = vadd.f32 %v2662, %v2663
    %v2665 = vrot.slane %v2664, 1
    %v2666 = vadd.f32 %v2664, %v2665
    %v2667 = vsel %vm1123, %v1437, 0.0
    %v2668 = vrot.slane %v2667, 4
    %v2669 = vadd.f32 %v2667, %v2668
    %v2670 = vrot.slane %v2669, 2
    %v2671 = vadd.f32 %v2669, %v2670
    %v2672 = vrot.slane %v2671, 1
    %v2673 = vadd.f32 %v2671, %v2672
    %v2674 = vsel %vm1123, %v1438, 0.0
    %v2675 = vrot.slane %v2674, 4
    %v2676 = vadd.f32 %v2674, %v2675
    %v2677 = vrot.slane %v2676, 2
    %v2678 = vadd.f32 %v2676, %v2677
    %v2679 = vrot.slane %v2678, 1
    %v2680 = vadd.f32 %v2678, %v2679
    %v2681 = vsel %vm1123, %v1439, 0.0
    %v2682 = vrot.slane %v2681, 4
    %v2683 = vadd.f32 %v2681, %v2682
    %v2684 = vrot.slane %v2683, 2
    %v2685 = vadd.f32 %v2683, %v2684
    %v2686 = vrot.slane %v2685, 1
    %v2687 = vadd.f32 %v2685, %v2686
    %v2688 = vsel %vm1123, %v1440, 0.0
    %v2689 = vrot.slane %v2688, 4
    %v2690 = vadd.f32 %v2688, %v2689
    %v2691 = vrot.slane %v2690, 2
    %v2692 = vadd.f32 %v2690, %v2691
    %v2693 = vrot.slane %v2692, 1
    %v2694 = vadd.f32 %v2692, %v2693
    %v2695 = vsel %vm1123, %v1441, 0.0
    %v2696 = vrot.slane %v2695, 4
    %v2697 = vadd.f32 %v2695, %v2696
    %v2698 = vrot.slane %v2697, 2
    %v2699 = vadd.f32 %v2697, %v2698
    %v2700 = vrot.slane %v2699, 1
    %v2701 = vadd.f32 %v2699, %v2700
    %v2702 = vsel %vm1123, %v1442, 0.0
    %v2703 = vrot.slane %v2702, 4
    %v2704 = vadd.f32 %v2702, %v2703
    %v2705 = vrot.slane %v2704, 2
    %v2706 = vadd.f32 %v2704, %v2705
    %v2707 = vrot.slane %v2706, 1
    %v2708 = vadd.f32 %v2706, %v2707
    %v2709 = vsel %vm1123, %v1443, 0.0
    %v2710 = vrot.slane %v2709, 4
    %v2711 = vadd.f32 %v2709, %v2710
    %v2712 = vrot.slane %v2711, 2
    %v2713 = vadd.f32 %v2711, %v2712
    %v2714 = vrot.slane %v2713, 1
    %v2715 = vadd.f32 %v2713, %v2714
    %v2716 = vsel %vm1123, %v1444, 0.0
    %v2717 = vrot.slane %v2716, 4
    %v2718 = vadd.f32 %v2716, %v2717
    %v2719 = vrot.slane %v2718, 2
    %v2720 = vadd.f32 %v2718, %v2719
    %v2721 = vrot.slane %v2720, 1
    %v2722 = vadd.f32 %v2720, %v2721
    %v2723 = vsel %vm1123, %v1445, 0.0
    %v2724 = vrot.slane %v2723, 4
    %v2725 = vadd.f32 %v2723, %v2724
    %v2726 = vrot.slane %v2725, 2
    %v2727 = vadd.f32 %v2725, %v2726
    %v2728 = vrot.slane %v2727, 1
    %v2729 = vadd.f32 %v2727, %v2728
    %v2730 = vsel %vm1123, %v1446, 0.0
    %v2731 = vrot.slane %v2730, 4
    %v2732 = vadd.f32 %v2730, %v2731
    %v2733 = vrot.slane %v2732, 2
    %v2734 = vadd.f32 %v2732, %v2733
    %v2735 = vrot.slane %v2734, 1
    %v2736 = vadd.f32 %v2734, %v2735
    %v2737 = vsel %vm1123, %v1447, 0.0
    %v2738 = vrot.slane %v2737, 4
    %v2739 = vadd.f32 %v2737, %v2738
    %v2740 = vrot.slane %v2739, 2
    %v2741 = vadd.f32 %v2739, %v2740
    %v2742 = vrot.slane %v2741, 1
    %v2743 = vadd.f32 %v2741, %v2742
    %v2744 = vsel %vm1123, %v1448, 0.0
    %v2745 = vrot.slane %v2744, 4
    %v2746 = vadd.f32 %v2744, %v2745
    %v2747 = vrot.slane %v2746, 2
    %v2748 = vadd.f32 %v2746, %v2747
    %v2749 = vrot.slane %v2748, 1
    %v2750 = vadd.f32 %v2748, %v2749
    %v2751 = vsel %vm1123, %v1449, 0.0
    %v2752 = vrot.slane %v2751, 4
    %v2753 = vadd.f32 %v2751, %v2752
    %v2754 = vrot.slane %v2753, 2
    %v2755 = vadd.f32 %v2753, %v2754
    %v2756 = vrot.slane %v2755, 1
    %v2757 = vadd.f32 %v2755, %v2756
    %v2758 = vsel %vm1123, %v1450, 0.0
    %v2759 = vrot.slane %v2758, 4
    %v2760 = vadd.f32 %v2758, %v2759
    %v2761 = vrot.slane %v2760, 2
    %v2762 = vadd.f32 %v2760, %v2761
    %v2763 = vrot.slane %v2762, 1
    %v2764 = vadd.f32 %v2762, %v2763
    %v2765 = vsel %vm1123, %v1451, 0.0
    %v2766 = vrot.slane %v2765, 4
    %v2767 = vadd.f32 %v2765, %v2766
    %v2768 = vrot.slane %v2767, 2
    %v2769 = vadd.f32 %v2767, %v2768
    %v2770 = vrot.slane %v2769, 1
    %v2771 = vadd.f32 %v2769, %v2770
    %v2772 = vsel %vm1123, %v1452, 0.0
    %v2773 = vrot.slane %v2772, 4
    %v2774 = vadd.f32 %v2772, %v2773
    %v2775 = vrot.slane %v2774, 2
    %v2776 = vadd.f32 %v2774, %v2775
    %v2777 = vrot.slane %v2776, 1
    %v2778 = vadd.f32 %v2776, %v2777
    %v2779 = vsel %vm1123, %v1453, 0.0
    %v2780 = vrot.slane %v2779, 4
    %v2781 = vadd.f32 %v2779, %v2780
    %v2782 = vrot.slane %v2781, 2
    %v2783 = vadd.f32 %v2781, %v2782
    %v2784 = vrot.slane %v2783, 1
    %v2785 = vadd.f32 %v2783, %v2784
    %v2786 = vsel %vm1123, %v1454, 0.0
    %v2787 = vrot.slane %v2786, 4
    %v2788 = vadd.f32 %v2786, %v2787
    %v2789 = vrot.slane %v2788, 2
    %v2790 = vadd.f32 %v2788, %v2789
    %v2791 = vrot.slane %v2790, 1
    %v2792 = vadd.f32 %v2790, %v2791
    %v2793 = vsel %vm1123, %v1455, 0.0
    %v2794 = vrot.slane %v2793, 4
    %v2795 = vadd.f32 %v2793, %v2794
    %v2796 = vrot.slane %v2795, 2
    %v2797 = vadd.f32 %v2795, %v2796
    %v2798 = vrot.slane %v2797, 1
    %v2799 = vadd.f32 %v2797, %v2798
    %v2800 = vsel %vm1123, %v1456, 0.0
    %v2801 = vrot.slane %v2800, 4
    %v2802 = vadd.f32 %v2800, %v2801
    %v2803 = vrot.slane %v2802, 2
    %v2804 = vadd.f32 %v2802, %v2803
    %v2805 = vrot.slane %v2804, 1
    %v2806 = vadd.f32 %v2804, %v2805
    %v2807 = vsel %vm1123, %v1457, 0.0
    %v2808 = vrot.slane %v2807, 4
    %v2809 = vadd.f32 %v2807, %v2808
    %v2810 = vrot.slane %v2809, 2
    %v2811 = vadd.f32 %v2809, %v2810
    %v2812 = vrot.slane %v2811, 1
    %v2813 = vadd.f32 %v2811, %v2812
    %v2814 = vsel %vm1123, %v1458, 0.0
    %v2815 = vrot.slane %v2814, 4
    %v2816 = vadd.f32 %v2814, %v2815
    %v2817 = vrot.slane %v2816, 2
    %v2818 = vadd.f32 %v2816, %v2817
    %v2819 = vrot.slane %v2818, 1
    %v2820 = vadd.f32 %v2818, %v2819
    %v2821 = vsel %vm1123, %v1459, 0.0
    %v2822 = vrot.slane %v2821, 4
    %v2823 = vadd.f32 %v2821, %v2822
    %v2824 = vrot.slane %v2823, 2
    %v2825 = vadd.f32 %v2823, %v2824
    %v2826 = vrot.slane %v2825, 1
    %v2827 = vadd.f32 %v2825, %v2826
    %v2828 = vmul.f32 %v2582, 0.5
    %v2829 = vmul.f32 %v2589, 0.5
    %v2830 = vmul.f32 %v2596, 0.5
    %v2831 = vmul.f32 %v2603, 0.5
    %v2832 = vmul.f32 %v2610, 0.5
    %v2833 = vmul.f32 %v2617, 0.5
    %v2834 = vmul.f32 %v2624, 0.5
    %v2835 = vmul.f32 %v2631, 0.5
    %v2836 = vmul.f32 %v2638, 0.5
    %v2837 = vmul.f32 %v2645, 0.5
    %v2838 = vmul.f32 %v2652, 0.5
    %v2839 = vmul.f32 %v2659, 0.5
    %v2840 = vmul.f32 %v2666, 0.5
    %v2841 = vmul.f32 %v2673, 0.5
    %v2842 = vmul.f32 %v2680, 0.5
    %v2843 = vmul.f32 %v2687, 0.5
    %v2844 = vmul.f32 %v2694, 0.5
    %v2845 = vmul.f32 %v2701, 0.5
    %v2846 = vmul.f32 %v2708, 0.5
    %v2847 = vmul.f32 %v2715, 0.5
    %v2848 = vmul.f32 %v2722, 0.5
    %v2849 = vmul.f32 %v2729, 0.5
    %v2850 = vmul.f32 %v2736, 0.5
    %v2851 = vmul.f32 %v2743, 0.5
    %v2852 = vmul.f32 %v2750, 0.5
    %v2853 = vmul.f32 %v2757, 0.5
    %v2854 = vmul.f32 %v2764, 0.5
    %v2855 = vmul.f32 %v2771, 0.5
    %v2856 = vmul.f32 %v2778, 0.5
    %v2857 = vmul.f32 %v2785, 0.5
    %v2858 = vmul.f32 %v2792, 0.5
    %v2859 = vmul.f32 %v2799, 0.5
    %v2860 = vmul.f32 %v2806, 0.5
    %v2861 = vmul.f32 %v2813, 0.5
    %v2862 = vmul.f32 %v2820, 0.5
    %v2863 = vmul.f32 %v2827, 0.5
    %vm2900 = vcmask 1041409
    %v2901 = vsel %vm2900, %v2832, %v2828
    %vm2902 = vcmask 1042434
    %v2903 = vsel %vm2902, %v2836, %v2901
    %vm2904 = vcmask 1043459
    %v2905 = vsel %vm2904, %v2840, %v2903
    %vm2906 = vcmask 1044484
    %v2907 = vsel %vm2906, %v2844, %v2905
    %vm2908 = vcmask 1045509
    %v2909 = vsel %vm2908, %v2848, %v2907
    %vm2910 = vcmask 1046534
    %v2911 = vsel %vm2910, %v2852, %v2909
    %vm2912 = vcmask 1047559
    %v2913 = vsel %vm2912, %v2856, %v2911
    %v2914 = vsel %vm2900, %v2833, %v2829
    %v2915 = vsel %vm2902, %v2837, %v2914
    %v2916 = vsel %vm2904, %v2841, %v2915
    %v2917 = vsel %vm2906, %v2845, %v2916
    %v2918 = vsel %vm2908, %v2849, %v2917
    %v2919 = vsel %vm2910, %v2853, %v2918
    %v2920 = vsel %vm2912, %v2857, %v2919
    %v2921 = vsel %vm2900, %v2834, %v2830
    %v2922 = vsel %vm2902, %v2838, %v2921
    %v2923 = vsel %vm2904, %v2842, %v2922
    %v2924 = vsel %vm2906, %v2846, %v2923
    %v2925 = vsel %vm2908, %v2850, %v2924
    %v2926 = vsel %vm2910, %v2854, %v2925
    %v2927 = vsel %vm2912, %v2858, %v2926
    %v2928 = vsel %vm2900, %v2835, %v2831
    %v2929 = vsel %vm2902, %v2839, %v2928
    %v2930 = vsel %vm2904, %v2843, %v2929
    %v2931 = vsel %vm2906, %v2847, %v2930
    %v2932 = vsel %vm2908, %v2851, %v2931
    %v2933 = vsel %vm2910, %v2855, %v2932
    %v2934 = vsel %vm2912, %v2859, %v2933
    %2943 = vst [vmem:[#allocation6] sm:$0xff] %v2913
    %2944 = vst [vmem:[#allocation6 + $0x8] sm:$0xff] %v2920
    %2945 = vst [vmem:[#allocation6 + $0x10] sm:$0xff] %v2927
    %2946 = vst [vmem:[#allocation6 + $0x18] sm:$0xff] %v2934
    %2947 = vst [vmem:[#allocation6 + $0x20] sm:$0x1] %v2860
    %2948 = vst [vmem:[#allocation6 + $0x28] sm:$0x1] %v2861
    %2949 = vst [vmem:[#allocation6 + $0x30] sm:$0x1] %v2862
    %2950 = vst [vmem:[#allocation6 + $0x38] sm:$0x1] %v2863
    // Predicated region
    $region38: #{tpu_custom_call.1} parent=1 // pred_check
      _
    $region39: #{tpu_custom_call.1} parent=1 // pred_check_branch
      %2952 = sbr.rel (0) target = $region41
    $region40: #{tpu_custom_call.1} parent=1 // pred_region
      %2954 = vsyncadd [#allocation4], 0
      %s2956 = sshll.u32 [#allocation5], 4
      %s2957 = int_to_ptr.vmem [resolvable:$true] %s2956
      %s2958 = sshll.u32 %s8, 4
      %s2959 = int_to_ptr.hbm [resolvable:$true] %s2958
      %2961 = dma.vmem_to_hbm [thread:$0]  %s2957, 512, %s2959, [#allocation4]
    $region41: #{tpu_custom_call.1} parent=1 // pred_fallthru
      _
    // Predicated region
    $region42: #{tpu_custom_call.1} parent=1 // pred_check
      _
    $region43: #{tpu_custom_call.1} parent=1 // pred_check_branch
      %2963 = sbr.rel (0) target = $region45
    $region44: #{tpu_custom_call.1} parent=1 // pred_region
      %2965 = vsyncadd [#allocation7], 0
      %s2966 = sshll.u32 [#allocation6], 4
      %s2967 = int_to_ptr.vmem [resolvable:$true] %s2966
      %s2968 = sshll.u32 %s9, 4
      %s2969 = int_to_ptr.hbm [resolvable:$true] %s2968
      %2974 = dma.vmem_to_hbm [thread:$0]  %s2967, 1024, %s2969, [#allocation7], 512, 512, 32
    $region45: #{tpu_custom_call.1} parent=1 // pred_fallthru
      _
    // Predicated region
    $region46: #{tpu_custom_call.1} parent=1 // pred_check
      _
    $region47: #{tpu_custom_call.1} parent=1 // pred_check_branch
      %2976 = sbr.rel (0) target = $region49
    $region48: #{tpu_custom_call.1} parent=1 // pred_region
      %2978 = dma.done [#allocation4], 512
    $region49: #{tpu_custom_call.1} parent=1 // pred_fallthru
      _
    // Predicated region
    $region50: #{tpu_custom_call.1} parent=1 // pred_check
      _
    $region51: #{tpu_custom_call.1} parent=1 // pred_check_branch
      %2980 = sbr.rel (0) target = $region53
    $region52: #{tpu_custom_call.1} parent=1 // pred_region
      %2982 = dma.done [#allocation7], 1024
    $region53: #{tpu_custom_call.1} parent=1 // pred_fallthru
      _
    %2983 = vsyncpa [#allocation3], 1
    %2984 = vsyncpa [#allocation4], 1
    %2985 = vsyncpa [#allocation7], 1

</llo_original>
